<compile_context>
chip_gen: v7x
topology: tpu7x:2x2x1
jax: 0.10.0
libtpu: 0.0.40
codegen_flags: <defaults>
</compile_context>

<pallas_src>
import functools

import numpy as np
import jax
import jax.numpy as jnp
from jax.experimental import pallas as pl
from jax.experimental.pallas import tpu as pltpu


# ----------------------------------------------------------------------------
# The fully fused GATE_F kernel.
#   Hidden/gate column layouts (HS = sum(Hs), G = 3*HS):
#     hidden h          : [fwd m0|m1|m2 | bwd m0|m1|m2]                 (2*HS)
#     gates xg/hg       : [fwd: r|z|n (each HS) | bwd: r|z|n (each HS)] (2*G)
#     tr (GRU output)   : [fwd m0|m1|m2 | bwd m0|m1|m2]                 (2*HS)
# ----------------------------------------------------------------------------
def _gate_f_kernel(x_ref, len_ref, wx_ref, bx_ref, whh_ref, bhh_ref,
                   cw_ref, cb_ref, fwg_ref, w1_ref, b1_ref, w2_ref, b2_ref,
                   out_ref, *, T, N, Hs):
    f32 = jnp.float32
    M = len(Hs)                      # number of modalities
    HS = sum(Hs)                     # total per-direction hidden width
    G = 3 * HS                       # per-direction gate width (r|z|n)
    TN = T * N

    # ---- One MXU GEMM: GRU input gates (both directions, all modalities, all
    #      timesteps) + fc utterance projection, all biases folded in. ----
    xp = jnp.dot(x_ref[...], wx_ref[...], preferred_element_type=f32) + bx_ref[...]
    xg = xp[:, :2 * G]               # [T*N, 6*HS]  GRU input gates
    xfc = xp[:, 2 * G:]              # [T*N, HS]    fc(x) part (+ fc bias)

    # ---- Hoisted loop invariants (off the serial recurrence path). ----
    lens_all = len_ref[...]                                   # [N, M] int32
    lens_b = jnp.concatenate(
        [jnp.broadcast_to(lens_all[:, m:m + 1], (N, Hs[m])) for m in range(M)],
        axis=1)                                               # [N, HS] int32
    bhh = jnp.broadcast_to(bhh_ref[...], (N, 2 * G))          # hoisted bias bcast

    def cell(xgi, hgi, hi):
        r = jax.nn.sigmoid(xgi[:, 0:HS] + hgi[:, 0:HS])
        z = jax.nn.sigmoid(xgi[:, HS:2 * HS] + hgi[:, HS:2 * HS])
        n = jnp.tanh(xgi[:, 2 * HS:3 * HS] + r * hgi[:, 2 * HS:3 * HS])
        return (1.0 - z) * n + z * hi

    # ---- Bidirectional GRU recurrence: static unroll, state in registers. ----
    h_f = jnp.zeros((N, HS), f32)
    h_b = jnp.zeros((N, HS), f32)
    out_f = [None] * T
    out_b = [None] * T
    for t in range(T):
        tb = T - 1 - t
        h = jnp.concatenate([h_f, h_b], axis=1)               # [N, 2*HS]
        hg = jnp.dot(h, whh_ref[...], preferred_element_type=f32) + bhh
        hf_new = cell(xg[t * N:(t + 1) * N, 0:G], hg[:, 0:G], h_f)
        hb_new = cell(xg[tb * N:(tb + 1) * N, G:2 * G], hg[:, G:2 * G], h_b)
        mf = lens_b > t
        mb = lens_b > tb
        # pack_padded semantics: freeze state at padded steps, zero the outputs.
        h_f = jnp.where(mf, hf_new, h_f)
        h_b = jnp.where(mb, hb_new, h_b)
        out_f[t] = jnp.where(mf, hf_new, 0.0)
        out_b[tb] = jnp.where(mb, hb_new, 0.0)

    # transformed_: [T*N, 2*HS] = [fwd (all modalities) | bwd (all modalities)]
    tr = jnp.concatenate([jnp.concatenate(out_f, axis=0),
                          jnp.concatenate(out_b, axis=0)], axis=1)

    # ---- C_GATE tail: Conv1d(k=3, pad=1) gate over time + tanh gating + fc. ----
    a = jnp.dot(tr, cw_ref[...], preferred_element_type=f32)  # [T*N, 3*M] taps
    zM = jnp.zeros((N, M), f32)
    tap_prev = jnp.concatenate([zM, a[:(T - 1) * N, 0:M]], axis=0)        # from t-1
    tap_next = jnp.concatenate([a[N:, 2 * M:3 * M], zM], axis=0)          # from t+1
    gate = jax.nn.sigmoid(a[:, M:2 * M] + tap_prev + tap_next + cb_ref[...])  # [T*N, M]

    # gate_x @ fc_w_g == per-modality gate scalar * (tanh(tr) @ fc_w_g) (block diag)
    u = jnp.dot(jnp.tanh(tr), fwg_ref[...], preferred_element_type=f32)   # [T*N, HS]
    g_b = jnp.concatenate(
        [jnp.broadcast_to(gate[:, m:m + 1], (TN, Hs[m])) for m in range(M)],
        axis=1)                                                           # [T*N, HS]
    rep = jnp.tanh(xfc + u * g_b)                                         # [T*N, HS]

    # ---- max over time: log2(T)-depth tree over N-row blocks ----
    blocks = [rep[t * N:(t + 1) * N, :] for t in range(T)]
    while len(blocks) > 1:
        nxt = [jnp.maximum(blocks[i], blocks[i + 1])
               for i in range(0, len(blocks) - 1, 2)]
        if len(blocks) % 2:
            nxt.append(blocks[-1])
        blocks = nxt
    rep_max = blocks[0]                                                   # [N, HS]

    # ---- Classifier: (BatchNorm folded into w1/b1) Linear -> LeakyReLU -> Linear ----
    h1 = jnp.dot(rep_max, w1_ref[...], preferred_element_type=f32) + b1_ref[...]
    h1 = jnp.where(h1 > 0, h1, 0.01 * h1)            # LeakyReLU(negative_slope=0.01)
    out_ref[...] = jnp.dot(h1, w2_ref[...], preferred_element_type=f32) + b2_ref[...]


# ----------------------------------------------------------------------------
# Forward wrapper (layout plumbing only) — ONE pallas_call total.
# ----------------------------------------------------------------------------
def gate_f_forward(fused, text_x, text_len, audio_x, audio_len,
                   vision_x, vision_len, *, Hs):
    N, T, _ = text_x.shape
    x_all = jnp.concatenate([text_x, audio_x, vision_x], axis=-1)        # [N, T, E_total]
    x_flat = jnp.transpose(x_all, (1, 0, 2)).reshape(T * N, -1)          # time-major flat
    lens = jnp.stack([text_len, audio_len, vision_len], axis=1).astype(jnp.int32)
    out_dim = fused['w2'].shape[1]
    kernel = functools.partial(_gate_f_kernel, T=T, N=N, Hs=tuple(Hs))
    vmem = pl.BlockSpec(memory_space=pltpu.MemorySpace.VMEM)
    return pl.pallas_call(
        kernel,
        out_shape=jax.ShapeDtypeStruct((N, out_dim), jnp.float32),
        in_specs=[vmem] * 13,
        out_specs=vmem,
    )(x_flat, lens, fused['w_x'], fused['b_x'], fused['w_hh'], fused['b_hh'],
      fused['conv_w'], fused['conv_b'], fused['fc_w_g'],
      fused['w1'], fused['b1'], fused['w2'], fused['b2'])


# ----------------------------------------------------------------------------
# One-time (outside jit) fusion of the per-modality parameters into the
# block-diagonal slabs the kernel consumes.
# ----------------------------------------------------------------------------
def fuse_gate_f_params(params, Es, Hs):
    M = len(Hs)
    HS = int(sum(Hs))
    G = 3 * HS
    E_total = int(sum(Es))
    Eoff = [int(sum(Es[:m])) for m in range(M)]
    Foff = [int(sum(Hs[:m])) for m in range(M)]

    w_x = np.zeros((E_total, 2 * G + HS), np.float32)
    b_x = np.zeros((1, 2 * G + HS), np.float32)
    w_hh = np.zeros((2 * HS, 2 * G), np.float32)
    b_hh = np.zeros((1, 2 * G), np.float32)
    conv_w = np.zeros((2 * HS, 3 * M), np.float32)
    conv_b = np.zeros((1, M), np.float32)
    fc_w_g = np.zeros((2 * HS, HS), np.float32)

    for m, name in enumerate(('text', 'audio', 'vision')):
        p = params[name]
        E, H = int(Es[m]), int(Hs[m])
        eo, fo = Eoff[m], Foff[m]
        # TODO(synk): fusion_gru_layers > 1 (stacked GRU) is not supported by the
        # fully fused kernel; only a single bidirectional layer is fused here.
        assert len(p['gru']) == 1
        lyr = {k: np.asarray(v) for k, v in p['gru'][0].items()}
        for d, dname in enumerate(('f', 'b')):
            goff = d * G
            ro = d * HS + fo
            for k in range(3):                     # gates r, z, n
                cs = goff + k * HS + fo
                w_x[eo:eo + E, cs:cs + H] = lyr['w_ih_' + dname][:, k * H:(k + 1) * H]
                b_x[:, cs:cs + H] = lyr['b_ih_' + dname][:, k * H:(k + 1) * H]
                w_hh[ro:ro + H, cs:cs + H] = lyr['w_hh_' + dname][:, k * H:(k + 1) * H]
                b_hh[:, cs:cs + H] = lyr['b_hh_' + dname][:, k * H:(k + 1) * H]
        # fc utterance (x) part + fc bias folded into the x-projection columns
        xcol = 2 * G + fo
        w_x[eo:eo + E, xcol:xcol + H] = np.asarray(p['fc_w_x'])
        b_x[:, xcol:xcol + H] = np.asarray(p['fc_b'])
        # Conv1d(in=2H, out=1, k=3) gate taps, tap-major columns
        cw = np.asarray(p['conv_w'])               # [2H, 3] (in_ch, tap)
        for k in range(3):
            conv_w[fo:fo + H, k * M + m] = cw[0:H, k]               # fwd channels
            conv_w[HS + fo:HS + fo + H, k * M + m] = cw[H:2 * H, k]  # bwd channels
        conv_b[0, m] = float(np.asarray(p['conv_b']).reshape(()))
        # fc gate_x part (block-diagonal)
        g = np.asarray(p['fc_w_g'])                # [2H, H]
        fc_w_g[fo:fo + H, fo:fo + H] = g[0:H, :]
        fc_w_g[HS + fo:HS + fo + H, fo:fo + H] = g[H:2 * H, :]

    # Fold eval-mode BatchNorm1d into the first classifier Linear.
    cls = {k: np.asarray(v) for k, v in params['cls'].items()}
    scale = cls['gamma'] / np.sqrt(cls['var'] + 1e-5)          # [1, D]
    shift = cls['beta'] - cls['mean'] * scale
    w1f = cls['w1'] * scale.T                                  # row-scale [D, C]
    b1f = cls['b1'] + shift @ cls['w1']

    to = lambda x: jnp.asarray(x, jnp.float32)
    return {'w_x': to(w_x), 'b_x': to(b_x), 'w_hh': to(w_hh), 'b_hh': to(b_hh),
            'conv_w': to(conv_w), 'conv_b': to(conv_b), 'fc_w_g': to(fc_w_g),
            'w1': to(w1f), 'b1': to(b1f), 'w2': to(cls['w2']), 'b2': to(cls['b2'])}


# ----------------------------------------------------------------------------
# Deterministic parameter init (per-modality "natural" shapes, then fused).
# ----------------------------------------------------------------------------
def _rnd(key, shape, scale=0.1):
    return (scale * jax.random.normal(key, shape)).astype(jnp.float32)


def init_cgate_params(key, E, H):
    ks = jax.random.split(key, 13)
    return {
        'gru': [{
            'w_ih_f': _rnd(ks[0], (E, 3 * H)), 'w_hh_f': _rnd(ks[1], (H, 3 * H)),
            'b_ih_f': _rnd(ks[2], (1, 3 * H)), 'b_hh_f': _rnd(ks[3], (1, 3 * H)),
            'w_ih_b': _rnd(ks[4], (E, 3 * H)), 'w_hh_b': _rnd(ks[5], (H, 3 * H)),
            'b_ih_b': _rnd(ks[6], (1, 3 * H)), 'b_hh_b': _rnd(ks[7], (1, 3 * H)),
        }],
        'conv_w': _rnd(ks[8], (2 * H, 3)),         # Conv1d weight as (in_ch, k)
        'conv_b': _rnd(ks[9], (1, 1)),
        'fc_w_x': _rnd(ks[10], (E, H)),            # fc cols for the utterance part
        'fc_w_g': _rnd(ks[11], (2 * H, H)),        # fc cols for the gate_x part
        'fc_b': _rnd(ks[12], (1, H)),
    }


def init_classifier_params(key, D, C, O):
    ks = jax.random.split(key, 4)
    return {
        'gamma': jnp.ones((1, D), jnp.float32),
        'beta': jnp.zeros((1, D), jnp.float32),
        'mean': jnp.zeros((1, D), jnp.float32),    # BN running stats (eval mode)
        'var': jnp.ones((1, D), jnp.float32),
        'w1': _rnd(ks[0], (D, C)), 'b1': _rnd(ks[1], (1, C)),
        'w2': _rnd(ks[2], (C, O)), 'b2': _rnd(ks[3], (1, O)),
    }


if __name__ == "__main__":
    # args: fusion_t_in=16, fusion_a_in=12, fusion_v_in=20,
    #       fusion_{t,a,v}_hid=8, fusion_gru_layers=1, fusion_drop=0.0,
    #       cls_hidden_dim=32, cls_dropout=0.0, output_dim=1
    N, T = 8, 8
    E_T, E_A, E_V = 16, 12, 20
    H_T, H_A, H_V = 8, 8, 8
    CLS_H, OUT = 32, 1

    key = jax.random.PRNGKey(0)
    ks = jax.random.split(key, 8)

    text_x = jax.random.normal(ks[0], (N, T, E_T), jnp.float32)
    audio_x = jax.random.normal(ks[1], (N, T, E_A), jnp.float32)
    vision_x = jax.random.normal(ks[2], (N, T, E_V), jnp.float32)
    text_len = jnp.array([8, 5, 3, 6, 2, 7, 4, 8], jnp.int32)
    audio_len = jnp.array([8, 4, 7, 2, 6, 8, 3, 5], jnp.int32)
    vision_len = jnp.array([6, 8, 5, 3, 7, 2, 8, 4], jnp.int32)

    params = {
        'text': init_cgate_params(ks[3], E_T, H_T),
        'audio': init_cgate_params(ks[4], E_A, H_A),
        'vision': init_cgate_params(ks[5], E_V, H_V),
        'cls': init_classifier_params(ks[6], H_T + H_A + H_V, CLS_H, OUT),
    }
    fused = fuse_gate_f_params(params, (E_T, E_A, E_V), (H_T, H_A, H_V))

    fwd = jax.jit(functools.partial(gate_f_forward, Hs=(H_T, H_A, H_V)))
    out = fwd(fused, text_x, text_len, audio_x, audio_len, vision_x, vision_len)
    out = jax.block_until_ready(out)
    assert out.shape == (N, OUT), out.shape
    assert bool(jnp.all(jnp.isfinite(out)))
    print("KERNEL_OK")
</pallas_src>

<mosaic_0001>
module attributes {stable_mosaic.version = 11 : i64} {
  func.func @_gate_f_kernel(%arg0: memref<64x48xf32, #tpu.memory_space<vmem>>, %arg1: memref<8x3xi32, #tpu.memory_space<vmem>>, %arg2: memref<48x168xf32, #tpu.memory_space<vmem>>, %arg3: memref<1x168xf32, #tpu.memory_space<vmem>>, %arg4: memref<48x144xf32, #tpu.memory_space<vmem>>, %arg5: memref<1x144xf32, #tpu.memory_space<vmem>>, %arg6: memref<48x9xf32, #tpu.memory_space<vmem>>, %arg7: memref<1x3xf32, #tpu.memory_space<vmem>>, %arg8: memref<48x24xf32, #tpu.memory_space<vmem>>, %arg9: memref<24x32xf32, #tpu.memory_space<vmem>>, %arg10: memref<1x32xf32, #tpu.memory_space<vmem>>, %arg11: memref<32x1xf32, #tpu.memory_space<vmem>>, %arg12: memref<1x1xf32, #tpu.memory_space<vmem>>, %arg13: memref<8x1xf32, #tpu.memory_space<vmem>>) attributes {dimension_semantics = [], scalar_prefetch = 0 : i64, scratch_operands = 0 : i64, tpu.core_type = #tpu.core_type<tc>} {
    %c0 = arith.constant 0 : index
    %c0_0 = arith.constant 0 : index
    %0 = vector.load %arg0[%c0, %c0_0] : memref<64x48xf32, #tpu.memory_space<vmem>>, vector<64x48xf32>
    %c0_1 = arith.constant 0 : index
    %c0_2 = arith.constant 0 : index
    %1 = vector.load %arg2[%c0_1, %c0_2] : memref<48x168xf32, #tpu.memory_space<vmem>>, vector<48x168xf32>
    %cst = arith.constant dense<0.000000e+00> : vector<64x168xf32>
    %2 = tpu.matmul %0, %1, %cst {dimension_numbers = #tpu.dot_dimension_numbers<[1], [0], [0], [1], [0, 0, 1, 1], [], []>} : vector<64x48xf32>, vector<48x168xf32>, vector<64x168xf32> -> vector<64x168xf32>
    %c0_3 = arith.constant 0 : index
    %c0_4 = arith.constant 0 : index
    %3 = vector.load %arg3[%c0_3, %c0_4] : memref<1x168xf32, #tpu.memory_space<vmem>>, vector<1x168xf32>
    %4 = vector.broadcast %3 : vector<1x168xf32> to vector<64x168xf32>
    %5 = arith.addf %2, %4 : vector<64x168xf32>
    %6 = vector.extract_strided_slice %5 {offsets = [0, 0], sizes = [64, 144], strides = [1, 1]} : vector<64x168xf32> to vector<64x144xf32>
    %7 = vector.extract_strided_slice %5 {offsets = [0, 144], sizes = [64, 24], strides = [1, 1]} : vector<64x168xf32> to vector<64x24xf32>
    %c0_5 = arith.constant 0 : index
    %c0_6 = arith.constant 0 : index
    %8 = vector.load %arg1[%c0_5, %c0_6] : memref<8x3xi32, #tpu.memory_space<vmem>>, vector<8x3xi32>
    %9 = vector.extract_strided_slice %8 {offsets = [0, 0], sizes = [8, 1], strides = [1, 1]} : vector<8x3xi32> to vector<8x1xi32>
    %10 = vector.shape_cast %9 : vector<8x1xi32> to vector<8x1xi32>
    %11 = vector.broadcast %10 : vector<8x1xi32> to vector<8x8xi32>
    %12 = vector.extract_strided_slice %8 {offsets = [0, 1], sizes = [8, 1], strides = [1, 1]} : vector<8x3xi32> to vector<8x1xi32>
    %13 = vector.shape_cast %12 : vector<8x1xi32> to vector<8x1xi32>
    %14 = vector.broadcast %13 : vector<8x1xi32> to vector<8x8xi32>
    %15 = vector.extract_strided_slice %8 {offsets = [0, 2], sizes = [8, 1], strides = [1, 1]} : vector<8x3xi32> to vector<8x1xi32>
    %16 = vector.shape_cast %15 : vector<8x1xi32> to vector<8x1xi32>
    %17 = vector.broadcast %16 : vector<8x1xi32> to vector<8x8xi32>
    %18 = tpu.concatenate %11, %14, %17 in 1 : vector<8x8xi32>, vector<8x8xi32>, vector<8x8xi32> -> vector<8x24xi32>
    %c0_7 = arith.constant 0 : index
    %c0_8 = arith.constant 0 : index
    %19 = vector.load %arg5[%c0_7, %c0_8] : memref<1x144xf32, #tpu.memory_space<vmem>>, vector<1x144xf32>
    %20 = vector.shape_cast %19 : vector<1x144xf32> to vector<1x144xf32>
    %21 = vector.broadcast %20 : vector<1x144xf32> to vector<8x144xf32>
    %cst_9 = arith.constant 0.000000e+00 : f32
    %22 = vector.broadcast %cst_9 : f32 to vector<8x24xf32>
    %cst_10 = arith.constant 0.000000e+00 : f32
    %23 = vector.broadcast %cst_10 : f32 to vector<8x24xf32>
    %24 = tpu.concatenate %22, %23 in 1 : vector<8x24xf32>, vector<8x24xf32> -> vector<8x48xf32>
    %c0_11 = arith.constant 0 : index
    %c0_12 = arith.constant 0 : index
    %25 = vector.load %arg4[%c0_11, %c0_12] : memref<48x144xf32, #tpu.memory_space<vmem>>, vector<48x144xf32>
    %cst_13 = arith.constant dense<0.000000e+00> : vector<8x144xf32>
    %26 = tpu.matmul %24, %25, %cst_13 {dimension_numbers = #tpu.dot_dimension_numbers<[1], [0], [0], [1], [0, 0, 1, 1], [], []>} : vector<8x48xf32>, vector<48x144xf32>, vector<8x144xf32> -> vector<8x144xf32>
    %27 = arith.addf %26, %21 : vector<8x144xf32>
    %28 = vector.extract_strided_slice %6 {offsets = [0, 0], sizes = [8, 72], strides = [1, 1]} : vector<64x144xf32> to vector<8x72xf32>
    %29 = vector.extract_strided_slice %27 {offsets = [0, 0], sizes = [8, 72], strides = [1, 1]} : vector<8x144xf32> to vector<8x72xf32>
    %30 = vector.extract_strided_slice %28 {offsets = [0, 0], sizes = [8, 24], strides = [1, 1]} : vector<8x72xf32> to vector<8x24xf32>
    %31 = vector.extract_strided_slice %29 {offsets = [0, 0], sizes = [8, 24], strides = [1, 1]} : vector<8x72xf32> to vector<8x24xf32>
    %32 = arith.addf %30, %31 : vector<8x24xf32>
    %33 = arith.negf %32 : vector<8x24xf32>
    %34 = math.exp %33 : vector<8x24xf32>
    %cst_14 = arith.constant 1.000000e+00 : f32
    %35 = vector.broadcast %cst_14 : f32 to vector<8x24xf32>
    %36 = arith.addf %35, %34 : vector<8x24xf32>
    %37 = arith.divf %35, %36 : vector<8x24xf32>
    %38 = vector.extract_strided_slice %28 {offsets = [0, 24], sizes = [8, 24], strides = [1, 1]} : vector<8x72xf32> to vector<8x24xf32>
    %39 = vector.extract_strided_slice %29 {offsets = [0, 24], sizes = [8, 24], strides = [1, 1]} : vector<8x72xf32> to vector<8x24xf32>
    %40 = arith.addf %38, %39 : vector<8x24xf32>
    %41 = arith.negf %40 : vector<8x24xf32>
    %42 = math.exp %41 : vector<8x24xf32>
    %cst_15 = arith.constant 1.000000e+00 : f32
    %43 = vector.broadcast %cst_15 : f32 to vector<8x24xf32>
    %44 = arith.addf %43, %42 : vector<8x24xf32>
    %45 = arith.divf %43, %44 : vector<8x24xf32>
    %46 = vector.extract_strided_slice %28 {offsets = [0, 48], sizes = [8, 24], strides = [1, 1]} : vector<8x72xf32> to vector<8x24xf32>
    %47 = vector.extract_strided_slice %29 {offsets = [0, 48], sizes = [8, 24], strides = [1, 1]} : vector<8x72xf32> to vector<8x24xf32>
    %48 = arith.mulf %37, %47 : vector<8x24xf32>
    %49 = arith.addf %46, %48 : vector<8x24xf32>
    %50 = math.tanh %49 : vector<8x24xf32>
    %cst_16 = arith.constant 1.000000e+00 : f32
    %51 = vector.broadcast %cst_16 : f32 to vector<8x24xf32>
    %52 = arith.subf %51, %45 : vector<8x24xf32>
    %53 = arith.mulf %52, %50 : vector<8x24xf32>
    %54 = arith.mulf %45, %22 : vector<8x24xf32>
    %55 = arith.addf %53, %54 : vector<8x24xf32>
    %56 = vector.extract_strided_slice %6 {offsets = [56, 72], sizes = [8, 72], strides = [1, 1]} : vector<64x144xf32> to vector<8x72xf32>
    %57 = vector.extract_strided_slice %27 {offsets = [0, 72], sizes = [8, 72], strides = [1, 1]} : vector<8x144xf32> to vector<8x72xf32>
    %58 = vector.extract_strided_slice %56 {offsets = [0, 0], sizes = [8, 24], strides = [1, 1]} : vector<8x72xf32> to vector<8x24xf32>
    %59 = vector.extract_strided_slice %57 {offsets = [0, 0], sizes = [8, 24], strides = [1, 1]} : vector<8x72xf32> to vector<8x24xf32>
    %60 = arith.addf %58, %59 : vector<8x24xf32>
    %61 = arith.negf %60 : vector<8x24xf32>
    %62 = math.exp %61 : vector<8x24xf32>
    %cst_17 = arith.constant 1.000000e+00 : f32
    %63 = vector.broadcast %cst_17 : f32 to vector<8x24xf32>
    %64 = arith.addf %63, %62 : vector<8x24xf32>
    %65 = arith.divf %63, %64 : vector<8x24xf32>
    %66 = vector.extract_strided_slice %56 {offsets = [0, 24], sizes = [8, 24], strides = [1, 1]} : vector<8x72xf32> to vector<8x24xf32>
    %67 = vector.extract_strided_slice %57 {offsets = [0, 24], sizes = [8, 24], strides = [1, 1]} : vector<8x72xf32> to vector<8x24xf32>
    %68 = arith.addf %66, %67 : vector<8x24xf32>
    %69 = arith.negf %68 : vector<8x24xf32>
    %70 = math.exp %69 : vector<8x24xf32>
    %cst_18 = arith.constant 1.000000e+00 : f32
    %71 = vector.broadcast %cst_18 : f32 to vector<8x24xf32>
    %72 = arith.addf %71, %70 : vector<8x24xf32>
    %73 = arith.divf %71, %72 : vector<8x24xf32>
    %74 = vector.extract_strided_slice %56 {offsets = [0, 48], sizes = [8, 24], strides = [1, 1]} : vector<8x72xf32> to vector<8x24xf32>
    %75 = vector.extract_strided_slice %57 {offsets = [0, 48], sizes = [8, 24], strides = [1, 1]} : vector<8x72xf32> to vector<8x24xf32>
    %76 = arith.mulf %65, %75 : vector<8x24xf32>
    %77 = arith.addf %74, %76 : vector<8x24xf32>
    %78 = math.tanh %77 : vector<8x24xf32>
    %cst_19 = arith.constant 1.000000e+00 : f32
    %79 = vector.broadcast %cst_19 : f32 to vector<8x24xf32>
    %80 = arith.subf %79, %73 : vector<8x24xf32>
    %81 = arith.mulf %80, %78 : vector<8x24xf32>
    %82 = arith.mulf %73, %23 : vector<8x24xf32>
    %83 = arith.addf %81, %82 : vector<8x24xf32>
    %c0_i32 = arith.constant 0 : i32
    %84 = vector.broadcast %c0_i32 : i32 to vector<8x24xi32>
    %85 = arith.cmpi sgt, %18, %84 : vector<8x24xi32>
    %c7_i32 = arith.constant 7 : i32
    %86 = vector.broadcast %c7_i32 : i32 to vector<8x24xi32>
    %87 = arith.cmpi sgt, %18, %86 : vector<8x24xi32>
    %88 = arith.select %85, %55, %22 : vector<8x24xi1>, vector<8x24xf32>
    %89 = arith.select %87, %83, %23 : vector<8x24xi1>, vector<8x24xf32>
    %cst_20 = arith.constant 0.000000e+00 : f32
    %90 = vector.broadcast %cst_20 : f32 to vector<8x24xf32>
    %91 = arith.select %85, %55, %90 : vector<8x24xi1>, vector<8x24xf32>
    %cst_21 = arith.constant 0.000000e+00 : f32
    %92 = vector.broadcast %cst_21 : f32 to vector<8x24xf32>
    %93 = arith.select %87, %83, %92 : vector<8x24xi1>, vector<8x24xf32>
    %94 = tpu.concatenate %88, %89 in 1 : vector<8x24xf32>, vector<8x24xf32> -> vector<8x48xf32>
    %c0_22 = arith.constant 0 : index
    %c0_23 = arith.constant 0 : index
    %95 = vector.load %arg4[%c0_22, %c0_23] : memref<48x144xf32, #tpu.memory_space<vmem>>, vector<48x144xf32>
    %cst_24 = arith.constant dense<0.000000e+00> : vector<8x144xf32>
    %96 = tpu.matmul %94, %95, %cst_24 {dimension_numbers = #tpu.dot_dimension_numbers<[1], [0], [0], [1], [0, 0, 1, 1], [], []>} : vector<8x48xf32>, vector<48x144xf32>, vector<8x144xf32> -> vector<8x144xf32>
    %97 = arith.addf %96, %21 : vector<8x144xf32>
    %98 = vector.extract_strided_slice %6 {offsets = [8, 0], sizes = [8, 72], strides = [1, 1]} : vector<64x144xf32> to vector<8x72xf32>
    %99 = vector.extract_strided_slice %97 {offsets = [0, 0], sizes = [8, 72], strides = [1, 1]} : vector<8x144xf32> to vector<8x72xf32>
    %100 = vector.extract_strided_slice %98 {offsets = [0, 0], sizes = [8, 24], strides = [1, 1]} : vector<8x72xf32> to vector<8x24xf32>
    %101 = vector.extract_strided_slice %99 {offsets = [0, 0], sizes = [8, 24], strides = [1, 1]} : vector<8x72xf32> to vector<8x24xf32>
    %102 = arith.addf %100, %101 : vector<8x24xf32>
    %103 = arith.negf %102 : vector<8x24xf32>
    %104 = math.exp %103 : vector<8x24xf32>
    %cst_25 = arith.constant 1.000000e+00 : f32
    %105 = vector.broadcast %cst_25 : f32 to vector<8x24xf32>
    %106 = arith.addf %105, %104 : vector<8x24xf32>
    %107 = arith.divf %105, %106 : vector<8x24xf32>
    %108 = vector.extract_strided_slice %98 {offsets = [0, 24], sizes = [8, 24], strides = [1, 1]} : vector<8x72xf32> to vector<8x24xf32>
    %109 = vector.extract_strided_slice %99 {offsets = [0, 24], sizes = [8, 24], strides = [1, 1]} : vector<8x72xf32> to vector<8x24xf32>
    %110 = arith.addf %108, %109 : vector<8x24xf32>
    %111 = arith.negf %110 : vector<8x24xf32>
    %112 = math.exp %111 : vector<8x24xf32>
    %cst_26 = arith.constant 1.000000e+00 : f32
    %113 = vector.broadcast %cst_26 : f32 to vector<8x24xf32>
    %114 = arith.addf %113, %112 : vector<8x24xf32>
    %115 = arith.divf %113, %114 : vector<8x24xf32>
    %116 = vector.extract_strided_slice %98 {offsets = [0, 48], sizes = [8, 24], strides = [1, 1]} : vector<8x72xf32> to vector<8x24xf32>
    %117 = vector.extract_strided_slice %99 {offsets = [0, 48], sizes = [8, 24], strides = [1, 1]} : vector<8x72xf32> to vector<8x24xf32>
    %118 = arith.mulf %107, %117 : vector<8x24xf32>
    %119 = arith.addf %116, %118 : vector<8x24xf32>
    %120 = math.tanh %119 : vector<8x24xf32>
    %cst_27 = arith.constant 1.000000e+00 : f32
    %121 = vector.broadcast %cst_27 : f32 to vector<8x24xf32>
    %122 = arith.subf %121, %115 : vector<8x24xf32>
    %123 = arith.mulf %122, %120 : vector<8x24xf32>
    %124 = arith.mulf %115, %88 : vector<8x24xf32>
    %125 = arith.addf %123, %124 : vector<8x24xf32>
    %126 = vector.extract_strided_slice %6 {offsets = [48, 72], sizes = [8, 72], strides = [1, 1]} : vector<64x144xf32> to vector<8x72xf32>
    %127 = vector.extract_strided_slice %97 {offsets = [0, 72], sizes = [8, 72], strides = [1, 1]} : vector<8x144xf32> to vector<8x72xf32>
    %128 = vector.extract_strided_slice %126 {offsets = [0, 0], sizes = [8, 24], strides = [1, 1]} : vector<8x72xf32> to vector<8x24xf32>
    %129 = vector.extract_strided_slice %127 {offsets = [0, 0], sizes = [8, 24], strides = [1, 1]} : vector<8x72xf32> to vector<8x24xf32>
    %130 = arith.addf %128, %129 : vector<8x24xf32>
    %131 = arith.negf %130 : vector<8x24xf32>
    %132 = math.exp %131 : vector<8x24xf32>
    %cst_28 = arith.constant 1.000000e+00 : f32
    %133 = vector.broadcast %cst_28 : f32 to vector<8x24xf32>
    %134 = arith.addf %133, %132 : vector<8x24xf32>
    %135 = arith.divf %133, %134 : vector<8x24xf32>
    %136 = vector.extract_strided_slice %126 {offsets = [0, 24], sizes = [8, 24], strides = [1, 1]} : vector<8x72xf32> to vector<8x24xf32>
    %137 = vector.extract_strided_slice %127 {offsets = [0, 24], sizes = [8, 24], strides = [1, 1]} : vector<8x72xf32> to vector<8x24xf32>
    %138 = arith.addf %136, %137 : vector<8x24xf32>
    %139 = arith.negf %138 : vector<8x24xf32>
    %140 = math.exp %139 : vector<8x24xf32>
    %cst_29 = arith.constant 1.000000e+00 : f32
    %141 = vector.broadcast %cst_29 : f32 to vector<8x24xf32>
    %142 = arith.addf %141, %140 : vector<8x24xf32>
    %143 = arith.divf %141, %142 : vector<8x24xf32>
    %144 = vector.extract_strided_slice %126 {offsets = [0, 48], sizes = [8, 24], strides = [1, 1]} : vector<8x72xf32> to vector<8x24xf32>
    %145 = vector.extract_strided_slice %127 {offsets = [0, 48], sizes = [8, 24], strides = [1, 1]} : vector<8x72xf32> to vector<8x24xf32>
    %146 = arith.mulf %135, %145 : vector<8x24xf32>
    %147 = arith.addf %144, %146 : vector<8x24xf32>
    %148 = math.tanh %147 : vector<8x24xf32>
    %cst_30 = arith.constant 1.000000e+00 : f32
    %149 = vector.broadcast %cst_30 : f32 to vector<8x24xf32>
    %150 = arith.subf %149, %143 : vector<8x24xf32>
    %151 = arith.mulf %150, %148 : vector<8x24xf32>
    %152 = arith.mulf %143, %89 : vector<8x24xf32>
    %153 = arith.addf %151, %152 : vector<8x24xf32>
    %c1_i32 = arith.constant 1 : i32
    %154 = vector.broadcast %c1_i32 : i32 to vector<8x24xi32>
    %155 = arith.cmpi sgt, %18, %154 : vector<8x24xi32>
    %c6_i32 = arith.constant 6 : i32
    %156 = vector.broadcast %c6_i32 : i32 to vector<8x24xi32>
    %157 = arith.cmpi sgt, %18, %156 : vector<8x24xi32>
    %158 = arith.select %155, %125, %88 : vector<8x24xi1>, vector<8x24xf32>
    %159 = arith.select %157, %153, %89 : vector<8x24xi1>, vector<8x24xf32>
    %cst_31 = arith.constant 0.000000e+00 : f32
    %160 = vector.broadcast %cst_31 : f32 to vector<8x24xf32>
    %161 = arith.select %155, %125, %160 : vector<8x24xi1>, vector<8x24xf32>
    %cst_32 = arith.constant 0.000000e+00 : f32
    %162 = vector.broadcast %cst_32 : f32 to vector<8x24xf32>
    %163 = arith.select %157, %153, %162 : vector<8x24xi1>, vector<8x24xf32>
    %164 = tpu.concatenate %158, %159 in 1 : vector<8x24xf32>, vector<8x24xf32> -> vector<8x48xf32>
    %c0_33 = arith.constant 0 : index
    %c0_34 = arith.constant 0 : index
    %165 = vector.load %arg4[%c0_33, %c0_34] : memref<48x144xf32, #tpu.memory_space<vmem>>, vector<48x144xf32>
    %cst_35 = arith.constant dense<0.000000e+00> : vector<8x144xf32>
    %166 = tpu.matmul %164, %165, %cst_35 {dimension_numbers = #tpu.dot_dimension_numbers<[1], [0], [0], [1], [0, 0, 1, 1], [], []>} : vector<8x48xf32>, vector<48x144xf32>, vector<8x144xf32> -> vector<8x144xf32>
    %167 = arith.addf %166, %21 : vector<8x144xf32>
    %168 = vector.extract_strided_slice %6 {offsets = [16, 0], sizes = [8, 72], strides = [1, 1]} : vector<64x144xf32> to vector<8x72xf32>
    %169 = vector.extract_strided_slice %167 {offsets = [0, 0], sizes = [8, 72], strides = [1, 1]} : vector<8x144xf32> to vector<8x72xf32>
    %170 = vector.extract_strided_slice %168 {offsets = [0, 0], sizes = [8, 24], strides = [1, 1]} : vector<8x72xf32> to vector<8x24xf32>
    %171 = vector.extract_strided_slice %169 {offsets = [0, 0], sizes = [8, 24], strides = [1, 1]} : vector<8x72xf32> to vector<8x24xf32>
    %172 = arith.addf %170, %171 : vector<8x24xf32>
    %173 = arith.negf %172 : vector<8x24xf32>
    %174 = math.exp %173 : vector<8x24xf32>
    %cst_36 = arith.constant 1.000000e+00 : f32
    %175 = vector.broadcast %cst_36 : f32 to vector<8x24xf32>
    %176 = arith.addf %175, %174 : vector<8x24xf32>
    %177 = arith.divf %175, %176 : vector<8x24xf32>
    %178 = vector.extract_strided_slice %168 {offsets = [0, 24], sizes = [8, 24], strides = [1, 1]} : vector<8x72xf32> to vector<8x24xf32>
    %179 = vector.extract_strided_slice %169 {offsets = [0, 24], sizes = [8, 24], strides = [1, 1]} : vector<8x72xf32> to vector<8x24xf32>
    %180 = arith.addf %178, %179 : vector<8x24xf32>
    %181 = arith.negf %180 : vector<8x24xf32>
    %182 = math.exp %181 : vector<8x24xf32>
    %cst_37 = arith.constant 1.000000e+00 : f32
    %183 = vector.broadcast %cst_37 : f32 to vector<8x24xf32>
    %184 = arith.addf %183, %182 : vector<8x24xf32>
    %185 = arith.divf %183, %184 : vector<8x24xf32>
    %186 = vector.extract_strided_slice %168 {offsets = [0, 48], sizes = [8, 24], strides = [1, 1]} : vector<8x72xf32> to vector<8x24xf32>
    %187 = vector.extract_strided_slice %169 {offsets = [0, 48], sizes = [8, 24], strides = [1, 1]} : vector<8x72xf32> to vector<8x24xf32>
    %188 = arith.mulf %177, %187 : vector<8x24xf32>
    %189 = arith.addf %186, %188 : vector<8x24xf32>
    %190 = math.tanh %189 : vector<8x24xf32>
    %cst_38 = arith.constant 1.000000e+00 : f32
    %191 = vector.broadcast %cst_38 : f32 to vector<8x24xf32>
    %192 = arith.subf %191, %185 : vector<8x24xf32>
    %193 = arith.mulf %192, %190 : vector<8x24xf32>
    %194 = arith.mulf %185, %158 : vector<8x24xf32>
    %195 = arith.addf %193, %194 : vector<8x24xf32>
    %196 = vector.extract_strided_slice %6 {offsets = [40, 72], sizes = [8, 72], strides = [1, 1]} : vector<64x144xf32> to vector<8x72xf32>
    %197 = vector.extract_strided_slice %167 {offsets = [0, 72], sizes = [8, 72], strides = [1, 1]} : vector<8x144xf32> to vector<8x72xf32>
    %198 = vector.extract_strided_slice %196 {offsets = [0, 0], sizes = [8, 24], strides = [1, 1]} : vector<8x72xf32> to vector<8x24xf32>
    %199 = vector.extract_strided_slice %197 {offsets = [0, 0], sizes = [8, 24], strides = [1, 1]} : vector<8x72xf32> to vector<8x24xf32>
    %200 = arith.addf %198, %199 : vector<8x24xf32>
    %201 = arith.negf %200 : vector<8x24xf32>
    %202 = math.exp %201 : vector<8x24xf32>
    %cst_39 = arith.constant 1.000000e+00 : f32
    %203 = vector.broadcast %cst_39 : f32 to vector<8x24xf32>
    %204 = arith.addf %203, %202 : vector<8x24xf32>
    %205 = arith.divf %203, %204 : vector<8x24xf32>
    %206 = vector.extract_strided_slice %196 {offsets = [0, 24], sizes = [8, 24], strides = [1, 1]} : vector<8x72xf32> to vector<8x24xf32>
    %207 = vector.extract_strided_slice %197 {offsets = [0, 24], sizes = [8, 24], strides = [1, 1]} : vector<8x72xf32> to vector<8x24xf32>
    %208 = arith.addf %206, %207 : vector<8x24xf32>
    %209 = arith.negf %208 : vector<8x24xf32>
    %210 = math.exp %209 : vector<8x24xf32>
    %cst_40 = arith.constant 1.000000e+00 : f32
    %211 = vector.broadcast %cst_40 : f32 to vector<8x24xf32>
    %212 = arith.addf %211, %210 : vector<8x24xf32>
    %213 = arith.divf %211, %212 : vector<8x24xf32>
    %214 = vector.extract_strided_slice %196 {offsets = [0, 48], sizes = [8, 24], strides = [1, 1]} : vector<8x72xf32> to vector<8x24xf32>
    %215 = vector.extract_strided_slice %197 {offsets = [0, 48], sizes = [8, 24], strides = [1, 1]} : vector<8x72xf32> to vector<8x24xf32>
    %216 = arith.mulf %205, %215 : vector<8x24xf32>
    %217 = arith.addf %214, %216 : vector<8x24xf32>
    %218 = math.tanh %217 : vector<8x24xf32>
    %cst_41 = arith.constant 1.000000e+00 : f32
    %219 = vector.broadcast %cst_41 : f32 to vector<8x24xf32>
    %220 = arith.subf %219, %213 : vector<8x24xf32>
    %221 = arith.mulf %220, %218 : vector<8x24xf32>
    %222 = arith.mulf %213, %159 : vector<8x24xf32>
    %223 = arith.addf %221, %222 : vector<8x24xf32>
    %c2_i32 = arith.constant 2 : i32
    %224 = vector.broadcast %c2_i32 : i32 to vector<8x24xi32>
    %225 = arith.cmpi sgt, %18, %224 : vector<8x24xi32>
    %c5_i32 = arith.constant 5 : i32
    %226 = vector.broadcast %c5_i32 : i32 to vector<8x24xi32>
    %227 = arith.cmpi sgt, %18, %226 : vector<8x24xi32>
    %228 = arith.select %225, %195, %158 : vector<8x24xi1>, vector<8x24xf32>
    %229 = arith.select %227, %223, %159 : vector<8x24xi1>, vector<8x24xf32>
    %cst_42 = arith.constant 0.000000e+00 : f32
    %230 = vector.broadcast %cst_42 : f32 to vector<8x24xf32>
    %231 = arith.select %225, %195, %230 : vector<8x24xi1>, vector<8x24xf32>
    %cst_43 = arith.constant 0.000000e+00 : f32
    %232 = vector.broadcast %cst_43 : f32 to vector<8x24xf32>
    %233 = arith.select %227, %223, %232 : vector<8x24xi1>, vector<8x24xf32>
    %234 = tpu.concatenate %228, %229 in 1 : vector<8x24xf32>, vector<8x24xf32> -> vector<8x48xf32>
    %c0_44 = arith.constant 0 : index
    %c0_45 = arith.constant 0 : index
    %235 = vector.load %arg4[%c0_44, %c0_45] : memref<48x144xf32, #tpu.memory_space<vmem>>, vector<48x144xf32>
    %cst_46 = arith.constant dense<0.000000e+00> : vector<8x144xf32>
    %236 = tpu.matmul %234, %235, %cst_46 {dimension_numbers = #tpu.dot_dimension_numbers<[1], [0], [0], [1], [0, 0, 1, 1], [], []>} : vector<8x48xf32>, vector<48x144xf32>, vector<8x144xf32> -> vector<8x144xf32>
    %237 = arith.addf %236, %21 : vector<8x144xf32>
    %238 = vector.extract_strided_slice %6 {offsets = [24, 0], sizes = [8, 72], strides = [1, 1]} : vector<64x144xf32> to vector<8x72xf32>
    %239 = vector.extract_strided_slice %237 {offsets = [0, 0], sizes = [8, 72], strides = [1, 1]} : vector<8x144xf32> to vector<8x72xf32>
    %240 = vector.extract_strided_slice %238 {offsets = [0, 0], sizes = [8, 24], strides = [1, 1]} : vector<8x72xf32> to vector<8x24xf32>
    %241 = vector.extract_strided_slice %239 {offsets = [0, 0], sizes = [8, 24], strides = [1, 1]} : vector<8x72xf32> to vector<8x24xf32>
    %242 = arith.addf %240, %241 : vector<8x24xf32>
    %243 = arith.negf %242 : vector<8x24xf32>
    %244 = math.exp %243 : vector<8x24xf32>
    %cst_47 = arith.constant 1.000000e+00 : f32
    %245 = vector.broadcast %cst_47 : f32 to vector<8x24xf32>
    %246 = arith.addf %245, %244 : vector<8x24xf32>
    %247 = arith.divf %245, %246 : vector<8x24xf32>
    %248 = vector.extract_strided_slice %238 {offsets = [0, 24], sizes = [8, 24], strides = [1, 1]} : vector<8x72xf32> to vector<8x24xf32>
    %249 = vector.extract_strided_slice %239 {offsets = [0, 24], sizes = [8, 24], strides = [1, 1]} : vector<8x72xf32> to vector<8x24xf32>
    %250 = arith.addf %248, %249 : vector<8x24xf32>
    %251 = arith.negf %250 : vector<8x24xf32>
    %252 = math.exp %251 : vector<8x24xf32>
    %cst_48 = arith.constant 1.000000e+00 : f32
    %253 = vector.broadcast %cst_48 : f32 to vector<8x24xf32>
    %254 = arith.addf %253, %252 : vector<8x24xf32>
    %255 = arith.divf %253, %254 : vector<8x24xf32>
    %256 = vector.extract_strided_slice %238 {offsets = [0, 48], sizes = [8, 24], strides = [1, 1]} : vector<8x72xf32> to vector<8x24xf32>
    %257 = vector.extract_strided_slice %239 {offsets = [0, 48], sizes = [8, 24], strides = [1, 1]} : vector<8x72xf32> to vector<8x24xf32>
    %258 = arith.mulf %247, %257 : vector<8x24xf32>
    %259 = arith.addf %256, %258 : vector<8x24xf32>
    %260 = math.tanh %259 : vector<8x24xf32>
    %cst_49 = arith.constant 1.000000e+00 : f32
    %261 = vector.broadcast %cst_49 : f32 to vector<8x24xf32>
    %262 = arith.subf %261, %255 : vector<8x24xf32>
    %263 = arith.mulf %262, %260 : vector<8x24xf32>
    %264 = arith.mulf %255, %228 : vector<8x24xf32>
    %265 = arith.addf %263, %264 : vector<8x24xf32>
    %266 = vector.extract_strided_slice %6 {offsets = [32, 72], sizes = [8, 72], strides = [1, 1]} : vector<64x144xf32> to vector<8x72xf32>
    %267 = vector.extract_strided_slice %237 {offsets = [0, 72], sizes = [8, 72], strides = [1, 1]} : vector<8x144xf32> to vector<8x72xf32>
    %268 = vector.extract_strided_slice %266 {offsets = [0, 0], sizes = [8, 24], strides = [1, 1]} : vector<8x72xf32> to vector<8x24xf32>
    %269 = vector.extract_strided_slice %267 {offsets = [0, 0], sizes = [8, 24], strides = [1, 1]} : vector<8x72xf32> to vector<8x24xf32>
    %270 = arith.addf %268, %269 : vector<8x24xf32>
    %271 = arith.negf %270 : vector<8x24xf32>
    %272 = math.exp %271 : vector<8x24xf32>
    %cst_50 = arith.constant 1.000000e+00 : f32
    %273 = vector.broadcast %cst_50 : f32 to vector<8x24xf32>
    %274 = arith.addf %273, %272 : vector<8x24xf32>
    %275 = arith.divf %273, %274 : vector<8x24xf32>
    %276 = vector.extract_strided_slice %266 {offsets = [0, 24], sizes = [8, 24], strides = [1, 1]} : vector<8x72xf32> to vector<8x24xf32>
    %277 = vector.extract_strided_slice %267 {offsets = [0, 24], sizes = [8, 24], strides = [1, 1]} : vector<8x72xf32> to vector<8x24xf32>
    %278 = arith.addf %276, %277 : vector<8x24xf32>
    %279 = arith.negf %278 : vector<8x24xf32>
    %280 = math.exp %279 : vector<8x24xf32>
    %cst_51 = arith.constant 1.000000e+00 : f32
    %281 = vector.broadcast %cst_51 : f32 to vector<8x24xf32>
    %282 = arith.addf %281, %280 : vector<8x24xf32>
    %283 = arith.divf %281, %282 : vector<8x24xf32>
    %284 = vector.extract_strided_slice %266 {offsets = [0, 48], sizes = [8, 24], strides = [1, 1]} : vector<8x72xf32> to vector<8x24xf32>
    %285 = vector.extract_strided_slice %267 {offsets = [0, 48], sizes = [8, 24], strides = [1, 1]} : vector<8x72xf32> to vector<8x24xf32>
    %286 = arith.mulf %275, %285 : vector<8x24xf32>
    %287 = arith.addf %284, %286 : vector<8x24xf32>
    %288 = math.tanh %287 : vector<8x24xf32>
    %cst_52 = arith.constant 1.000000e+00 : f32
    %289 = vector.broadcast %cst_52 : f32 to vector<8x24xf32>
    %290 = arith.subf %289, %283 : vector<8x24xf32>
    %291 = arith.mulf %290, %288 : vector<8x24xf32>
    %292 = arith.mulf %283, %229 : vector<8x24xf32>
    %293 = arith.addf %291, %292 : vector<8x24xf32>
    %c3_i32 = arith.constant 3 : i32
    %294 = vector.broadcast %c3_i32 : i32 to vector<8x24xi32>
    %295 = arith.cmpi sgt, %18, %294 : vector<8x24xi32>
    %c4_i32 = arith.constant 4 : i32
    %296 = vector.broadcast %c4_i32 : i32 to vector<8x24xi32>
    %297 = arith.cmpi sgt, %18, %296 : vector<8x24xi32>
    %298 = arith.select %295, %265, %228 : vector<8x24xi1>, vector<8x24xf32>
    %299 = arith.select %297, %293, %229 : vector<8x24xi1>, vector<8x24xf32>
    %cst_53 = arith.constant 0.000000e+00 : f32
    %300 = vector.broadcast %cst_53 : f32 to vector<8x24xf32>
    %301 = arith.select %295, %265, %300 : vector<8x24xi1>, vector<8x24xf32>
    %cst_54 = arith.constant 0.000000e+00 : f32
    %302 = vector.broadcast %cst_54 : f32 to vector<8x24xf32>
    %303 = arith.select %297, %293, %302 : vector<8x24xi1>, vector<8x24xf32>
    %304 = tpu.concatenate %298, %299 in 1 : vector<8x24xf32>, vector<8x24xf32> -> vector<8x48xf32>
    %c0_55 = arith.constant 0 : index
    %c0_56 = arith.constant 0 : index
    %305 = vector.load %arg4[%c0_55, %c0_56] : memref<48x144xf32, #tpu.memory_space<vmem>>, vector<48x144xf32>
    %cst_57 = arith.constant dense<0.000000e+00> : vector<8x144xf32>
    %306 = tpu.matmul %304, %305, %cst_57 {dimension_numbers = #tpu.dot_dimension_numbers<[1], [0], [0], [1], [0, 0, 1, 1], [], []>} : vector<8x48xf32>, vector<48x144xf32>, vector<8x144xf32> -> vector<8x144xf32>
    %307 = arith.addf %306, %21 : vector<8x144xf32>
    %308 = vector.extract_strided_slice %6 {offsets = [32, 0], sizes = [8, 72], strides = [1, 1]} : vector<64x144xf32> to vector<8x72xf32>
    %309 = vector.extract_strided_slice %307 {offsets = [0, 0], sizes = [8, 72], strides = [1, 1]} : vector<8x144xf32> to vector<8x72xf32>
    %310 = vector.extract_strided_slice %308 {offsets = [0, 0], sizes = [8, 24], strides = [1, 1]} : vector<8x72xf32> to vector<8x24xf32>
    %311 = vector.extract_strided_slice %309 {offsets = [0, 0], sizes = [8, 24], strides = [1, 1]} : vector<8x72xf32> to vector<8x24xf32>
    %312 = arith.addf %310, %311 : vector<8x24xf32>
    %313 = arith.negf %312 : vector<8x24xf32>
    %314 = math.exp %313 : vector<8x24xf32>
    %cst_58 = arith.constant 1.000000e+00 : f32
    %315 = vector.broadcast %cst_58 : f32 to vector<8x24xf32>
    %316 = arith.addf %315, %314 : vector<8x24xf32>
    %317 = arith.divf %315, %316 : vector<8x24xf32>
    %318 = vector.extract_strided_slice %308 {offsets = [0, 24], sizes = [8, 24], strides = [1, 1]} : vector<8x72xf32> to vector<8x24xf32>
    %319 = vector.extract_strided_slice %309 {offsets = [0, 24], sizes = [8, 24], strides = [1, 1]} : vector<8x72xf32> to vector<8x24xf32>
    %320 = arith.addf %318, %319 : vector<8x24xf32>
    %321 = arith.negf %320 : vector<8x24xf32>
    %322 = math.exp %321 : vector<8x24xf32>
    %cst_59 = arith.constant 1.000000e+00 : f32
    %323 = vector.broadcast %cst_59 : f32 to vector<8x24xf32>
    %324 = arith.addf %323, %322 : vector<8x24xf32>
    %325 = arith.divf %323, %324 : vector<8x24xf32>
    %326 = vector.extract_strided_slice %308 {offsets = [0, 48], sizes = [8, 24], strides = [1, 1]} : vector<8x72xf32> to vector<8x24xf32>
    %327 = vector.extract_strided_slice %309 {offsets = [0, 48], sizes = [8, 24], strides = [1, 1]} : vector<8x72xf32> to vector<8x24xf32>
    %328 = arith.mulf %317, %327 : vector<8x24xf32>
    %329 = arith.addf %326, %328 : vector<8x24xf32>
    %330 = math.tanh %329 : vector<8x24xf32>
    %cst_60 = arith.constant 1.000000e+00 : f32
    %331 = vector.broadcast %cst_60 : f32 to vector<8x24xf32>
    %332 = arith.subf %331, %325 : vector<8x24xf32>
    %333 = arith.mulf %332, %330 : vector<8x24xf32>
    %334 = arith.mulf %325, %298 : vector<8x24xf32>
    %335 = arith.addf %333, %334 : vector<8x24xf32>
    %336 = vector.extract_strided_slice %6 {offsets = [24, 72], sizes = [8, 72], strides = [1, 1]} : vector<64x144xf32> to vector<8x72xf32>
    %337 = vector.extract_strided_slice %307 {offsets = [0, 72], sizes = [8, 72], strides = [1, 1]} : vector<8x144xf32> to vector<8x72xf32>
    %338 = vector.extract_strided_slice %336 {offsets = [0, 0], sizes = [8, 24], strides = [1, 1]} : vector<8x72xf32> to vector<8x24xf32>
    %339 = vector.extract_strided_slice %337 {offsets = [0, 0], sizes = [8, 24], strides = [1, 1]} : vector<8x72xf32> to vector<8x24xf32>
    %340 = arith.addf %338, %339 : vector<8x24xf32>
    %341 = arith.negf %340 : vector<8x24xf32>
    %342 = math.exp %341 : vector<8x24xf32>
    %cst_61 = arith.constant 1.000000e+00 : f32
    %343 = vector.broadcast %cst_61 : f32 to vector<8x24xf32>
    %344 = arith.addf %343, %342 : vector<8x24xf32>
    %345 = arith.divf %343, %344 : vector<8x24xf32>
    %346 = vector.extract_strided_slice %336 {offsets = [0, 24], sizes = [8, 24], strides = [1, 1]} : vector<8x72xf32> to vector<8x24xf32>
    %347 = vector.extract_strided_slice %337 {offsets = [0, 24], sizes = [8, 24], strides = [1, 1]} : vector<8x72xf32> to vector<8x24xf32>
    %348 = arith.addf %346, %347 : vector<8x24xf32>
    %349 = arith.negf %348 : vector<8x24xf32>
    %350 = math.exp %349 : vector<8x24xf32>
    %cst_62 = arith.constant 1.000000e+00 : f32
    %351 = vector.broadcast %cst_62 : f32 to vector<8x24xf32>
    %352 = arith.addf %351, %350 : vector<8x24xf32>
    %353 = arith.divf %351, %352 : vector<8x24xf32>
    %354 = vector.extract_strided_slice %336 {offsets = [0, 48], sizes = [8, 24], strides = [1, 1]} : vector<8x72xf32> to vector<8x24xf32>
    %355 = vector.extract_strided_slice %337 {offsets = [0, 48], sizes = [8, 24], strides = [1, 1]} : vector<8x72xf32> to vector<8x24xf32>
    %356 = arith.mulf %345, %355 : vector<8x24xf32>
    %357 = arith.addf %354, %356 : vector<8x24xf32>
    %358 = math.tanh %357 : vector<8x24xf32>
    %cst_63 = arith.constant 1.000000e+00 : f32
    %359 = vector.broadcast %cst_63 : f32 to vector<8x24xf32>
    %360 = arith.subf %359, %353 : vector<8x24xf32>
    %361 = arith.mulf %360, %358 : vector<8x24xf32>
    %362 = arith.mulf %353, %299 : vector<8x24xf32>
    %363 = arith.addf %361, %362 : vector<8x24xf32>
    %c4_i32_64 = arith.constant 4 : i32
    %364 = vector.broadcast %c4_i32_64 : i32 to vector<8x24xi32>
    %365 = arith.cmpi sgt, %18, %364 : vector<8x24xi32>
    %c3_i32_65 = arith.constant 3 : i32
    %366 = vector.broadcast %c3_i32_65 : i32 to vector<8x24xi32>
    %367 = arith.cmpi sgt, %18, %366 : vector<8x24xi32>
    %368 = arith.select %365, %335, %298 : vector<8x24xi1>, vector<8x24xf32>
    %369 = arith.select %367, %363, %299 : vector<8x24xi1>, vector<8x24xf32>
    %cst_66 = arith.constant 0.000000e+00 : f32
    %370 = vector.broadcast %cst_66 : f32 to vector<8x24xf32>
    %371 = arith.select %365, %335, %370 : vector<8x24xi1>, vector<8x24xf32>
    %cst_67 = arith.constant 0.000000e+00 : f32
    %372 = vector.broadcast %cst_67 : f32 to vector<8x24xf32>
    %373 = arith.select %367, %363, %372 : vector<8x24xi1>, vector<8x24xf32>
    %374 = tpu.concatenate %368, %369 in 1 : vector<8x24xf32>, vector<8x24xf32> -> vector<8x48xf32>
    %c0_68 = arith.constant 0 : index
    %c0_69 = arith.constant 0 : index
    %375 = vector.load %arg4[%c0_68, %c0_69] : memref<48x144xf32, #tpu.memory_space<vmem>>, vector<48x144xf32>
    %cst_70 = arith.constant dense<0.000000e+00> : vector<8x144xf32>
    %376 = tpu.matmul %374, %375, %cst_70 {dimension_numbers = #tpu.dot_dimension_numbers<[1], [0], [0], [1], [0, 0, 1, 1], [], []>} : vector<8x48xf32>, vector<48x144xf32>, vector<8x144xf32> -> vector<8x144xf32>
    %377 = arith.addf %376, %21 : vector<8x144xf32>
    %378 = vector.extract_strided_slice %6 {offsets = [40, 0], sizes = [8, 72], strides = [1, 1]} : vector<64x144xf32> to vector<8x72xf32>
    %379 = vector.extract_strided_slice %377 {offsets = [0, 0], sizes = [8, 72], strides = [1, 1]} : vector<8x144xf32> to vector<8x72xf32>
    %380 = vector.extract_strided_slice %378 {offsets = [0, 0], sizes = [8, 24], strides = [1, 1]} : vector<8x72xf32> to vector<8x24xf32>
    %381 = vector.extract_strided_slice %379 {offsets = [0, 0], sizes = [8, 24], strides = [1, 1]} : vector<8x72xf32> to vector<8x24xf32>
    %382 = arith.addf %380, %381 : vector<8x24xf32>
    %383 = arith.negf %382 : vector<8x24xf32>
    %384 = math.exp %383 : vector<8x24xf32>
    %cst_71 = arith.constant 1.000000e+00 : f32
    %385 = vector.broadcast %cst_71 : f32 to vector<8x24xf32>
    %386 = arith.addf %385, %384 : vector<8x24xf32>
    %387 = arith.divf %385, %386 : vector<8x24xf32>
    %388 = vector.extract_strided_slice %378 {offsets = [0, 24], sizes = [8, 24], strides = [1, 1]} : vector<8x72xf32> to vector<8x24xf32>
    %389 = vector.extract_strided_slice %379 {offsets = [0, 24], sizes = [8, 24], strides = [1, 1]} : vector<8x72xf32> to vector<8x24xf32>
    %390 = arith.addf %388, %389 : vector<8x24xf32>
    %391 = arith.negf %390 : vector<8x24xf32>
    %392 = math.exp %391 : vector<8x24xf32>
    %cst_72 = arith.constant 1.000000e+00 : f32
    %393 = vector.broadcast %cst_72 : f32 to vector<8x24xf32>
    %394 = arith.addf %393, %392 : vector<8x24xf32>
    %395 = arith.divf %393, %394 : vector<8x24xf32>
    %396 = vector.extract_strided_slice %378 {offsets = [0, 48], sizes = [8, 24], strides = [1, 1]} : vector<8x72xf32> to vector<8x24xf32>
    %397 = vector.extract_strided_slice %379 {offsets = [0, 48], sizes = [8, 24], strides = [1, 1]} : vector<8x72xf32> to vector<8x24xf32>
    %398 = arith.mulf %387, %397 : vector<8x24xf32>
    %399 = arith.addf %396, %398 : vector<8x24xf32>
    %400 = math.tanh %399 : vector<8x24xf32>
    %cst_73 = arith.constant 1.000000e+00 : f32
    %401 = vector.broadcast %cst_73 : f32 to vector<8x24xf32>
    %402 = arith.subf %401, %395 : vector<8x24xf32>
    %403 = arith.mulf %402, %400 : vector<8x24xf32>
    %404 = arith.mulf %395, %368 : vector<8x24xf32>
    %405 = arith.addf %403, %404 : vector<8x24xf32>
    %406 = vector.extract_strided_slice %6 {offsets = [16, 72], sizes = [8, 72], strides = [1, 1]} : vector<64x144xf32> to vector<8x72xf32>
    %407 = vector.extract_strided_slice %377 {offsets = [0, 72], sizes = [8, 72], strides = [1, 1]} : vector<8x144xf32> to vector<8x72xf32>
    %408 = vector.extract_strided_slice %406 {offsets = [0, 0], sizes = [8, 24], strides = [1, 1]} : vector<8x72xf32> to vector<8x24xf32>
    %409 = vector.extract_strided_slice %407 {offsets = [0, 0], sizes = [8, 24], strides = [1, 1]} : vector<8x72xf32> to vector<8x24xf32>
    %410 = arith.addf %408, %409 : vector<8x24xf32>
    %411 = arith.negf %410 : vector<8x24xf32>
    %412 = math.exp %411 : vector<8x24xf32>
    %cst_74 = arith.constant 1.000000e+00 : f32
    %413 = vector.broadcast %cst_74 : f32 to vector<8x24xf32>
    %414 = arith.addf %413, %412 : vector<8x24xf32>
    %415 = arith.divf %413, %414 : vector<8x24xf32>
    %416 = vector.extract_strided_slice %406 {offsets = [0, 24], sizes = [8, 24], strides = [1, 1]} : vector<8x72xf32> to vector<8x24xf32>
    %417 = vector.extract_strided_slice %407 {offsets = [0, 24], sizes = [8, 24], strides = [1, 1]} : vector<8x72xf32> to vector<8x24xf32>
    %418 = arith.addf %416, %417 : vector<8x24xf32>
    %419 = arith.negf %418 : vector<8x24xf32>
    %420 = math.exp %419 : vector<8x24xf32>
    %cst_75 = arith.constant 1.000000e+00 : f32
    %421 = vector.broadcast %cst_75 : f32 to vector<8x24xf32>
    %422 = arith.addf %421, %420 : vector<8x24xf32>
    %423 = arith.divf %421, %422 : vector<8x24xf32>
    %424 = vector.extract_strided_slice %406 {offsets = [0, 48], sizes = [8, 24], strides = [1, 1]} : vector<8x72xf32> to vector<8x24xf32>
    %425 = vector.extract_strided_slice %407 {offsets = [0, 48], sizes = [8, 24], strides = [1, 1]} : vector<8x72xf32> to vector<8x24xf32>
    %426 = arith.mulf %415, %425 : vector<8x24xf32>
    %427 = arith.addf %424, %426 : vector<8x24xf32>
    %428 = math.tanh %427 : vector<8x24xf32>
    %cst_76 = arith.constant 1.000000e+00 : f32
    %429 = vector.broadcast %cst_76 : f32 to vector<8x24xf32>
    %430 = arith.subf %429, %423 : vector<8x24xf32>
    %431 = arith.mulf %430, %428 : vector<8x24xf32>
    %432 = arith.mulf %423, %369 : vector<8x24xf32>
    %433 = arith.addf %431, %432 : vector<8x24xf32>
    %c5_i32_77 = arith.constant 5 : i32
    %434 = vector.broadcast %c5_i32_77 : i32 to vector<8x24xi32>
    %435 = arith.cmpi sgt, %18, %434 : vector<8x24xi32>
    %c2_i32_78 = arith.constant 2 : i32
    %436 = vector.broadcast %c2_i32_78 : i32 to vector<8x24xi32>
    %437 = arith.cmpi sgt, %18, %436 : vector<8x24xi32>
    %438 = arith.select %435, %405, %368 : vector<8x24xi1>, vector<8x24xf32>
    %439 = arith.select %437, %433, %369 : vector<8x24xi1>, vector<8x24xf32>
    %cst_79 = arith.constant 0.000000e+00 : f32
    %440 = vector.broadcast %cst_79 : f32 to vector<8x24xf32>
    %441 = arith.select %435, %405, %440 : vector<8x24xi1>, vector<8x24xf32>
    %cst_80 = arith.constant 0.000000e+00 : f32
    %442 = vector.broadcast %cst_80 : f32 to vector<8x24xf32>
    %443 = arith.select %437, %433, %442 : vector<8x24xi1>, vector<8x24xf32>
    %444 = tpu.concatenate %438, %439 in 1 : vector<8x24xf32>, vector<8x24xf32> -> vector<8x48xf32>
    %c0_81 = arith.constant 0 : index
    %c0_82 = arith.constant 0 : index
    %445 = vector.load %arg4[%c0_81, %c0_82] : memref<48x144xf32, #tpu.memory_space<vmem>>, vector<48x144xf32>
    %cst_83 = arith.constant dense<0.000000e+00> : vector<8x144xf32>
    %446 = tpu.matmul %444, %445, %cst_83 {dimension_numbers = #tpu.dot_dimension_numbers<[1], [0], [0], [1], [0, 0, 1, 1], [], []>} : vector<8x48xf32>, vector<48x144xf32>, vector<8x144xf32> -> vector<8x144xf32>
    %447 = arith.addf %446, %21 : vector<8x144xf32>
    %448 = vector.extract_strided_slice %6 {offsets = [48, 0], sizes = [8, 72], strides = [1, 1]} : vector<64x144xf32> to vector<8x72xf32>
    %449 = vector.extract_strided_slice %447 {offsets = [0, 0], sizes = [8, 72], strides = [1, 1]} : vector<8x144xf32> to vector<8x72xf32>
    %450 = vector.extract_strided_slice %448 {offsets = [0, 0], sizes = [8, 24], strides = [1, 1]} : vector<8x72xf32> to vector<8x24xf32>
    %451 = vector.extract_strided_slice %449 {offsets = [0, 0], sizes = [8, 24], strides = [1, 1]} : vector<8x72xf32> to vector<8x24xf32>
    %452 = arith.addf %450, %451 : vector<8x24xf32>
    %453 = arith.negf %452 : vector<8x24xf32>
    %454 = math.exp %453 : vector<8x24xf32>
    %cst_84 = arith.constant 1.000000e+00 : f32
    %455 = vector.broadcast %cst_84 : f32 to vector<8x24xf32>
    %456 = arith.addf %455, %454 : vector<8x24xf32>
    %457 = arith.divf %455, %456 : vector<8x24xf32>
    %458 = vector.extract_strided_slice %448 {offsets = [0, 24], sizes = [8, 24], strides = [1, 1]} : vector<8x72xf32> to vector<8x24xf32>
    %459 = vector.extract_strided_slice %449 {offsets = [0, 24], sizes = [8, 24], strides = [1, 1]} : vector<8x72xf32> to vector<8x24xf32>
    %460 = arith.addf %458, %459 : vector<8x24xf32>
    %461 = arith.negf %460 : vector<8x24xf32>
    %462 = math.exp %461 : vector<8x24xf32>
    %cst_85 = arith.constant 1.000000e+00 : f32
    %463 = vector.broadcast %cst_85 : f32 to vector<8x24xf32>
    %464 = arith.addf %463, %462 : vector<8x24xf32>
    %465 = arith.divf %463, %464 : vector<8x24xf32>
    %466 = vector.extract_strided_slice %448 {offsets = [0, 48], sizes = [8, 24], strides = [1, 1]} : vector<8x72xf32> to vector<8x24xf32>
    %467 = vector.extract_strided_slice %449 {offsets = [0, 48], sizes = [8, 24], strides = [1, 1]} : vector<8x72xf32> to vector<8x24xf32>
    %468 = arith.mulf %457, %467 : vector<8x24xf32>
    %469 = arith.addf %466, %468 : vector<8x24xf32>
    %470 = math.tanh %469 : vector<8x24xf32>
    %cst_86 = arith.constant 1.000000e+00 : f32
    %471 = vector.broadcast %cst_86 : f32 to vector<8x24xf32>
    %472 = arith.subf %471, %465 : vector<8x24xf32>
    %473 = arith.mulf %472, %470 : vector<8x24xf32>
    %474 = arith.mulf %465, %438 : vector<8x24xf32>
    %475 = arith.addf %473, %474 : vector<8x24xf32>
    %476 = vector.extract_strided_slice %6 {offsets = [8, 72], sizes = [8, 72], strides = [1, 1]} : vector<64x144xf32> to vector<8x72xf32>
    %477 = vector.extract_strided_slice %447 {offsets = [0, 72], sizes = [8, 72], strides = [1, 1]} : vector<8x144xf32> to vector<8x72xf32>
    %478 = vector.extract_strided_slice %476 {offsets = [0, 0], sizes = [8, 24], strides = [1, 1]} : vector<8x72xf32> to vector<8x24xf32>
    %479 = vector.extract_strided_slice %477 {offsets = [0, 0], sizes = [8, 24], strides = [1, 1]} : vector<8x72xf32> to vector<8x24xf32>
    %480 = arith.addf %478, %479 : vector<8x24xf32>
    %481 = arith.negf %480 : vector<8x24xf32>
    %482 = math.exp %481 : vector<8x24xf32>
    %cst_87 = arith.constant 1.000000e+00 : f32
    %483 = vector.broadcast %cst_87 : f32 to vector<8x24xf32>
    %484 = arith.addf %483, %482 : vector<8x24xf32>
    %485 = arith.divf %483, %484 : vector<8x24xf32>
    %486 = vector.extract_strided_slice %476 {offsets = [0, 24], sizes = [8, 24], strides = [1, 1]} : vector<8x72xf32> to vector<8x24xf32>
    %487 = vector.extract_strided_slice %477 {offsets = [0, 24], sizes = [8, 24], strides = [1, 1]} : vector<8x72xf32> to vector<8x24xf32>
    %488 = arith.addf %486, %487 : vector<8x24xf32>
    %489 = arith.negf %488 : vector<8x24xf32>
    %490 = math.exp %489 : vector<8x24xf32>
    %cst_88 = arith.constant 1.000000e+00 : f32
    %491 = vector.broadcast %cst_88 : f32 to vector<8x24xf32>
    %492 = arith.addf %491, %490 : vector<8x24xf32>
    %493 = arith.divf %491, %492 : vector<8x24xf32>
    %494 = vector.extract_strided_slice %476 {offsets = [0, 48], sizes = [8, 24], strides = [1, 1]} : vector<8x72xf32> to vector<8x24xf32>
    %495 = vector.extract_strided_slice %477 {offsets = [0, 48], sizes = [8, 24], strides = [1, 1]} : vector<8x72xf32> to vector<8x24xf32>
    %496 = arith.mulf %485, %495 : vector<8x24xf32>
    %497 = arith.addf %494, %496 : vector<8x24xf32>
    %498 = math.tanh %497 : vector<8x24xf32>
    %cst_89 = arith.constant 1.000000e+00 : f32
    %499 = vector.broadcast %cst_89 : f32 to vector<8x24xf32>
    %500 = arith.subf %499, %493 : vector<8x24xf32>
    %501 = arith.mulf %500, %498 : vector<8x24xf32>
    %502 = arith.mulf %493, %439 : vector<8x24xf32>
    %503 = arith.addf %501, %502 : vector<8x24xf32>
    %c6_i32_90 = arith.constant 6 : i32
    %504 = vector.broadcast %c6_i32_90 : i32 to vector<8x24xi32>
    %505 = arith.cmpi sgt, %18, %504 : vector<8x24xi32>
    %c1_i32_91 = arith.constant 1 : i32
    %506 = vector.broadcast %c1_i32_91 : i32 to vector<8x24xi32>
    %507 = arith.cmpi sgt, %18, %506 : vector<8x24xi32>
    %508 = arith.select %505, %475, %438 : vector<8x24xi1>, vector<8x24xf32>
    %509 = arith.select %507, %503, %439 : vector<8x24xi1>, vector<8x24xf32>
    %cst_92 = arith.constant 0.000000e+00 : f32
    %510 = vector.broadcast %cst_92 : f32 to vector<8x24xf32>
    %511 = arith.select %505, %475, %510 : vector<8x24xi1>, vector<8x24xf32>
    %cst_93 = arith.constant 0.000000e+00 : f32
    %512 = vector.broadcast %cst_93 : f32 to vector<8x24xf32>
    %513 = arith.select %507, %503, %512 : vector<8x24xi1>, vector<8x24xf32>
    %514 = tpu.concatenate %508, %509 in 1 : vector<8x24xf32>, vector<8x24xf32> -> vector<8x48xf32>
    %c0_94 = arith.constant 0 : index
    %c0_95 = arith.constant 0 : index
    %515 = vector.load %arg4[%c0_94, %c0_95] : memref<48x144xf32, #tpu.memory_space<vmem>>, vector<48x144xf32>
    %cst_96 = arith.constant dense<0.000000e+00> : vector<8x144xf32>
    %516 = tpu.matmul %514, %515, %cst_96 {dimension_numbers = #tpu.dot_dimension_numbers<[1], [0], [0], [1], [0, 0, 1, 1], [], []>} : vector<8x48xf32>, vector<48x144xf32>, vector<8x144xf32> -> vector<8x144xf32>
    %517 = arith.addf %516, %21 : vector<8x144xf32>
    %518 = vector.extract_strided_slice %6 {offsets = [56, 0], sizes = [8, 72], strides = [1, 1]} : vector<64x144xf32> to vector<8x72xf32>
    %519 = vector.extract_strided_slice %517 {offsets = [0, 0], sizes = [8, 72], strides = [1, 1]} : vector<8x144xf32> to vector<8x72xf32>
    %520 = vector.extract_strided_slice %518 {offsets = [0, 0], sizes = [8, 24], strides = [1, 1]} : vector<8x72xf32> to vector<8x24xf32>
    %521 = vector.extract_strided_slice %519 {offsets = [0, 0], sizes = [8, 24], strides = [1, 1]} : vector<8x72xf32> to vector<8x24xf32>
    %522 = arith.addf %520, %521 : vector<8x24xf32>
    %523 = arith.negf %522 : vector<8x24xf32>
    %524 = math.exp %523 : vector<8x24xf32>
    %cst_97 = arith.constant 1.000000e+00 : f32
    %525 = vector.broadcast %cst_97 : f32 to vector<8x24xf32>
    %526 = arith.addf %525, %524 : vector<8x24xf32>
    %527 = arith.divf %525, %526 : vector<8x24xf32>
    %528 = vector.extract_strided_slice %518 {offsets = [0, 24], sizes = [8, 24], strides = [1, 1]} : vector<8x72xf32> to vector<8x24xf32>
    %529 = vector.extract_strided_slice %519 {offsets = [0, 24], sizes = [8, 24], strides = [1, 1]} : vector<8x72xf32> to vector<8x24xf32>
    %530 = arith.addf %528, %529 : vector<8x24xf32>
    %531 = arith.negf %530 : vector<8x24xf32>
    %532 = math.exp %531 : vector<8x24xf32>
    %cst_98 = arith.constant 1.000000e+00 : f32
    %533 = vector.broadcast %cst_98 : f32 to vector<8x24xf32>
    %534 = arith.addf %533, %532 : vector<8x24xf32>
    %535 = arith.divf %533, %534 : vector<8x24xf32>
    %536 = vector.extract_strided_slice %518 {offsets = [0, 48], sizes = [8, 24], strides = [1, 1]} : vector<8x72xf32> to vector<8x24xf32>
    %537 = vector.extract_strided_slice %519 {offsets = [0, 48], sizes = [8, 24], strides = [1, 1]} : vector<8x72xf32> to vector<8x24xf32>
    %538 = arith.mulf %527, %537 : vector<8x24xf32>
    %539 = arith.addf %536, %538 : vector<8x24xf32>
    %540 = math.tanh %539 : vector<8x24xf32>
    %cst_99 = arith.constant 1.000000e+00 : f32
    %541 = vector.broadcast %cst_99 : f32 to vector<8x24xf32>
    %542 = arith.subf %541, %535 : vector<8x24xf32>
    %543 = arith.mulf %542, %540 : vector<8x24xf32>
    %544 = arith.mulf %535, %508 : vector<8x24xf32>
    %545 = arith.addf %543, %544 : vector<8x24xf32>
    %546 = vector.extract_strided_slice %6 {offsets = [0, 72], sizes = [8, 72], strides = [1, 1]} : vector<64x144xf32> to vector<8x72xf32>
    %547 = vector.extract_strided_slice %517 {offsets = [0, 72], sizes = [8, 72], strides = [1, 1]} : vector<8x144xf32> to vector<8x72xf32>
    %548 = vector.extract_strided_slice %546 {offsets = [0, 0], sizes = [8, 24], strides = [1, 1]} : vector<8x72xf32> to vector<8x24xf32>
    %549 = vector.extract_strided_slice %547 {offsets = [0, 0], sizes = [8, 24], strides = [1, 1]} : vector<8x72xf32> to vector<8x24xf32>
    %550 = arith.addf %548, %549 : vector<8x24xf32>
    %551 = arith.negf %550 : vector<8x24xf32>
    %552 = math.exp %551 : vector<8x24xf32>
    %cst_100 = arith.constant 1.000000e+00 : f32
    %553 = vector.broadcast %cst_100 : f32 to vector<8x24xf32>
    %554 = arith.addf %553, %552 : vector<8x24xf32>
    %555 = arith.divf %553, %554 : vector<8x24xf32>
    %556 = vector.extract_strided_slice %546 {offsets = [0, 24], sizes = [8, 24], strides = [1, 1]} : vector<8x72xf32> to vector<8x24xf32>
    %557 = vector.extract_strided_slice %547 {offsets = [0, 24], sizes = [8, 24], strides = [1, 1]} : vector<8x72xf32> to vector<8x24xf32>
    %558 = arith.addf %556, %557 : vector<8x24xf32>
    %559 = arith.negf %558 : vector<8x24xf32>
    %560 = math.exp %559 : vector<8x24xf32>
    %cst_101 = arith.constant 1.000000e+00 : f32
    %561 = vector.broadcast %cst_101 : f32 to vector<8x24xf32>
    %562 = arith.addf %561, %560 : vector<8x24xf32>
    %563 = arith.divf %561, %562 : vector<8x24xf32>
    %564 = vector.extract_strided_slice %546 {offsets = [0, 48], sizes = [8, 24], strides = [1, 1]} : vector<8x72xf32> to vector<8x24xf32>
    %565 = vector.extract_strided_slice %547 {offsets = [0, 48], sizes = [8, 24], strides = [1, 1]} : vector<8x72xf32> to vector<8x24xf32>
    %566 = arith.mulf %555, %565 : vector<8x24xf32>
    %567 = arith.addf %564, %566 : vector<8x24xf32>
    %568 = math.tanh %567 : vector<8x24xf32>
    %cst_102 = arith.constant 1.000000e+00 : f32
    %569 = vector.broadcast %cst_102 : f32 to vector<8x24xf32>
    %570 = arith.subf %569, %563 : vector<8x24xf32>
    %571 = arith.mulf %570, %568 : vector<8x24xf32>
    %572 = arith.mulf %563, %509 : vector<8x24xf32>
    %573 = arith.addf %571, %572 : vector<8x24xf32>
    %c7_i32_103 = arith.constant 7 : i32
    %574 = vector.broadcast %c7_i32_103 : i32 to vector<8x24xi32>
    %575 = arith.cmpi sgt, %18, %574 : vector<8x24xi32>
    %c0_i32_104 = arith.constant 0 : i32
    %576 = vector.broadcast %c0_i32_104 : i32 to vector<8x24xi32>
    %577 = arith.cmpi sgt, %18, %576 : vector<8x24xi32>
    %cst_105 = arith.constant 0.000000e+00 : f32
    %578 = vector.broadcast %cst_105 : f32 to vector<8x24xf32>
    %579 = arith.select %575, %545, %578 : vector<8x24xi1>, vector<8x24xf32>
    %cst_106 = arith.constant 0.000000e+00 : f32
    %580 = vector.broadcast %cst_106 : f32 to vector<8x24xf32>
    %581 = arith.select %577, %573, %580 : vector<8x24xi1>, vector<8x24xf32>
    %582 = tpu.concatenate %91, %161, %231, %301, %371, %441, %511, %579 in 0 : vector<8x24xf32>, vector<8x24xf32>, vector<8x24xf32>, vector<8x24xf32>, vector<8x24xf32>, vector<8x24xf32>, vector<8x24xf32>, vector<8x24xf32> -> vector<64x24xf32>
    %583 = tpu.concatenate %581, %513, %443, %373, %303, %233, %163, %93 in 0 : vector<8x24xf32>, vector<8x24xf32>, vector<8x24xf32>, vector<8x24xf32>, vector<8x24xf32>, vector<8x24xf32>, vector<8x24xf32>, vector<8x24xf32> -> vector<64x24xf32>
    %584 = tpu.concatenate %582, %583 in 1 : vector<64x24xf32>, vector<64x24xf32> -> vector<64x48xf32>
    %c0_107 = arith.constant 0 : index
    %c0_108 = arith.constant 0 : index
    %585 = vector.load %arg6[%c0_107, %c0_108] : memref<48x9xf32, #tpu.memory_space<vmem>>, vector<48x9xf32>
    %cst_109 = arith.constant dense<0.000000e+00> : vector<64x9xf32>
    %586 = tpu.matmul %584, %585, %cst_109 {dimension_numbers = #tpu.dot_dimension_numbers<[1], [0], [0], [1], [0, 0, 1, 1], [], []>} : vector<64x48xf32>, vector<48x9xf32>, vector<64x9xf32> -> vector<64x9xf32>
    %cst_110 = arith.constant 0.000000e+00 : f32
    %587 = vector.broadcast %cst_110 : f32 to vector<8x3xf32>
    %588 = vector.extract_strided_slice %586 {offsets = [0, 0], sizes = [56, 3], strides = [1, 1]} : vector<64x9xf32> to vector<56x3xf32>
    %589 = tpu.concatenate %587, %588 in 0 : vector<8x3xf32>, vector<56x3xf32> -> vector<64x3xf32>
    %590 = vector.extract_strided_slice %586 {offsets = [8, 6], sizes = [56, 3], strides = [1, 1]} : vector<64x9xf32> to vector<56x3xf32>
    %591 = tpu.concatenate %590, %587 in 0 : vector<56x3xf32>, vector<8x3xf32> -> vector<64x3xf32>
    %592 = vector.extract_strided_slice %586 {offsets = [0, 3], sizes = [64, 3], strides = [1, 1]} : vector<64x9xf32> to vector<64x3xf32>
    %593 = arith.addf %592, %589 : vector<64x3xf32>
    %594 = arith.addf %593, %591 : vector<64x3xf32>
    %c0_111 = arith.constant 0 : index
    %c0_112 = arith.constant 0 : index
    %595 = vector.load %arg7[%c0_111, %c0_112] : memref<1x3xf32, #tpu.memory_space<vmem>>, vector<1x3xf32>
    %596 = vector.broadcast %595 : vector<1x3xf32> to vector<64x3xf32>
    %597 = arith.addf %594, %596 : vector<64x3xf32>
    %598 = arith.negf %597 : vector<64x3xf32>
    %599 = math.exp %598 : vector<64x3xf32>
    %cst_113 = arith.constant 1.000000e+00 : f32
    %600 = vector.broadcast %cst_113 : f32 to vector<64x3xf32>
    %601 = arith.addf %600, %599 : vector<64x3xf32>
    %602 = arith.divf %600, %601 : vector<64x3xf32>
    %603 = math.tanh %584 : vector<64x48xf32>
    %c0_114 = arith.constant 0 : index
    %c0_115 = arith.constant 0 : index
    %604 = vector.load %arg8[%c0_114, %c0_115] : memref<48x24xf32, #tpu.memory_space<vmem>>, vector<48x24xf32>
    %cst_116 = arith.constant dense<0.000000e+00> : vector<64x24xf32>
    %605 = tpu.matmul %603, %604, %cst_116 {dimension_numbers = #tpu.dot_dimension_numbers<[1], [0], [0], [1], [0, 0, 1, 1], [], []>} : vector<64x48xf32>, vector<48x24xf32>, vector<64x24xf32> -> vector<64x24xf32>
    %606 = vector.extract_strided_slice %602 {offsets = [0, 0], sizes = [64, 1], strides = [1, 1]} : vector<64x3xf32> to vector<64x1xf32>
    %607 = vector.shape_cast %606 : vector<64x1xf32> to vector<64x1xf32>
    %608 = vector.broadcast %607 : vector<64x1xf32> to vector<64x8xf32>
    %609 = vector.extract_strided_slice %602 {offsets = [0, 1], sizes = [64, 1], strides = [1, 1]} : vector<64x3xf32> to vector<64x1xf32>
    %610 = vector.shape_cast %609 : vector<64x1xf32> to vector<64x1xf32>
    %611 = vector.broadcast %610 : vector<64x1xf32> to vector<64x8xf32>
    %612 = vector.extract_strided_slice %602 {offsets = [0, 2], sizes = [64, 1], strides = [1, 1]} : vector<64x3xf32> to vector<64x1xf32>
    %613 = vector.shape_cast %612 : vector<64x1xf32> to vector<64x1xf32>
    %614 = vector.broadcast %613 : vector<64x1xf32> to vector<64x8xf32>
    %615 = tpu.concatenate %608, %611, %614 in 1 : vector<64x8xf32>, vector<64x8xf32>, vector<64x8xf32> -> vector<64x24xf32>
    %616 = arith.mulf %605, %615 : vector<64x24xf32>
    %617 = arith.addf %7, %616 : vector<64x24xf32>
    %618 = math.tanh %617 : vector<64x24xf32>
    %619 = vector.extract_strided_slice %618 {offsets = [0, 0], sizes = [8, 24], strides = [1, 1]} : vector<64x24xf32> to vector<8x24xf32>
    %620 = vector.extract_strided_slice %618 {offsets = [8, 0], sizes = [8, 24], strides = [1, 1]} : vector<64x24xf32> to vector<8x24xf32>
    %621 = vector.extract_strided_slice %618 {offsets = [16, 0], sizes = [8, 24], strides = [1, 1]} : vector<64x24xf32> to vector<8x24xf32>
    %622 = vector.extract_strided_slice %618 {offsets = [24, 0], sizes = [8, 24], strides = [1, 1]} : vector<64x24xf32> to vector<8x24xf32>
    %623 = vector.extract_strided_slice %618 {offsets = [32, 0], sizes = [8, 24], strides = [1, 1]} : vector<64x24xf32> to vector<8x24xf32>
    %624 = vector.extract_strided_slice %618 {offsets = [40, 0], sizes = [8, 24], strides = [1, 1]} : vector<64x24xf32> to vector<8x24xf32>
    %625 = vector.extract_strided_slice %618 {offsets = [48, 0], sizes = [8, 24], strides = [1, 1]} : vector<64x24xf32> to vector<8x24xf32>
    %626 = vector.extract_strided_slice %618 {offsets = [56, 0], sizes = [8, 24], strides = [1, 1]} : vector<64x24xf32> to vector<8x24xf32>
    %627 = arith.maximumf %619, %620 : vector<8x24xf32>
    %628 = arith.maximumf %621, %622 : vector<8x24xf32>
    %629 = arith.maximumf %623, %624 : vector<8x24xf32>
    %630 = arith.maximumf %625, %626 : vector<8x24xf32>
    %631 = arith.maximumf %627, %628 : vector<8x24xf32>
    %632 = arith.maximumf %629, %630 : vector<8x24xf32>
    %633 = arith.maximumf %631, %632 : vector<8x24xf32>
    %c0_117 = arith.constant 0 : index
    %c0_118 = arith.constant 0 : index
    %634 = vector.load %arg9[%c0_117, %c0_118] : memref<24x32xf32, #tpu.memory_space<vmem>>, vector<24x32xf32>
    %cst_119 = arith.constant dense<0.000000e+00> : vector<8x32xf32>
    %635 = tpu.matmul %633, %634, %cst_119 {dimension_numbers = #tpu.dot_dimension_numbers<[1], [0], [0], [1], [0, 0, 1, 1], [], []>} : vector<8x24xf32>, vector<24x32xf32>, vector<8x32xf32> -> vector<8x32xf32>
    %c0_120 = arith.constant 0 : index
    %c0_121 = arith.constant 0 : index
    %636 = vector.load %arg10[%c0_120, %c0_121] : memref<1x32xf32, #tpu.memory_space<vmem>>, vector<1x32xf32>
    %637 = vector.broadcast %636 : vector<1x32xf32> to vector<8x32xf32>
    %638 = arith.addf %635, %637 : vector<8x32xf32>
    %cst_122 = arith.constant 0.000000e+00 : f32
    %639 = vector.broadcast %cst_122 : f32 to vector<8x32xf32>
    %640 = arith.cmpf ogt, %638, %639 : vector<8x32xf32>
    %cst_123 = arith.constant 0.00999999977 : f32
    %641 = vector.broadcast %cst_123 : f32 to vector<8x32xf32>
    %642 = arith.mulf %641, %638 : vector<8x32xf32>
    %643 = arith.select %640, %638, %642 : vector<8x32xi1>, vector<8x32xf32>
    %c0_124 = arith.constant 0 : index
    %c0_125 = arith.constant 0 : index
    %644 = vector.load %arg11[%c0_124, %c0_125] : memref<32x1xf32, #tpu.memory_space<vmem>>, vector<32x1xf32>
    %cst_126 = arith.constant dense<0.000000e+00> : vector<8x1xf32>
    %645 = tpu.matmul %643, %644, %cst_126 {dimension_numbers = #tpu.dot_dimension_numbers<[1], [0], [0], [1], [0, 0, 1, 1], [], []>} : vector<8x32xf32>, vector<32x1xf32>, vector<8x1xf32> -> vector<8x1xf32>
    %c0_127 = arith.constant 0 : index
    %c0_128 = arith.constant 0 : index
    %646 = vector.load %arg12[%c0_127, %c0_128] : memref<1x1xf32, #tpu.memory_space<vmem>>, vector<1x1xf32>
    %647 = vector.broadcast %646 : vector<1x1xf32> to vector<8x1xf32>
    %648 = arith.addf %645, %647 : vector<8x1xf32>
    %c0_129 = arith.constant 0 : index
    %c0_130 = arith.constant 0 : index
    %649 = vector.load %arg13[%c0_129, %c0_130] : memref<8x1xf32, #tpu.memory_space<vmem>>, vector<8x1xf32>
    tpu.vector_store %arg13[%c0_129, %c0_130], %648 {strides = array<i32>} : memref<8x1xf32, #tpu.memory_space<vmem>>, vector<8x1xf32>,
    return
  }
}

</mosaic_0001>

<llo_original>
// kernel: gate_f_forward.1
$region0: #{gate_f_forward.1}
  #allocation0 [shape = 'u32[]', space=smem, size = 0x4, offset = 0x4, fixed_abs, tag = 'smem constant byte address 0x4 - core index']
  #allocation1 [shape = 'u32[144,128]{1,0:T(1,128)}', space=vmem, size = 0x12000, scoped, tag = 'internal scratch']
  #allocation2 [shape = 'f32[1,1]{1,0:T(1,128)S(1)}', space=vmem, size = 0x200, scoped, tag = 'scoped memory for gate_f_forward.1']
  %s0 = inlined_call_operand.vmem [shape: f32[64,48], index: 0, kind: input, shape index: {}]
  %s1 = inlined_call_operand.vmem [shape: s32[8,3], index: 1, kind: input, shape index: {}]
  %s2 = inlined_call_operand.vmem [shape: f32[48,168], index: 2, kind: input, shape index: {}]
  %s3 = inlined_call_operand.vmem [shape: f32[1,168], index: 3, kind: input, shape index: {}]
  %s4 = inlined_call_operand.vmem [shape: f32[48,144], index: 4, kind: input, shape index: {}]
  %s5 = inlined_call_operand.vmem [shape: f32[1,144], index: 5, kind: input, shape index: {}]
  %s6 = inlined_call_operand.vmem [shape: f32[48,9], index: 6, kind: input, shape index: {}]
  %s7 = inlined_call_operand.vmem [shape: f32[1,3], index: 7, kind: input, shape index: {}]
  %s8 = inlined_call_operand.vmem [shape: f32[48,24], index: 8, kind: input, shape index: {}]
  %s9 = inlined_call_operand.vmem [shape: f32[24,32], index: 9, kind: input, shape index: {}]
  %s10 = inlined_call_operand.vmem [shape: f32[1,32], index: 10, kind: input, shape index: {}]
  %s11 = inlined_call_operand.vmem [shape: f32[32,1], index: 11, kind: input, shape index: {}]
  %s12 = inlined_call_operand.<no memory space> [shape: f32[1,1], index: 12, kind: input, shape index: {}]
  %s13 = inlined_call_operand.vmem [shape: f32[8,1], index: 13, kind: output, shape index: {}]
  %s14 = sld [smem:[#allocation0]]
  $region62: #{gate_f_forward.1} parent=0
    _
  %s16 = ssub.s32 1, %s14
  %s17 = scalar_select 0, %s16, %s14
  %v18 = vstv %s12
  %19 = vst [vmem:[#allocation2] sm:$0x1] %v18
  // Predicated region
  $region2: #{gate_f_forward.1} parent=0 // pred_check
    _
  $region3: #{gate_f_forward.1} parent=0 // pred_check_branch
    %21 = sbr.rel (0) target = $region5
  $region4: #{gate_f_forward.1} parent=0 // pred_region
    _
  $region5: #{gate_f_forward.1} parent=0 // pred_fallthru
    _
  // Predicated region
  $region6: #{gate_f_forward.1} parent=0 // pred_check
    _
  $region7: #{gate_f_forward.1} parent=0 // pred_check_branch
    %23 = sbr.rel (0) target = $region9
  $region8: #{gate_f_forward.1} parent=0 // pred_region
    _
  $region9: #{gate_f_forward.1} parent=0 // pred_fallthru
    _
  // Predicated region
  $region10: #{gate_f_forward.1} parent=0 // pred_check
    _
  $region11: #{gate_f_forward.1} parent=0 // pred_check_branch
    %25 = sbr.rel (0) target = $region13
  $region12: #{gate_f_forward.1} parent=0 // pred_region
    _
  $region13: #{gate_f_forward.1} parent=0 // pred_fallthru
    _
  // Predicated region
  $region14: #{gate_f_forward.1} parent=0 // pred_check
    _
  $region15: #{gate_f_forward.1} parent=0 // pred_check_branch
    %27 = sbr.rel (0) target = $region17
  $region16: #{gate_f_forward.1} parent=0 // pred_region
    _
  $region17: #{gate_f_forward.1} parent=0 // pred_fallthru
    _
  // Predicated region
  $region18: #{gate_f_forward.1} parent=0 // pred_check
    _
  $region19: #{gate_f_forward.1} parent=0 // pred_check_branch
    %29 = sbr.rel (0) target = $region21
  $region20: #{gate_f_forward.1} parent=0 // pred_region
    _
  $region21: #{gate_f_forward.1} parent=0 // pred_fallthru
    _
  // Predicated region
  $region22: #{gate_f_forward.1} parent=0 // pred_check
    _
  $region23: #{gate_f_forward.1} parent=0 // pred_check_branch
    %31 = sbr.rel (0) target = $region25
  $region24: #{gate_f_forward.1} parent=0 // pred_region
    _
  $region25: #{gate_f_forward.1} parent=0 // pred_fallthru
    _
  // Predicated region
  $region26: #{gate_f_forward.1} parent=0 // pred_check
    _
  $region27: #{gate_f_forward.1} parent=0 // pred_check_branch
    %33 = sbr.rel (0) target = $region29
  $region28: #{gate_f_forward.1} parent=0 // pred_region
    _
  $region29: #{gate_f_forward.1} parent=0 // pred_fallthru
    _
  // Predicated region
  $region30: #{gate_f_forward.1} parent=0 // pred_check
    _
  $region31: #{gate_f_forward.1} parent=0 // pred_check_branch
    %35 = sbr.rel (0) target = $region33
  $region32: #{gate_f_forward.1} parent=0 // pred_region
    _
  $region33: #{gate_f_forward.1} parent=0 // pred_fallthru
    _
  // Predicated region
  $region34: #{gate_f_forward.1} parent=0 // pred_check
    _
  $region35: #{gate_f_forward.1} parent=0 // pred_check_branch
    %37 = sbr.rel (0) target = $region37
  $region36: #{gate_f_forward.1} parent=0 // pred_region
    _
  $region37: #{gate_f_forward.1} parent=0 // pred_fallthru
    _
  // Predicated region
  $region38: #{gate_f_forward.1} parent=0 // pred_check
    _
  $region39: #{gate_f_forward.1} parent=0 // pred_check_branch
    %39 = sbr.rel (0) target = $region41
  $region40: #{gate_f_forward.1} parent=0 // pred_region
    _
  $region41: #{gate_f_forward.1} parent=0 // pred_fallthru
    _
  // Predicated region
  $region42: #{gate_f_forward.1} parent=0 // pred_check
    _
  $region43: #{gate_f_forward.1} parent=0 // pred_check_branch
    %41 = sbr.rel (0) target = $region45
  $region44: #{gate_f_forward.1} parent=0 // pred_region
    _
  $region45: #{gate_f_forward.1} parent=0 // pred_fallthru
    _
  // Predicated region
  $region46: #{gate_f_forward.1} parent=0 // pred_check
    _
  $region47: #{gate_f_forward.1} parent=0 // pred_check_branch
    %43 = sbr.rel (0) target = $region49
  $region48: #{gate_f_forward.1} parent=0 // pred_region
    _
  $region49: #{gate_f_forward.1} parent=0 // pred_fallthru
    _
  // Predicated region
  $region50: #{gate_f_forward.1} parent=0 // pred_check
    _
  $region51: #{gate_f_forward.1} parent=0 // pred_check_branch
    %45 = sbr.rel (0) target = $region53
  $region52: #{gate_f_forward.1} parent=0 // pred_region
    _
  $region53: #{gate_f_forward.1} parent=0 // pred_fallthru
    _
  %v46 = vld [vmem:[%s0] sm:$0xff]
  %v47 = vld [vmem:[%s0 + $0x8] sm:$0xff]
  %v48 = vld [vmem:[%s0 + $0x10] sm:$0xff]
  %v49 = vld [vmem:[%s0 + $0x18] sm:$0xff]
  %v50 = vld [vmem:[%s0 + $0x20] sm:$0xff]
  %v51 = vld [vmem:[%s0 + $0x28] sm:$0xff]
  %v52 = vld [vmem:[%s0 + $0x30] sm:$0xff]
  %v53 = vld [vmem:[%s0 + $0x38] sm:$0xff]
  %v54 = vld [vmem:[%s2] sm:$0xff]
  %v55 = vld [vmem:[%s2 + $0x8] sm:$0xff]
  %v56 = vld [vmem:[%s2 + $0x10] sm:$0xff]
  %v57 = vld [vmem:[%s2 + $0x18] sm:$0xff]
  %v58 = vld [vmem:[%s2 + $0x20] sm:$0xff]
  %v59 = vld [vmem:[%s2 + $0x28] sm:$0xff]
  %v60 = vld [vmem:[%s2 + $0x30] sm:$0xff]
  %v61 = vld [vmem:[%s2 + $0x38] sm:$0xff]
  %v62 = vld [vmem:[%s2 + $0x40] sm:$0xff]
  %v63 = vld [vmem:[%s2 + $0x48] sm:$0xff]
  %v64 = vld [vmem:[%s2 + $0x50] sm:$0xff]
  %v65 = vld [vmem:[%s2 + $0x58] sm:$0xff]
  %v66 = vld [vmem:[%s3] sm:$0x3]
  %v68 = vlaneseq
  %v69 = vshrl.u32 %v68, 7
  %v70 = vsub.s32 0, %v69
  %v71 = vrot.slane %v66, %v70
  %v72 = vlaneseq
  %v73 = vshrl.u32 %v72, 7
  %v74 = vsub.s32 1, %v73
  %v75 = vrot.slane %v66, %v74
  %vm78 = vcmask 392192
  %v80 = vsel %vm78, %v46, 0
  %v83 = vsel %vm78, %v47, 0
  %v86 = vsel %vm78, %v48, 0
  %v89 = vsel %vm78, %v49, 0
  %v92 = vsel %vm78, %v50, 0
  %v95 = vsel %vm78, %v51, 0
  %v98 = vsel %vm78, %v52, 0
  %v101 = vsel %vm78, %v53, 0
  %103 = vmatprep.subr.mxu0 %v55
  %104 = vmatpush1.msra.mxu0 %v54
  %105 = vmatprep.subr.mxu0 %v57
  %106 = vmatpush1.msra.mxu0 %v56
  %107 = vmatprep.subr.mxu0 %v59
  %108 = vmatpush1.msra.mxu0 %v58
  %109 = vmatprep.subr.mxu0 %v61
  %110 = vmatpush1.msra.mxu0 %v60
  %111 = vmatprep.subr.mxu0 %v63
  %112 = vmatpush1.msra.mxu0 %v62
  %113 = vmatprep.subr.mxu0 %v65
  %114 = vmatpush1.msra.mxu0 %v64
  %115 = vmatprep.subr.mxu0 0.0
  %116 = vmatpush1.msra.mxu0 0.0
  %117 = vmatprep.subr.mxu0 0.0
  %118 = vmatpush1.msra.mxu0 0.0
  %119 = vmatprep.subr.mxu0 0.0
  %120 = vmatpush1.msra.mxu0 0.0
  %121 = vmatprep.subr.mxu0 0.0
  %122 = vmatpush1.msra.mxu0 0.0
  %123 = vmatprep.subr.mxu0 0.0
  %124 = vmatpush1.msra.mxu0 0.0
  %125 = vmatprep.subr.mxu0 0.0
  %126 = vmatpush1.msra.mxu0 0.0
  %127 = vmatprep.subr.mxu0 0.0
  %128 = vmatpush1.msra.mxu0 0.0
  %129 = vmatprep.subr.mxu0 0.0
  %130 = vmatpush1.msra.mxu0 0.0
  %131 = vmatprep.subr.mxu0 0.0
  %132 = vmatpush1.msra.mxu0 0.0
  %133 = vmatprep.subr.mxu0 0.0
  %134 = vmatpush1.msra.mxu0 0.0
  %135 = vmatprep.subr.mxu0 0.0
  %136 = vmatpush1.msra.mxu0 0.0
  %137 = vmatprep.subr.mxu0 0.0
  %138 = vmatpush1.msra.mxu0 0.0
  %139 = vmatprep.subr.mxu0 0.0
  %140 = vmatpush1.msra.mxu0 0.0
  %141 = vmatprep.subr.mxu0 0.0
  %142 = vmatpush1.msra.mxu0 0.0
  %143 = vmatprep.subr.mxu0 0.0
  %144 = vmatpush1.msra.mxu0 0.0
  %145 = vmatprep.subr.mxu0 0.0
  %146 = vmatpush1.msra.mxu0 0.0
  %147 = vmatprep.subr.mxu0 0.0
  %148 = vmatpush1.msra.mxu0 0.0
  %149 = vmatprep.subr.mxu0 0.0
  %150 = vmatpush1.msra.mxu0 0.0
  %151 = vmatprep.subr.mxu0 0.0
  %152 = vmatpush1.msra.mxu0 0.0
  %153 = vmatprep.subr.mxu0 0.0
  %154 = vmatpush1.msra.mxu0 0.0
  %155 = vmatprep.subr.mxu0 0.0
  %156 = vmatpush1.msra.mxu0 0.0
  %157 = vmatprep.subr.mxu0 0.0
  %158 = vmatpush1.msra.mxu0 0.0
  %159 = vmatprep.subr.mxu0 0.0
  %160 = vmatpush1.msra.mxu0 0.0
  %161 = vmatprep.subr.mxu0 0.0
  %162 = vmatpush1.msra.mxu0 0.0
  %163 = vmatprep.subr.mxu0 0.0
  %164 = vmatpush1.msra.mxu0 0.0
  %165 = vmatprep.subr.mxu0 0.0
  %166 = vmatpush1.msra.mxu0 0.0
  %167 = vmatprep.mubr.f32.mxu0 0.0
  %168 = vmatmul.mubr.f32.gmra.mrb[0].mxu0 %v80
  %v169 = vpop.f32.mrb[0].mxu0
  %v170 = vadd.f32 %v71, %v169
  %v171 = vpop.f32.mrb[0].mxu0
  %v172 = vadd.f32 %v75, %v171
  %173 = vmatprep.mubr.f32.mxu0 0.0
  %174 = vmatmul.mubr.f32.gmra.mrb[0].mxu0 %v83
  %v175 = vpop.f32.mrb[0].mxu0
  %v176 = vadd.f32 %v71, %v175
  %v177 = vpop.f32.mrb[0].mxu0
  %v178 = vadd.f32 %v75, %v177
  %179 = vmatprep.mubr.f32.mxu0 0.0
  %180 = vmatmul.mubr.f32.gmra.mrb[0].mxu0 %v86
  %v181 = vpop.f32.mrb[0].mxu0
  %v182 = vadd.f32 %v71, %v181
  %v183 = vpop.f32.mrb[0].mxu0
  %v184 = vadd.f32 %v75, %v183
  %185 = vmatprep.mubr.f32.mxu0 0.0
  %186 = vmatmul.mubr.f32.gmra.mrb[0].mxu0 %v89
  %v187 = vpop.f32.mrb[0].mxu0
  %v188 = vadd.f32 %v71, %v187
  %v189 = vpop.f32.mrb[0].mxu0
  %v190 = vadd.f32 %v75, %v189
  %191 = vmatprep.mubr.f32.mxu0 0.0
  %192 = vmatmul.mubr.f32.gmra.mrb[0].mxu0 %v92
  %v193 = vpop.f32.mrb[0].mxu0
  %v194 = vadd.f32 %v71, %v193
  %v195 = vpop.f32.mrb[0].mxu0
  %v196 = vadd.f32 %v75, %v195
  %197 = vmatprep.mubr.f32.mxu0 0.0
  %198 = vmatmul.mubr.f32.gmra.mrb[0].mxu0 %v95
  %v199 = vpop.f32.mrb[0].mxu0
  %v200 = vadd.f32 %v71, %v199
  %v201 = vpop.f32.mrb[0].mxu0
  %v202 = vadd.f32 %v75, %v201
  %203 = vmatprep.mubr.f32.mxu0 0.0
  %204 = vmatmul.mubr.f32.gmra.mrb[0].mxu0 %v98
  %v205 = vpop.f32.mrb[0].mxu0
  %v206 = vadd.f32 %v71, %v205
  %v207 = vpop.f32.mrb[0].mxu0
  %v208 = vadd.f32 %v75, %v207
  %209 = vmatprep.mubr.f32.mxu0 0.0
  %210 = vmatmul.mubr.f32.gmra.mrb[0].mxu0 %v101
  %v211 = vpop.f32.mrb[0].mxu0
  %v212 = vadd.f32 %v71, %v211
  %v213 = vpop.f32.mrb[0].mxu0
  %v214 = vadd.f32 %v75, %v213
  %215 = vdwg.mxu0
  %v216 = vld [vmem:[%s1] sm:$0xff]
  %217 = vset.pattern.permute.xlu0 0
  %218 = vperm.xlu0 %217, %v216
  %v219 = vpop.permute.xlu0 %218
  %220 = vset.pattern.permute.xlu0 1
  %221 = vperm.xlu0 %220, %v216
  %v222 = vpop.permute.xlu0 %221
  %223 = vset.pattern.permute.xlu0 2
  %224 = vperm.xlu0 %223, %v216
  %v225 = vpop.permute.xlu0 %224
  %vm226 = vcmask 64512
  %v227 = vsel %vm226, %v219, %v222
  %vm228 = vcmask 130048
  %v229 = vsel %vm228, %v227, %v225
  %v230 = vld [vmem:[%s5] sm:$0x3]
  %v232 = vlaneseq
  %v233 = vshrl.u32 %v232, 7
  %v234 = vsub.s32 0, %v233
  %v235 = vrot.slane %v230, %v234
  %v236 = vlaneseq
  %v237 = vshrl.u32 %v236, 7
  %v238 = vsub.s32 1, %v237
  %v239 = vrot.slane %v230, %v238
  %v242 = vld [vmem:[%s4] sm:$0xff]
  %v243 = vld [vmem:[%s4 + $0x8] sm:$0xff]
  %v244 = vld [vmem:[%s4 + $0x10] sm:$0xff]
  %v245 = vld [vmem:[%s4 + $0x18] sm:$0xff]
  %v246 = vld [vmem:[%s4 + $0x20] sm:$0xff]
  %v247 = vld [vmem:[%s4 + $0x28] sm:$0xff]
  %v248 = vld [vmem:[%s4 + $0x30] sm:$0xff]
  %v249 = vld [vmem:[%s4 + $0x38] sm:$0xff]
  %v250 = vld [vmem:[%s4 + $0x40] sm:$0xff]
  %v251 = vld [vmem:[%s4 + $0x48] sm:$0xff]
  %v252 = vld [vmem:[%s4 + $0x50] sm:$0xff]
  %v253 = vld [vmem:[%s4 + $0x58] sm:$0xff]
  %v255 = vsel %vm78, 0.0, 0
  %257 = vmatprep.subr.mxu0 %v243
  %258 = vmatpush1.msra.mxu0 %v242
  %259 = vmatprep.subr.mxu0 %v245
  %260 = vmatpush1.msra.mxu0 %v244
  %261 = vmatprep.subr.mxu0 %v247
  %262 = vmatpush1.msra.mxu0 %v246
  %263 = vmatprep.subr.mxu0 %v249
  %264 = vmatpush1.msra.mxu0 %v248
  %265 = vmatprep.subr.mxu0 %v251
  %266 = vmatpush1.msra.mxu0 %v250
  %267 = vmatprep.subr.mxu0 %v253
  %268 = vmatpush1.msra.mxu0 %v252
  %269 = vmatprep.subr.mxu0 0.0
  %270 = vmatpush1.msra.mxu0 0.0
  %271 = vmatprep.subr.mxu0 0.0
  %272 = vmatpush1.msra.mxu0 0.0
  %273 = vmatprep.subr.mxu0 0.0
  %274 = vmatpush1.msra.mxu0 0.0
  %275 = vmatprep.subr.mxu0 0.0
  %276 = vmatpush1.msra.mxu0 0.0
  %277 = vmatprep.subr.mxu0 0.0
  %278 = vmatpush1.msra.mxu0 0.0
  %279 = vmatprep.subr.mxu0 0.0
  %280 = vmatpush1.msra.mxu0 0.0
  %281 = vmatprep.subr.mxu0 0.0
  %282 = vmatpush1.msra.mxu0 0.0
  %283 = vmatprep.subr.mxu0 0.0
  %284 = vmatpush1.msra.mxu0 0.0
  %285 = vmatprep.subr.mxu0 0.0
  %286 = vmatpush1.msra.mxu0 0.0
  %287 = vmatprep.subr.mxu0 0.0
  %288 = vmatpush1.msra.mxu0 0.0
  %289 = vmatprep.subr.mxu0 0.0
  %290 = vmatpush1.msra.mxu0 0.0
  %291 = vmatprep.subr.mxu0 0.0
  %292 = vmatpush1.msra.mxu0 0.0
  %293 = vmatprep.subr.mxu0 0.0
  %294 = vmatpush1.msra.mxu0 0.0
  %295 = vmatprep.subr.mxu0 0.0
  %296 = vmatpush1.msra.mxu0 0.0
  %297 = vmatprep.subr.mxu0 0.0
  %298 = vmatpush1.msra.mxu0 0.0
  %299 = vmatprep.subr.mxu0 0.0
  %300 = vmatpush1.msra.mxu0 0.0
  %301 = vmatprep.subr.mxu0 0.0
  %302 = vmatpush1.msra.mxu0 0.0
  %303 = vmatprep.subr.mxu0 0.0
  %304 = vmatpush1.msra.mxu0 0.0
  %305 = vmatprep.subr.mxu0 0.0
  %306 = vmatpush1.msra.mxu0 0.0
  %307 = vmatprep.subr.mxu0 0.0
  %308 = vmatpush1.msra.mxu0 0.0
  %309 = vmatprep.subr.mxu0 0.0
  %310 = vmatpush1.msra.mxu0 0.0
  %311 = vmatprep.subr.mxu0 0.0
  %312 = vmatpush1.msra.mxu0 0.0
  %313 = vmatprep.subr.mxu0 0.0
  %314 = vmatpush1.msra.mxu0 0.0
  %315 = vmatprep.subr.mxu0 0.0
  %316 = vmatpush1.msra.mxu0 0.0
  %317 = vmatprep.subr.mxu0 0.0
  %318 = vmatpush1.msra.mxu0 0.0
  %319 = vmatprep.subr.mxu0 0.0
  %320 = vmatpush1.msra.mxu0 0.0
  %321 = vmatprep.mubr.f32.mxu0 0.0
  %322 = vmatmul.mubr.f32.gmra.mrb[0].mxu0 %v255
  %v323 = vpop.f32.mrb[0].mxu0
  %v324 = vadd.f32 %v235, %v323
  %v325 = vpop.f32.mrb[0].mxu0
  %v326 = vadd.f32 %v239, %v325
  %327 = vdwg.mxu0
  %v328 = vadd.f32 %v170, %v324
  %v329 = vxor.u32 %v328, 2147483648
  %v330 = vmul.f32 %v329, 1.442695
  %v331 = vpow.pop %v330
  %v332 = vadd.f32 %v331, 1.0
  %v333 = vrcp.pop %v332
  %v334 = vmul.f32 1.0, %v333
  %336 = vrot.lane.b32.xlu0 %v324, 80
  %v337 = vpop.permute.xlu0 %336
  %v339 = vmul.f32 %v334, %v337
  %341 = vrot.lane.b32.xlu0 %v339, 48
  %v342 = vpop.permute.xlu0 %341
  %v344 = vadd.f32 %v170, %v342
  %v345 = vtanh.pop %v344
  %v346 = vsub.f32 1.0, %v334
  %348 = vrot.lane.b32.xlu0 %v345, 104
  %v349 = vpop.permute.xlu0 %348
  %v351 = vmul.f32 %v346, %v349
  %v352 = vmul.f32 %v334, 0.0
  %v353 = vadd.f32 %v351, %v352
  %v354 = vadd.f32 %v212, %v324
  %v355 = vxor.u32 %v354, 2147483648
  %v356 = vmul.f32 %v355, 1.442695
  %v357 = vpow.pop %v356
  %v358 = vadd.f32 %v357, 1.0
  %v359 = vrcp.pop %v358
  %v360 = vmul.f32 1.0, %v359
  %362 = vrot.lane.b32.xlu0 %v326, 80
  %v363 = vpop.permute.xlu0 %362
  %vm364 = vcmask 654336
  %v365 = vsel %vm364, %v337, %v363
  %v367 = vmul.f32 %v360, %v365
  %369 = vrot.lane.b32.xlu0 %v367, 48
  %v370 = vpop.permute.xlu0 %369
  %v372 = vadd.f32 %v212, %v370
  %v373 = vadd.f32 %v214, %v370
  %v374 = vtanh.pop %v372
  %v375 = vtanh.pop %v373
  %v376 = vsub.f32 1.0, %v360
  %379 = vrot.lane.b32.xlu0 %v374, 104
  %v380 = vpop.permute.xlu0 %379
  %381 = vrot.lane.b32.xlu0 %v375, 104
  %v382 = vpop.permute.xlu0 %381
  %vm383 = vcmask 850944
  %v384 = vsel %vm383, %v380, %v382
  %v386 = vmul.f32 %v376, %v384
  %v387 = vmul.f32 %v360, 0.0
  %v388 = vadd.f32 %v386, %v387
  %vm389 = vcmp.gt.s32.totalorder %v229, 0
  %vm390 = vcmp.gt.s32.totalorder %v229, 7
  %392 = vrot.lane.b32.xlu0 %v353, 104
  %v393 = vpop.permute.xlu0 %392
  %v395 = vsel %vm389, %v393, 0.0
  %397 = vrot.lane.b32.xlu0 %v388, 32
  %v398 = vpop.permute.xlu0 %397
  %v400 = vsel %vm390, %v398, 0.0
  %402 = vrot.lane.b32.xlu0 %v400, 24
  %v403 = vpop.permute.xlu0 %402
  %vm405 = vcmask 195584
  %v406 = vsel %vm405, %v395, %v403
  %v408 = vsel %vm78, %v406, 0
  %410 = vmatprep.subr.mxu0 %v243
  %411 = vmatpush1.msra.mxu0 %v242
  %412 = vmatprep.subr.mxu0 %v245
  %413 = vmatpush1.msra.mxu0 %v244
  %414 = vmatprep.subr.mxu0 %v247
  %415 = vmatpush1.msra.mxu0 %v246
  %416 = vmatprep.subr.mxu0 %v249
  %417 = vmatpush1.msra.mxu0 %v248
  %418 = vmatprep.subr.mxu0 %v251
  %419 = vmatpush1.msra.mxu0 %v250
  %420 = vmatprep.subr.mxu0 %v253
  %421 = vmatpush1.msra.mxu0 %v252
  %422 = vmatprep.subr.mxu0 0.0
  %423 = vmatpush1.msra.mxu0 0.0
  %424 = vmatprep.subr.mxu0 0.0
  %425 = vmatpush1.msra.mxu0 0.0
  %426 = vmatprep.subr.mxu0 0.0
  %427 = vmatpush1.msra.mxu0 0.0
  %428 = vmatprep.subr.mxu0 0.0
  %429 = vmatpush1.msra.mxu0 0.0
  %430 = vmatprep.subr.mxu0 0.0
  %431 = vmatpush1.msra.mxu0 0.0
  %432 = vmatprep.subr.mxu0 0.0
  %433 = vmatpush1.msra.mxu0 0.0
  %434 = vmatprep.subr.mxu0 0.0
  %435 = vmatpush1.msra.mxu0 0.0
  %436 = vmatprep.subr.mxu0 0.0
  %437 = vmatpush1.msra.mxu0 0.0
  %438 = vmatprep.subr.mxu0 0.0
  %439 = vmatpush1.msra.mxu0 0.0
  %440 = vmatprep.subr.mxu0 0.0
  %441 = vmatpush1.msra.mxu0 0.0
  %442 = vmatprep.subr.mxu0 0.0
  %443 = vmatpush1.msra.mxu0 0.0
  %444 = vmatprep.subr.mxu0 0.0
  %445 = vmatpush1.msra.mxu0 0.0
  %446 = vmatprep.subr.mxu0 0.0
  %447 = vmatpush1.msra.mxu0 0.0
  %448 = vmatprep.subr.mxu0 0.0
  %449 = vmatpush1.msra.mxu0 0.0
  %450 = vmatprep.subr.mxu0 0.0
  %451 = vmatpush1.msra.mxu0 0.0
  %452 = vmatprep.subr.mxu0 0.0
  %453 = vmatpush1.msra.mxu0 0.0
  %454 = vmatprep.subr.mxu0 0.0
  %455 = vmatpush1.msra.mxu0 0.0
  %456 = vmatprep.subr.mxu0 0.0
  %457 = vmatpush1.msra.mxu0 0.0
  %458 = vmatprep.subr.mxu0 0.0
  %459 = vmatpush1.msra.mxu0 0.0
  %460 = vmatprep.subr.mxu0 0.0
  %461 = vmatpush1.msra.mxu0 0.0
  %462 = vmatprep.subr.mxu0 0.0
  %463 = vmatpush1.msra.mxu0 0.0
  %464 = vmatprep.subr.mxu0 0.0
  %465 = vmatpush1.msra.mxu0 0.0
  %466 = vmatprep.subr.mxu0 0.0
  %467 = vmatpush1.msra.mxu0 0.0
  %468 = vmatprep.subr.mxu0 0.0
  %469 = vmatpush1.msra.mxu0 0.0
  %470 = vmatprep.subr.mxu0 0.0
  %471 = vmatpush1.msra.mxu0 0.0
  %472 = vmatprep.subr.mxu0 0.0
  %473 = vmatpush1.msra.mxu0 0.0
  %474 = vmatprep.mubr.f32.mxu0 0.0
  %475 = vmatmul.mubr.f32.gmra.mrb[0].mxu0 %v408
  %v476 = vpop.f32.mrb[0].mxu0
  %v477 = vadd.f32 %v235, %v476
  %v478 = vpop.f32.mrb[0].mxu0
  %v479 = vadd.f32 %v239, %v478
  %480 = vdwg.mxu0
  %v481 = vadd.f32 %v176, %v477
  %v482 = vxor.u32 %v481, 2147483648
  %v483 = vmul.f32 %v482, 1.442695
  %v484 = vpow.pop %v483
  %v485 = vadd.f32 %v484, 1.0
  %v486 = vrcp.pop %v485
  %v487 = vmul.f32 1.0, %v486
  %489 = vrot.lane.b32.xlu0 %v477, 80
  %v490 = vpop.permute.xlu0 %489
  %v492 = vmul.f32 %v487, %v490
  %494 = vrot.lane.b32.xlu0 %v492, 48
  %v495 = vpop.permute.xlu0 %494
  %v497 = vadd.f32 %v176, %v495
  %v498 = vtanh.pop %v497
  %v499 = vsub.f32 1.0, %v487
  %501 = vrot.lane.b32.xlu0 %v498, 104
  %v502 = vpop.permute.xlu0 %501
  %v504 = vmul.f32 %v499, %v502
  %506 = vrot.lane.b32.xlu0 %v395, 24
  %v507 = vpop.permute.xlu0 %506
  %v509 = vmul.f32 %v487, %v507
  %v510 = vadd.f32 %v504, %v509
  %v511 = vadd.f32 %v206, %v477
  %v512 = vxor.u32 %v511, 2147483648
  %v513 = vmul.f32 %v512, 1.442695
  %v514 = vpow.pop %v513
  %v515 = vadd.f32 %v514, 1.0
  %v516 = vrcp.pop %v515
  %v517 = vmul.f32 1.0, %v516
  %519 = vrot.lane.b32.xlu0 %v479, 80
  %v520 = vpop.permute.xlu0 %519
  %v521 = vsel %vm364, %v490, %v520
  %v523 = vmul.f32 %v517, %v521
  %525 = vrot.lane.b32.xlu0 %v523, 48
  %v526 = vpop.permute.xlu0 %525
  %v528 = vadd.f32 %v206, %v526
  %v529 = vadd.f32 %v208, %v526
  %v530 = vtanh.pop %v528
  %v531 = vtanh.pop %v529
  %v532 = vsub.f32 1.0, %v517
  %535 = vrot.lane.b32.xlu0 %v530, 104
  %v536 = vpop.permute.xlu0 %535
  %537 = vrot.lane.b32.xlu0 %v531, 104
  %v538 = vpop.permute.xlu0 %537
  %v539 = vsel %vm383, %v536, %v538
  %v541 = vmul.f32 %v532, %v539
  %542 = vrot.lane.b32.xlu0 %v400, 96
  %v543 = vpop.permute.xlu0 %542
  %v545 = vmul.f32 %v517, %v543
  %v546 = vadd.f32 %v541, %v545
  %vm547 = vcmp.gt.s32.totalorder %v229, 1
  %vm548 = vcmp.gt.s32.totalorder %v229, 6
  %550 = vrot.lane.b32.xlu0 %v510, 104
  %v551 = vpop.permute.xlu0 %550
  %v553 = vsel %vm547, %v551, %v395
  %555 = vrot.lane.b32.xlu0 %v546, 32
  %v556 = vpop.permute.xlu0 %555
  %v558 = vsel %vm548, %v556, %v400
  %v559 = vsel %vm547, %v551, 0.0
  %v560 = vsel %vm548, %v556, 0.0
  %562 = vrot.lane.b32.xlu0 %v558, 24
  %v563 = vpop.permute.xlu0 %562
  %v565 = vsel %vm405, %v553, %v563
  %v567 = vsel %vm78, %v565, 0
  %569 = vmatprep.subr.mxu0 %v243
  %570 = vmatpush1.msra.mxu0 %v242
  %571 = vmatprep.subr.mxu0 %v245
  %572 = vmatpush1.msra.mxu0 %v244
  %573 = vmatprep.subr.mxu0 %v247
  %574 = vmatpush1.msra.mxu0 %v246
  %575 = vmatprep.subr.mxu0 %v249
  %576 = vmatpush1.msra.mxu0 %v248
  %577 = vmatprep.subr.mxu0 %v251
  %578 = vmatpush1.msra.mxu0 %v250
  %579 = vmatprep.subr.mxu0 %v253
  %580 = vmatpush1.msra.mxu0 %v252
  %581 = vmatprep.subr.mxu0 0.0
  %582 = vmatpush1.msra.mxu0 0.0
  %583 = vmatprep.subr.mxu0 0.0
  %584 = vmatpush1.msra.mxu0 0.0
  %585 = vmatprep.subr.mxu0 0.0
  %586 = vmatpush1.msra.mxu0 0.0
  %587 = vmatprep.subr.mxu0 0.0
  %588 = vmatpush1.msra.mxu0 0.0
  %589 = vmatprep.subr.mxu0 0.0
  %590 = vmatpush1.msra.mxu0 0.0
  %591 = vmatprep.subr.mxu0 0.0
  %592 = vmatpush1.msra.mxu0 0.0
  %593 = vmatprep.subr.mxu0 0.0
  %594 = vmatpush1.msra.mxu0 0.0
  %595 = vmatprep.subr.mxu0 0.0
  %596 = vmatpush1.msra.mxu0 0.0
  %597 = vmatprep.subr.mxu0 0.0
  %598 = vmatpush1.msra.mxu0 0.0
  %599 = vmatprep.subr.mxu0 0.0
  %600 = vmatpush1.msra.mxu0 0.0
  %601 = vmatprep.subr.mxu0 0.0
  %602 = vmatpush1.msra.mxu0 0.0
  %603 = vmatprep.subr.mxu0 0.0
  %604 = vmatpush1.msra.mxu0 0.0
  %605 = vmatprep.subr.mxu0 0.0
  %606 = vmatpush1.msra.mxu0 0.0
  %607 = vmatprep.subr.mxu0 0.0
  %608 = vmatpush1.msra.mxu0 0.0
  %609 = vmatprep.subr.mxu0 0.0
  %610 = vmatpush1.msra.mxu0 0.0
  %611 = vmatprep.subr.mxu0 0.0
  %612 = vmatpush1.msra.mxu0 0.0
  %613 = vmatprep.subr.mxu0 0.0
  %614 = vmatpush1.msra.mxu0 0.0
  %615 = vmatprep.subr.mxu0 0.0
  %616 = vmatpush1.msra.mxu0 0.0
  %617 = vmatprep.subr.mxu0 0.0
  %618 = vmatpush1.msra.mxu0 0.0
  %619 = vmatprep.subr.mxu0 0.0
  %620 = vmatpush1.msra.mxu0 0.0
  %621 = vmatprep.subr.mxu0 0.0
  %622 = vmatpush1.msra.mxu0 0.0
  %623 = vmatprep.subr.mxu0 0.0
  %624 = vmatpush1.msra.mxu0 0.0
  %625 = vmatprep.subr.mxu0 0.0
  %626 = vmatpush1.msra.mxu0 0.0
  %627 = vmatprep.subr.mxu0 0.0
  %628 = vmatpush1.msra.mxu0 0.0
  %629 = vmatprep.subr.mxu0 0.0
  %630 = vmatpush1.msra.mxu0 0.0
  %631 = vmatprep.subr.mxu0 0.0
  %632 = vmatpush1.msra.mxu0 0.0
  %633 = vmatprep.mubr.f32.mxu0 0.0
  %634 = vmatmul.mubr.f32.gmra.mrb[0].mxu0 %v567
  %v635 = vpop.f32.mrb[0].mxu0
  %v636 = vadd.f32 %v235, %v635
  %v637 = vpop.f32.mrb[0].mxu0
  %v638 = vadd.f32 %v239, %v637
  %639 = vdwg.mxu0
  %v640 = vadd.f32 %v182, %v636
  %v641 = vxor.u32 %v640, 2147483648
  %v642 = vmul.f32 %v641, 1.442695
  %v643 = vpow.pop %v642
  %v644 = vadd.f32 %v643, 1.0
  %v645 = vrcp.pop %v644
  %v646 = vmul.f32 1.0, %v645
  %648 = vrot.lane.b32.xlu0 %v636, 80
  %v649 = vpop.permute.xlu0 %648
  %v651 = vmul.f32 %v646, %v649
  %653 = vrot.lane.b32.xlu0 %v651, 48
  %v654 = vpop.permute.xlu0 %653
  %v656 = vadd.f32 %v182, %v654
  %v657 = vtanh.pop %v656
  %v658 = vsub.f32 1.0, %v646
  %660 = vrot.lane.b32.xlu0 %v657, 104
  %v661 = vpop.permute.xlu0 %660
  %v663 = vmul.f32 %v658, %v661
  %665 = vrot.lane.b32.xlu0 %v553, 24
  %v666 = vpop.permute.xlu0 %665
  %v668 = vmul.f32 %v646, %v666
  %v669 = vadd.f32 %v663, %v668
  %v670 = vadd.f32 %v200, %v636
  %v671 = vxor.u32 %v670, 2147483648
  %v672 = vmul.f32 %v671, 1.442695
  %v673 = vpow.pop %v672
  %v674 = vadd.f32 %v673, 1.0
  %v675 = vrcp.pop %v674
  %v676 = vmul.f32 1.0, %v675
  %678 = vrot.lane.b32.xlu0 %v638, 80
  %v679 = vpop.permute.xlu0 %678
  %v680 = vsel %vm364, %v649, %v679
  %v682 = vmul.f32 %v676, %v680
  %684 = vrot.lane.b32.xlu0 %v682, 48
  %v685 = vpop.permute.xlu0 %684
  %v687 = vadd.f32 %v200, %v685
  %v688 = vadd.f32 %v202, %v685
  %v689 = vtanh.pop %v687
  %v690 = vtanh.pop %v688
  %v691 = vsub.f32 1.0, %v676
  %694 = vrot.lane.b32.xlu0 %v689, 104
  %v695 = vpop.permute.xlu0 %694
  %696 = vrot.lane.b32.xlu0 %v690, 104
  %v697 = vpop.permute.xlu0 %696
  %v698 = vsel %vm383, %v695, %v697
  %v700 = vmul.f32 %v691, %v698
  %701 = vrot.lane.b32.xlu0 %v558, 96
  %v702 = vpop.permute.xlu0 %701
  %v704 = vmul.f32 %v676, %v702
  %v705 = vadd.f32 %v700, %v704
  %vm706 = vcmp.gt.s32.totalorder %v229, 2
  %vm707 = vcmp.gt.s32.totalorder %v229, 5
  %709 = vrot.lane.b32.xlu0 %v669, 104
  %v710 = vpop.permute.xlu0 %709
  %v712 = vsel %vm706, %v710, %v553
  %714 = vrot.lane.b32.xlu0 %v705, 32
  %v715 = vpop.permute.xlu0 %714
  %v717 = vsel %vm707, %v715, %v558
  %v718 = vsel %vm706, %v710, 0.0
  %v719 = vsel %vm707, %v715, 0.0
  %721 = vrot.lane.b32.xlu0 %v717, 24
  %v722 = vpop.permute.xlu0 %721
  %v724 = vsel %vm405, %v712, %v722
  %v726 = vsel %vm78, %v724, 0
  %728 = vmatprep.subr.mxu0 %v243
  %729 = vmatpush1.msra.mxu0 %v242
  %730 = vmatprep.subr.mxu0 %v245
  %731 = vmatpush1.msra.mxu0 %v244
  %732 = vmatprep.subr.mxu0 %v247
  %733 = vmatpush1.msra.mxu0 %v246
  %734 = vmatprep.subr.mxu0 %v249
  %735 = vmatpush1.msra.mxu0 %v248
  %736 = vmatprep.subr.mxu0 %v251
  %737 = vmatpush1.msra.mxu0 %v250
  %738 = vmatprep.subr.mxu0 %v253
  %739 = vmatpush1.msra.mxu0 %v252
  %740 = vmatprep.subr.mxu0 0.0
  %741 = vmatpush1.msra.mxu0 0.0
  %742 = vmatprep.subr.mxu0 0.0
  %743 = vmatpush1.msra.mxu0 0.0
  %744 = vmatprep.subr.mxu0 0.0
  %745 = vmatpush1.msra.mxu0 0.0
  %746 = vmatprep.subr.mxu0 0.0
  %747 = vmatpush1.msra.mxu0 0.0
  %748 = vmatprep.subr.mxu0 0.0
  %749 = vmatpush1.msra.mxu0 0.0
  %750 = vmatprep.subr.mxu0 0.0
  %751 = vmatpush1.msra.mxu0 0.0
  %752 = vmatprep.subr.mxu0 0.0
  %753 = vmatpush1.msra.mxu0 0.0
  %754 = vmatprep.subr.mxu0 0.0
  %755 = vmatpush1.msra.mxu0 0.0
  %756 = vmatprep.subr.mxu0 0.0
  %757 = vmatpush1.msra.mxu0 0.0
  %758 = vmatprep.subr.mxu0 0.0
  %759 = vmatpush1.msra.mxu0 0.0
  %760 = vmatprep.subr.mxu0 0.0
  %761 = vmatpush1.msra.mxu0 0.0
  %762 = vmatprep.subr.mxu0 0.0
  %763 = vmatpush1.msra.mxu0 0.0
  %764 = vmatprep.subr.mxu0 0.0
  %765 = vmatpush1.msra.mxu0 0.0
  %766 = vmatprep.subr.mxu0 0.0
  %767 = vmatpush1.msra.mxu0 0.0
  %768 = vmatprep.subr.mxu0 0.0
  %769 = vmatpush1.msra.mxu0 0.0
  %770 = vmatprep.subr.mxu0 0.0
  %771 = vmatpush1.msra.mxu0 0.0
  %772 = vmatprep.subr.mxu0 0.0
  %773 = vmatpush1.msra.mxu0 0.0
  %774 = vmatprep.subr.mxu0 0.0
  %775 = vmatpush1.msra.mxu0 0.0
  %776 = vmatprep.subr.mxu0 0.0
  %777 = vmatpush1.msra.mxu0 0.0
  %778 = vmatprep.subr.mxu0 0.0
  %779 = vmatpush1.msra.mxu0 0.0
  %780 = vmatprep.subr.mxu0 0.0
  %781 = vmatpush1.msra.mxu0 0.0
  %782 = vmatprep.subr.mxu0 0.0
  %783 = vmatpush1.msra.mxu0 0.0
  %784 = vmatprep.subr.mxu0 0.0
  %785 = vmatpush1.msra.mxu0 0.0
  %786 = vmatprep.subr.mxu0 0.0
  %787 = vmatpush1.msra.mxu0 0.0
  %788 = vmatprep.subr.mxu0 0.0
  %789 = vmatpush1.msra.mxu0 0.0
  %790 = vmatprep.subr.mxu0 0.0
  %791 = vmatpush1.msra.mxu0 0.0
  %792 = vmatprep.mubr.f32.mxu0 0.0
  %793 = vmatmul.mubr.f32.gmra.mrb[0].mxu0 %v726
  %v794 = vpop.f32.mrb[0].mxu0
  %v795 = vadd.f32 %v235, %v794
  %v796 = vpop.f32.mrb[0].mxu0
  %v797 = vadd.f32 %v239, %v796
  %798 = vdwg.mxu0
  %v799 = vadd.f32 %v188, %v795
  %v800 = vxor.u32 %v799, 2147483648
  %v801 = vmul.f32 %v800, 1.442695
  %v802 = vpow.pop %v801
  %v803 = vadd.f32 %v802, 1.0
  %v804 = vrcp.pop %v803
  %v805 = vmul.f32 1.0, %v804
  %807 = vrot.lane.b32.xlu0 %v795, 80
  %v808 = vpop.permute.xlu0 %807
  %v810 = vmul.f32 %v805, %v808
  %812 = vrot.lane.b32.xlu0 %v810, 48
  %v813 = vpop.permute.xlu0 %812
  %v815 = vadd.f32 %v188, %v813
  %v816 = vtanh.pop %v815
  %v817 = vsub.f32 1.0, %v805
  %819 = vrot.lane.b32.xlu0 %v816, 104
  %v820 = vpop.permute.xlu0 %819
  %v822 = vmul.f32 %v817, %v820
  %824 = vrot.lane.b32.xlu0 %v712, 24
  %v825 = vpop.permute.xlu0 %824
  %v827 = vmul.f32 %v805, %v825
  %v828 = vadd.f32 %v822, %v827
  %v829 = vadd.f32 %v194, %v795
  %v830 = vxor.u32 %v829, 2147483648
  %v831 = vmul.f32 %v830, 1.442695
  %v832 = vpow.pop %v831
  %v833 = vadd.f32 %v832, 1.0
  %v834 = vrcp.pop %v833
  %v835 = vmul.f32 1.0, %v834
  %837 = vrot.lane.b32.xlu0 %v797, 80
  %v838 = vpop.permute.xlu0 %837
  %v839 = vsel %vm364, %v808, %v838
  %v841 = vmul.f32 %v835, %v839
  %843 = vrot.lane.b32.xlu0 %v841, 48
  %v844 = vpop.permute.xlu0 %843
  %v846 = vadd.f32 %v194, %v844
  %v847 = vadd.f32 %v196, %v844
  %v848 = vtanh.pop %v846
  %v849 = vtanh.pop %v847
  %v850 = vsub.f32 1.0, %v835
  %853 = vrot.lane.b32.xlu0 %v848, 104
  %v854 = vpop.permute.xlu0 %853
  %855 = vrot.lane.b32.xlu0 %v849, 104
  %v856 = vpop.permute.xlu0 %855
  %v857 = vsel %vm383, %v854, %v856
  %v859 = vmul.f32 %v850, %v857
  %860 = vrot.lane.b32.xlu0 %v717, 96
  %v861 = vpop.permute.xlu0 %860
  %v863 = vmul.f32 %v835, %v861
  %v864 = vadd.f32 %v859, %v863
  %vm865 = vcmp.gt.s32.totalorder %v229, 3
  %vm866 = vcmp.gt.s32.totalorder %v229, 4
  %868 = vrot.lane.b32.xlu0 %v828, 104
  %v869 = vpop.permute.xlu0 %868
  %v871 = vsel %vm865, %v869, %v712
  %873 = vrot.lane.b32.xlu0 %v864, 32
  %v874 = vpop.permute.xlu0 %873
  %v876 = vsel %vm866, %v874, %v717
  %v877 = vsel %vm865, %v869, 0.0
  %v878 = vsel %vm866, %v874, 0.0
  %880 = vrot.lane.b32.xlu0 %v876, 24
  %v881 = vpop.permute.xlu0 %880
  %v883 = vsel %vm405, %v871, %v881
  %v885 = vsel %vm78, %v883, 0
  %887 = vmatprep.subr.mxu0 %v243
  %888 = vmatpush1.msra.mxu0 %v242
  %889 = vmatprep.subr.mxu0 %v245
  %890 = vmatpush1.msra.mxu0 %v244
  %891 = vmatprep.subr.mxu0 %v247
  %892 = vmatpush1.msra.mxu0 %v246
  %893 = vmatprep.subr.mxu0 %v249
  %894 = vmatpush1.msra.mxu0 %v248
  %895 = vmatprep.subr.mxu0 %v251
  %896 = vmatpush1.msra.mxu0 %v250
  %897 = vmatprep.subr.mxu0 %v253
  %898 = vmatpush1.msra.mxu0 %v252
  %899 = vmatprep.subr.mxu0 0.0
  %900 = vmatpush1.msra.mxu0 0.0
  %901 = vmatprep.subr.mxu0 0.0
  %902 = vmatpush1.msra.mxu0 0.0
  %903 = vmatprep.subr.mxu0 0.0
  %904 = vmatpush1.msra.mxu0 0.0
  %905 = vmatprep.subr.mxu0 0.0
  %906 = vmatpush1.msra.mxu0 0.0
  %907 = vmatprep.subr.mxu0 0.0
  %908 = vmatpush1.msra.mxu0 0.0
  %909 = vmatprep.subr.mxu0 0.0
  %910 = vmatpush1.msra.mxu0 0.0
  %911 = vmatprep.subr.mxu0 0.0
  %912 = vmatpush1.msra.mxu0 0.0
  %913 = vmatprep.subr.mxu0 0.0
  %914 = vmatpush1.msra.mxu0 0.0
  %915 = vmatprep.subr.mxu0 0.0
  %916 = vmatpush1.msra.mxu0 0.0
  %917 = vmatprep.subr.mxu0 0.0
  %918 = vmatpush1.msra.mxu0 0.0
  %919 = vmatprep.subr.mxu0 0.0
  %920 = vmatpush1.msra.mxu0 0.0
  %921 = vmatprep.subr.mxu0 0.0
  %922 = vmatpush1.msra.mxu0 0.0
  %923 = vmatprep.subr.mxu0 0.0
  %924 = vmatpush1.msra.mxu0 0.0
  %925 = vmatprep.subr.mxu0 0.0
  %926 = vmatpush1.msra.mxu0 0.0
  %927 = vmatprep.subr.mxu0 0.0
  %928 = vmatpush1.msra.mxu0 0.0
  %929 = vmatprep.subr.mxu0 0.0
  %930 = vmatpush1.msra.mxu0 0.0
  %931 = vmatprep.subr.mxu0 0.0
  %932 = vmatpush1.msra.mxu0 0.0
  %933 = vmatprep.subr.mxu0 0.0
  %934 = vmatpush1.msra.mxu0 0.0
  %935 = vmatprep.subr.mxu0 0.0
  %936 = vmatpush1.msra.mxu0 0.0
  %937 = vmatprep.subr.mxu0 0.0
  %938 = vmatpush1.msra.mxu0 0.0
  %939 = vmatprep.subr.mxu0 0.0
  %940 = vmatpush1.msra.mxu0 0.0
  %941 = vmatprep.subr.mxu0 0.0
  %942 = vmatpush1.msra.mxu0 0.0
  %943 = vmatprep.subr.mxu0 0.0
  %944 = vmatpush1.msra.mxu0 0.0
  %945 = vmatprep.subr.mxu0 0.0
  %946 = vmatpush1.msra.mxu0 0.0
  %947 = vmatprep.subr.mxu0 0.0
  %948 = vmatpush1.msra.mxu0 0.0
  %949 = vmatprep.subr.mxu0 0.0
  %950 = vmatpush1.msra.mxu0 0.0
  %951 = vmatprep.mubr.f32.mxu0 0.0
  %952 = vmatmul.mubr.f32.gmra.mrb[0].mxu0 %v885
  %v953 = vpop.f32.mrb[0].mxu0
  %v954 = vadd.f32 %v235, %v953
  %v955 = vpop.f32.mrb[0].mxu0
  %v956 = vadd.f32 %v239, %v955
  %957 = vdwg.mxu0
  %v958 = vadd.f32 %v194, %v954
  %v959 = vxor.u32 %v958, 2147483648
  %v960 = vmul.f32 %v959, 1.442695
  %v961 = vpow.pop %v960
  %v962 = vadd.f32 %v961, 1.0
  %v963 = vrcp.pop %v962
  %v964 = vmul.f32 1.0, %v963
  %966 = vrot.lane.b32.xlu0 %v954, 80
  %v967 = vpop.permute.xlu0 %966
  %v969 = vmul.f32 %v964, %v967
  %971 = vrot.lane.b32.xlu0 %v969, 48
  %v972 = vpop.permute.xlu0 %971
  %v974 = vadd.f32 %v194, %v972
  %v975 = vtanh.pop %v974
  %v976 = vsub.f32 1.0, %v964
  %978 = vrot.lane.b32.xlu0 %v975, 104
  %v979 = vpop.permute.xlu0 %978
  %v981 = vmul.f32 %v976, %v979
  %983 = vrot.lane.b32.xlu0 %v871, 24
  %v984 = vpop.permute.xlu0 %983
  %v986 = vmul.f32 %v964, %v984
  %v987 = vadd.f32 %v981, %v986
  %v988 = vadd.f32 %v188, %v954
  %v989 = vxor.u32 %v988, 2147483648
  %v990 = vmul.f32 %v989, 1.442695
  %v991 = vpow.pop %v990
  %v992 = vadd.f32 %v991, 1.0
  %v993 = vrcp.pop %v992
  %v994 = vmul.f32 1.0, %v993
  %996 = vrot.lane.b32.xlu0 %v956, 80
  %v997 = vpop.permute.xlu0 %996
  %v998 = vsel %vm364, %v967, %v997
  %v1000 = vmul.f32 %v994, %v998
  %1002 = vrot.lane.b32.xlu0 %v1000, 48
  %v1003 = vpop.permute.xlu0 %1002
  %v1005 = vadd.f32 %v188, %v1003
  %v1006 = vadd.f32 %v190, %v1003
  %v1007 = vtanh.pop %v1005
  %v1008 = vtanh.pop %v1006
  %v1009 = vsub.f32 1.0, %v994
  %1012 = vrot.lane.b32.xlu0 %v1007, 104
  %v1013 = vpop.permute.xlu0 %1012
  %1014 = vrot.lane.b32.xlu0 %v1008, 104
  %v1015 = vpop.permute.xlu0 %1014
  %v1016 = vsel %vm383, %v1013, %v1015
  %v1018 = vmul.f32 %v1009, %v1016
  %1019 = vrot.lane.b32.xlu0 %v876, 96
  %v1020 = vpop.permute.xlu0 %1019
  %v1022 = vmul.f32 %v994, %v1020
  %v1023 = vadd.f32 %v1018, %v1022
  %1025 = vrot.lane.b32.xlu0 %v987, 104
  %v1026 = vpop.permute.xlu0 %1025
  %v1028 = vsel %vm866, %v1026, %v871
  %1030 = vrot.lane.b32.xlu0 %v1023, 32
  %v1031 = vpop.permute.xlu0 %1030
  %v1033 = vsel %vm865, %v1031, %v876
  %v1034 = vsel %vm866, %v1026, 0.0
  %v1035 = vsel %vm865, %v1031, 0.0
  %1037 = vrot.lane.b32.xlu0 %v1033, 24
  %v1038 = vpop.permute.xlu0 %1037
  %v1040 = vsel %vm405, %v1028, %v1038
  %v1042 = vsel %vm78, %v1040, 0
  %1044 = vmatprep.subr.mxu0 %v243
  %1045 = vmatpush1.msra.mxu0 %v242
  %1046 = vmatprep.subr.mxu0 %v245
  %1047 = vmatpush1.msra.mxu0 %v244
  %1048 = vmatprep.subr.mxu0 %v247
  %1049 = vmatpush1.msra.mxu0 %v246
  %1050 = vmatprep.subr.mxu0 %v249
  %1051 = vmatpush1.msra.mxu0 %v248
  %1052 = vmatprep.subr.mxu0 %v251
  %1053 = vmatpush1.msra.mxu0 %v250
  %1054 = vmatprep.subr.mxu0 %v253
  %1055 = vmatpush1.msra.mxu0 %v252
  %1056 = vmatprep.subr.mxu0 0.0
  %1057 = vmatpush1.msra.mxu0 0.0
  %1058 = vmatprep.subr.mxu0 0.0
  %1059 = vmatpush1.msra.mxu0 0.0
  %1060 = vmatprep.subr.mxu0 0.0
  %1061 = vmatpush1.msra.mxu0 0.0
  %1062 = vmatprep.subr.mxu0 0.0
  %1063 = vmatpush1.msra.mxu0 0.0
  %1064 = vmatprep.subr.mxu0 0.0
  %1065 = vmatpush1.msra.mxu0 0.0
  %1066 = vmatprep.subr.mxu0 0.0
  %1067 = vmatpush1.msra.mxu0 0.0
  %1068 = vmatprep.subr.mxu0 0.0
  %1069 = vmatpush1.msra.mxu0 0.0
  %1070 = vmatprep.subr.mxu0 0.0
  %1071 = vmatpush1.msra.mxu0 0.0
  %1072 = vmatprep.subr.mxu0 0.0
  %1073 = vmatpush1.msra.mxu0 0.0
  %1074 = vmatprep.subr.mxu0 0.0
  %1075 = vmatpush1.msra.mxu0 0.0
  %1076 = vmatprep.subr.mxu0 0.0
  %1077 = vmatpush1.msra.mxu0 0.0
  %1078 = vmatprep.subr.mxu0 0.0
  %1079 = vmatpush1.msra.mxu0 0.0
  %1080 = vmatprep.subr.mxu0 0.0
  %1081 = vmatpush1.msra.mxu0 0.0
  %1082 = vmatprep.subr.mxu0 0.0
  %1083 = vmatpush1.msra.mxu0 0.0
  %1084 = vmatprep.subr.mxu0 0.0
  %1085 = vmatpush1.msra.mxu0 0.0
  %1086 = vmatprep.subr.mxu0 0.0
  %1087 = vmatpush1.msra.mxu0 0.0
  %1088 = vmatprep.subr.mxu0 0.0
  %1089 = vmatpush1.msra.mxu0 0.0
  %1090 = vmatprep.subr.mxu0 0.0
  %1091 = vmatpush1.msra.mxu0 0.0
  %1092 = vmatprep.subr.mxu0 0.0
  %1093 = vmatpush1.msra.mxu0 0.0
  %1094 = vmatprep.subr.mxu0 0.0
  %1095 = vmatpush1.msra.mxu0 0.0
  %1096 = vmatprep.subr.mxu0 0.0
  %1097 = vmatpush1.msra.mxu0 0.0
  %1098 = vmatprep.subr.mxu0 0.0
  %1099 = vmatpush1.msra.mxu0 0.0
  %1100 = vmatprep.subr.mxu0 0.0
  %1101 = vmatpush1.msra.mxu0 0.0
  %1102 = vmatprep.subr.mxu0 0.0
  %1103 = vmatpush1.msra.mxu0 0.0
  %1104 = vmatprep.subr.mxu0 0.0
  %1105 = vmatpush1.msra.mxu0 0.0
  %1106 = vmatprep.subr.mxu0 0.0
  %1107 = vmatpush1.msra.mxu0 0.0
  %1108 = vmatprep.mubr.f32.mxu0 0.0
  %1109 = vmatmul.mubr.f32.gmra.mrb[0].mxu0 %v1042
  %v1110 = vpop.f32.mrb[0].mxu0
  %v1111 = vadd.f32 %v235, %v1110
  %v1112 = vpop.f32.mrb[0].mxu0
  %v1113 = vadd.f32 %v239, %v1112
  %1114 = vdwg.mxu0
  %v1115 = vadd.f32 %v200, %v1111
  %v1116 = vxor.u32 %v1115, 2147483648
  %v1117 = vmul.f32 %v1116, 1.442695
  %v1118 = vpow.pop %v1117
  %v1119 = vadd.f32 %v1118, 1.0
  %v1120 = vrcp.pop %v1119
  %v1121 = vmul.f32 1.0, %v1120
  %1123 = vrot.lane.b32.xlu0 %v1111, 80
  %v1124 = vpop.permute.xlu0 %1123
  %v1126 = vmul.f32 %v1121, %v1124
  %1128 = vrot.lane.b32.xlu0 %v1126, 48
  %v1129 = vpop.permute.xlu0 %1128
  %v1131 = vadd.f32 %v200, %v1129
  %v1132 = vtanh.pop %v1131
  %v1133 = vsub.f32 1.0, %v1121
  %1135 = vrot.lane.b32.xlu0 %v1132, 104
  %v1136 = vpop.permute.xlu0 %1135
  %v1138 = vmul.f32 %v1133, %v1136
  %1140 = vrot.lane.b32.xlu0 %v1028, 24
  %v1141 = vpop.permute.xlu0 %1140
  %v1143 = vmul.f32 %v1121, %v1141
  %v1144 = vadd.f32 %v1138, %v1143
  %v1145 = vadd.f32 %v182, %v1111
  %v1146 = vxor.u32 %v1145, 2147483648
  %v1147 = vmul.f32 %v1146, 1.442695
  %v1148 = vpow.pop %v1147
  %v1149 = vadd.f32 %v1148, 1.0
  %v1150 = vrcp.pop %v1149
  %v1151 = vmul.f32 1.0, %v1150
  %1153 = vrot.lane.b32.xlu0 %v1113, 80
  %v1154 = vpop.permute.xlu0 %1153
  %v1155 = vsel %vm364, %v1124, %v1154
  %v1157 = vmul.f32 %v1151, %v1155
  %1159 = vrot.lane.b32.xlu0 %v1157, 48
  %v1160 = vpop.permute.xlu0 %1159
  %v1162 = vadd.f32 %v182, %v1160
  %v1163 = vadd.f32 %v184, %v1160
  %v1164 = vtanh.pop %v1162
  %v1165 = vtanh.pop %v1163
  %v1166 = vsub.f32 1.0, %v1151
  %1169 = vrot.lane.b32.xlu0 %v1164, 104
  %v1170 = vpop.permute.xlu0 %1169
  %1171 = vrot.lane.b32.xlu0 %v1165, 104
  %v1172 = vpop.permute.xlu0 %1171
  %v1173 = vsel %vm383, %v1170, %v1172
  %v1175 = vmul.f32 %v1166, %v1173
  %1176 = vrot.lane.b32.xlu0 %v1033, 96
  %v1177 = vpop.permute.xlu0 %1176
  %v1179 = vmul.f32 %v1151, %v1177
  %v1180 = vadd.f32 %v1175, %v1179
  %1182 = vrot.lane.b32.xlu0 %v1144, 104
  %v1183 = vpop.permute.xlu0 %1182
  %v1185 = vsel %vm707, %v1183, %v1028
  %1187 = vrot.lane.b32.xlu0 %v1180, 32
  %v1188 = vpop.permute.xlu0 %1187
  %v1190 = vsel %vm706, %v1188, %v1033
  %v1191 = vsel %vm707, %v1183, 0.0
  %v1192 = vsel %vm706, %v1188, 0.0
  %1194 = vrot.lane.b32.xlu0 %v1190, 24
  %v1195 = vpop.permute.xlu0 %1194
  %v1197 = vsel %vm405, %v1185, %v1195
  %v1199 = vsel %vm78, %v1197, 0
  %1201 = vmatprep.subr.mxu0 %v243
  %1202 = vmatpush1.msra.mxu0 %v242
  %1203 = vmatprep.subr.mxu0 %v245
  %1204 = vmatpush1.msra.mxu0 %v244
  %1205 = vmatprep.subr.mxu0 %v247
  %1206 = vmatpush1.msra.mxu0 %v246
  %1207 = vmatprep.subr.mxu0 %v249
  %1208 = vmatpush1.msra.mxu0 %v248
  %1209 = vmatprep.subr.mxu0 %v251
  %1210 = vmatpush1.msra.mxu0 %v250
  %1211 = vmatprep.subr.mxu0 %v253
  %1212 = vmatpush1.msra.mxu0 %v252
  %1213 = vmatprep.subr.mxu0 0.0
  %1214 = vmatpush1.msra.mxu0 0.0
  %1215 = vmatprep.subr.mxu0 0.0
  %1216 = vmatpush1.msra.mxu0 0.0
  %1217 = vmatprep.subr.mxu0 0.0
  %1218 = vmatpush1.msra.mxu0 0.0
  %1219 = vmatprep.subr.mxu0 0.0
  %1220 = vmatpush1.msra.mxu0 0.0
  %1221 = vmatprep.subr.mxu0 0.0
  %1222 = vmatpush1.msra.mxu0 0.0
  %1223 = vmatprep.subr.mxu0 0.0
  %1224 = vmatpush1.msra.mxu0 0.0
  %1225 = vmatprep.subr.mxu0 0.0
  %1226 = vmatpush1.msra.mxu0 0.0
  %1227 = vmatprep.subr.mxu0 0.0
  %1228 = vmatpush1.msra.mxu0 0.0
  %1229 = vmatprep.subr.mxu0 0.0
  %1230 = vmatpush1.msra.mxu0 0.0
  %1231 = vmatprep.subr.mxu0 0.0
  %1232 = vmatpush1.msra.mxu0 0.0
  %1233 = vmatprep.subr.mxu0 0.0
  %1234 = vmatpush1.msra.mxu0 0.0
  %1235 = vmatprep.subr.mxu0 0.0
  %1236 = vmatpush1.msra.mxu0 0.0
  %1237 = vmatprep.subr.mxu0 0.0
  %1238 = vmatpush1.msra.mxu0 0.0
  %1239 = vmatprep.subr.mxu0 0.0
  %1240 = vmatpush1.msra.mxu0 0.0
  %1241 = vmatprep.subr.mxu0 0.0
  %1242 = vmatpush1.msra.mxu0 0.0
  %1243 = vmatprep.subr.mxu0 0.0
  %1244 = vmatpush1.msra.mxu0 0.0
  %1245 = vmatprep.subr.mxu0 0.0
  %1246 = vmatpush1.msra.mxu0 0.0
  %1247 = vmatprep.subr.mxu0 0.0
  %1248 = vmatpush1.msra.mxu0 0.0
  %1249 = vmatprep.subr.mxu0 0.0
  %1250 = vmatpush1.msra.mxu0 0.0
  %1251 = vmatprep.subr.mxu0 0.0
  %1252 = vmatpush1.msra.mxu0 0.0
  %1253 = vmatprep.subr.mxu0 0.0
  %1254 = vmatpush1.msra.mxu0 0.0
  %1255 = vmatprep.subr.mxu0 0.0
  %1256 = vmatpush1.msra.mxu0 0.0
  %1257 = vmatprep.subr.mxu0 0.0
  %1258 = vmatpush1.msra.mxu0 0.0
  %1259 = vmatprep.subr.mxu0 0.0
  %1260 = vmatpush1.msra.mxu0 0.0
  %1261 = vmatprep.subr.mxu0 0.0
  %1262 = vmatpush1.msra.mxu0 0.0
  %1263 = vmatprep.subr.mxu0 0.0
  %1264 = vmatpush1.msra.mxu0 0.0
  %1265 = vmatprep.mubr.f32.mxu0 0.0
  %1266 = vmatmul.mubr.f32.gmra.mrb[0].mxu0 %v1199
  %v1267 = vpop.f32.mrb[0].mxu0
  %v1268 = vadd.f32 %v235, %v1267
  %v1269 = vpop.f32.mrb[0].mxu0
  %v1270 = vadd.f32 %v239, %v1269
  %1271 = vdwg.mxu0
  %v1272 = vadd.f32 %v206, %v1268
  %v1273 = vxor.u32 %v1272, 2147483648
  %v1274 = vmul.f32 %v1273, 1.442695
  %v1275 = vpow.pop %v1274
  %v1276 = vadd.f32 %v1275, 1.0
  %v1277 = vrcp.pop %v1276
  %v1278 = vmul.f32 1.0, %v1277
  %1280 = vrot.lane.b32.xlu0 %v1268, 80
  %v1281 = vpop.permute.xlu0 %1280
  %v1283 = vmul.f32 %v1278, %v1281
  %1285 = vrot.lane.b32.xlu0 %v1283, 48
  %v1286 = vpop.permute.xlu0 %1285
  %v1288 = vadd.f32 %v206, %v1286
  %v1289 = vtanh.pop %v1288
  %v1290 = vsub.f32 1.0, %v1278
  %1292 = vrot.lane.b32.xlu0 %v1289, 104
  %v1293 = vpop.permute.xlu0 %1292
  %v1295 = vmul.f32 %v1290, %v1293
  %1297 = vrot.lane.b32.xlu0 %v1185, 24
  %v1298 = vpop.permute.xlu0 %1297
  %v1300 = vmul.f32 %v1278, %v1298
  %v1301 = vadd.f32 %v1295, %v1300
  %v1302 = vadd.f32 %v176, %v1268
  %v1303 = vxor.u32 %v1302, 2147483648
  %v1304 = vmul.f32 %v1303, 1.442695
  %v1305 = vpow.pop %v1304
  %v1306 = vadd.f32 %v1305, 1.0
  %v1307 = vrcp.pop %v1306
  %v1308 = vmul.f32 1.0, %v1307
  %1310 = vrot.lane.b32.xlu0 %v1270, 80
  %v1311 = vpop.permute.xlu0 %1310
  %v1312 = vsel %vm364, %v1281, %v1311
  %v1314 = vmul.f32 %v1308, %v1312
  %1316 = vrot.lane.b32.xlu0 %v1314, 48
  %v1317 = vpop.permute.xlu0 %1316
  %v1319 = vadd.f32 %v176, %v1317
  %v1320 = vadd.f32 %v178, %v1317
  %v1321 = vtanh.pop %v1319
  %v1322 = vtanh.pop %v1320
  %v1323 = vsub.f32 1.0, %v1308
  %1326 = vrot.lane.b32.xlu0 %v1321, 104
  %v1327 = vpop.permute.xlu0 %1326
  %1328 = vrot.lane.b32.xlu0 %v1322, 104
  %v1329 = vpop.permute.xlu0 %1328
  %v1330 = vsel %vm383, %v1327, %v1329
  %v1332 = vmul.f32 %v1323, %v1330
  %1333 = vrot.lane.b32.xlu0 %v1190, 96
  %v1334 = vpop.permute.xlu0 %1333
  %v1336 = vmul.f32 %v1308, %v1334
  %v1337 = vadd.f32 %v1332, %v1336
  %1339 = vrot.lane.b32.xlu0 %v1301, 104
  %v1340 = vpop.permute.xlu0 %1339
  %v1342 = vsel %vm548, %v1340, %v1185
  %1344 = vrot.lane.b32.xlu0 %v1337, 32
  %v1345 = vpop.permute.xlu0 %1344
  %v1347 = vsel %vm547, %v1345, %v1190
  %v1348 = vsel %vm548, %v1340, 0.0
  %v1349 = vsel %vm547, %v1345, 0.0
  %1351 = vrot.lane.b32.xlu0 %v1347, 24
  %v1352 = vpop.permute.xlu0 %1351
  %v1354 = vsel %vm405, %v1342, %v1352
  %v1356 = vsel %vm78, %v1354, 0
  %1358 = vmatprep.subr.mxu0 %v243
  %1359 = vmatpush1.msra.mxu0 %v242
  %1360 = vmatprep.subr.mxu0 %v245
  %1361 = vmatpush1.msra.mxu0 %v244
  %1362 = vmatprep.subr.mxu0 %v247
  %1363 = vmatpush1.msra.mxu0 %v246
  %1364 = vmatprep.subr.mxu0 %v249
  %1365 = vmatpush1.msra.mxu0 %v248
  %1366 = vmatprep.subr.mxu0 %v251
  %1367 = vmatpush1.msra.mxu0 %v250
  %1368 = vmatprep.subr.mxu0 %v253
  %1369 = vmatpush1.msra.mxu0 %v252
  %1370 = vmatprep.subr.mxu0 0.0
  %1371 = vmatpush1.msra.mxu0 0.0
  %1372 = vmatprep.subr.mxu0 0.0
  %1373 = vmatpush1.msra.mxu0 0.0
  %1374 = vmatprep.subr.mxu0 0.0
  %1375 = vmatpush1.msra.mxu0 0.0
  %1376 = vmatprep.subr.mxu0 0.0
  %1377 = vmatpush1.msra.mxu0 0.0
  %1378 = vmatprep.subr.mxu0 0.0
  %1379 = vmatpush1.msra.mxu0 0.0
  %1380 = vmatprep.subr.mxu0 0.0
  %1381 = vmatpush1.msra.mxu0 0.0
  %1382 = vmatprep.subr.mxu0 0.0
  %1383 = vmatpush1.msra.mxu0 0.0
  %1384 = vmatprep.subr.mxu0 0.0
  %1385 = vmatpush1.msra.mxu0 0.0
  %1386 = vmatprep.subr.mxu0 0.0
  %1387 = vmatpush1.msra.mxu0 0.0
  %1388 = vmatprep.subr.mxu0 0.0
  %1389 = vmatpush1.msra.mxu0 0.0
  %1390 = vmatprep.subr.mxu0 0.0
  %1391 = vmatpush1.msra.mxu0 0.0
  %1392 = vmatprep.subr.mxu0 0.0
  %1393 = vmatpush1.msra.mxu0 0.0
  %1394 = vmatprep.subr.mxu0 0.0
  %1395 = vmatpush1.msra.mxu0 0.0
  %1396 = vmatprep.subr.mxu0 0.0
  %1397 = vmatpush1.msra.mxu0 0.0
  %1398 = vmatprep.subr.mxu0 0.0
  %1399 = vmatpush1.msra.mxu0 0.0
  %1400 = vmatprep.subr.mxu0 0.0
  %1401 = vmatpush1.msra.mxu0 0.0
  %1402 = vmatprep.subr.mxu0 0.0
  %1403 = vmatpush1.msra.mxu0 0.0
  %1404 = vmatprep.subr.mxu0 0.0
  %1405 = vmatpush1.msra.mxu0 0.0
  %1406 = vmatprep.subr.mxu0 0.0
  %1407 = vmatpush1.msra.mxu0 0.0
  %1408 = vmatprep.subr.mxu0 0.0
  %1409 = vmatpush1.msra.mxu0 0.0
  %1410 = vmatprep.subr.mxu0 0.0
  %1411 = vmatpush1.msra.mxu0 0.0
  %1412 = vmatprep.subr.mxu0 0.0
  %1413 = vmatpush1.msra.mxu0 0.0
  %1414 = vmatprep.subr.mxu0 0.0
  %1415 = vmatpush1.msra.mxu0 0.0
  %1416 = vmatprep.subr.mxu0 0.0
  %1417 = vmatpush1.msra.mxu0 0.0
  %1418 = vmatprep.subr.mxu0 0.0
  %1419 = vmatpush1.msra.mxu0 0.0
  %1420 = vmatprep.subr.mxu0 0.0
  %1421 = vmatpush1.msra.mxu0 0.0
  %1422 = vmatprep.mubr.f32.mxu0 0.0
  %1423 = vmatmul.mubr.f32.gmra.mrb[0].mxu0 %v1356
  %v1424 = vpop.f32.mrb[0].mxu0
  %v1425 = vadd.f32 %v235, %v1424
  %v1426 = vpop.f32.mrb[0].mxu0
  %v1427 = vadd.f32 %v239, %v1426
  %1428 = vdwg.mxu0
  %v1429 = vadd.f32 %v212, %v1425
  %v1430 = vxor.u32 %v1429, 2147483648
  %v1431 = vmul.f32 %v1430, 1.442695
  %v1432 = vpow.pop %v1431
  %v1433 = vadd.f32 %v1432, 1.0
  %v1434 = vrcp.pop %v1433
  %v1435 = vmul.f32 1.0, %v1434
  %1437 = vrot.lane.b32.xlu0 %v1425, 80
  %v1438 = vpop.permute.xlu0 %1437
  %v1440 = vmul.f32 %v1435, %v1438
  %1442 = vrot.lane.b32.xlu0 %v1440, 48
  %v1443 = vpop.permute.xlu0 %1442
  %v1445 = vadd.f32 %v212, %v1443
  %v1446 = vtanh.pop %v1445
  %v1447 = vsub.f32 1.0, %v1435
  %1449 = vrot.lane.b32.xlu0 %v1446, 104
  %v1450 = vpop.permute.xlu0 %1449
  %v1452 = vmul.f32 %v1447, %v1450
  %1454 = vrot.lane.b32.xlu0 %v1342, 24
  %v1455 = vpop.permute.xlu0 %1454
  %v1457 = vmul.f32 %v1435, %v1455
  %v1458 = vadd.f32 %v1452, %v1457
  %v1459 = vadd.f32 %v170, %v1425
  %v1460 = vxor.u32 %v1459, 2147483648
  %v1461 = vmul.f32 %v1460, 1.442695
  %v1462 = vpow.pop %v1461
  %v1463 = vadd.f32 %v1462, 1.0
  %v1464 = vrcp.pop %v1463
  %v1465 = vmul.f32 1.0, %v1464
  %1467 = vrot.lane.b32.xlu0 %v1427, 80
  %v1468 = vpop.permute.xlu0 %1467
  %v1469 = vsel %vm364, %v1438, %v1468
  %v1471 = vmul.f32 %v1465, %v1469
  %1473 = vrot.lane.b32.xlu0 %v1471, 48
  %v1474 = vpop.permute.xlu0 %1473
  %v1476 = vadd.f32 %v170, %v1474
  %v1477 = vadd.f32 %v172, %v1474
  %v1478 = vtanh.pop %v1476
  %v1479 = vtanh.pop %v1477
  %v1480 = vsub.f32 1.0, %v1465
  %1483 = vrot.lane.b32.xlu0 %v1478, 104
  %v1484 = vpop.permute.xlu0 %1483
  %1485 = vrot.lane.b32.xlu0 %v1479, 104
  %v1486 = vpop.permute.xlu0 %1485
  %v1487 = vsel %vm383, %v1484, %v1486
  %v1489 = vmul.f32 %v1480, %v1487
  %1490 = vrot.lane.b32.xlu0 %v1347, 96
  %v1491 = vpop.permute.xlu0 %1490
  %v1493 = vmul.f32 %v1465, %v1491
  %v1494 = vadd.f32 %v1489, %v1493
  %1496 = vrot.lane.b32.xlu0 %v1458, 104
  %v1497 = vpop.permute.xlu0 %1496
  %v1499 = vsel %vm390, %v1497, 0.0
  %1501 = vrot.lane.b32.xlu0 %v1494, 32
  %v1502 = vpop.permute.xlu0 %1501
  %v1504 = vsel %vm389, %v1502, 0.0
  %1512 = vrot.lane.b32.xlu0 %v1504, 24
  %v1513 = vpop.permute.xlu0 %1512
  %1514 = vrot.lane.b32.xlu0 %v1349, 24
  %v1515 = vpop.permute.xlu0 %1514
  %1516 = vrot.lane.b32.xlu0 %v1192, 24
  %v1517 = vpop.permute.xlu0 %1516
  %1518 = vrot.lane.b32.xlu0 %v1035, 24
  %v1519 = vpop.permute.xlu0 %1518
  %1520 = vrot.lane.b32.xlu0 %v878, 24
  %v1521 = vpop.permute.xlu0 %1520
  %1522 = vrot.lane.b32.xlu0 %v719, 24
  %v1523 = vpop.permute.xlu0 %1522
  %1524 = vrot.lane.b32.xlu0 %v560, 24
  %v1525 = vpop.permute.xlu0 %1524
  %v1533 = vsel %vm405, %v395, %v1513
  %v1534 = vsel %vm405, %v559, %v1515
  %v1535 = vsel %vm405, %v718, %v1517
  %v1536 = vsel %vm405, %v877, %v1519
  %v1537 = vsel %vm405, %v1034, %v1521
  %v1538 = vsel %vm405, %v1191, %v1523
  %v1539 = vsel %vm405, %v1348, %v1525
  %v1540 = vsel %vm405, %v1499, %v403
  %v1541 = vld [vmem:[%s6] sm:$0xff]
  %v1542 = vld [vmem:[%s6 + $0x8] sm:$0xff]
  %v1543 = vld [vmem:[%s6 + $0x10] sm:$0xff]
  %v1544 = vld [vmem:[%s6 + $0x18] sm:$0xff]
  %v1545 = vld [vmem:[%s6 + $0x20] sm:$0xff]
  %v1546 = vld [vmem:[%s6 + $0x28] sm:$0xff]
  %v1548 = vsel %vm78, %v1533, 0
  %v1551 = vsel %vm78, %v1534, 0
  %v1554 = vsel %vm78, %v1535, 0
  %v1557 = vsel %vm78, %v1536, 0
  %v1560 = vsel %vm78, %v1537, 0
  %v1563 = vsel %vm78, %v1538, 0
  %v1566 = vsel %vm78, %v1539, 0
  %v1569 = vsel %vm78, %v1540, 0
  %1571 = vmatprep.subr.mxu0 0.0
  %1572 = vmatpush1.msra.mxu0 %v1541
  %1573 = vmatprep.subr.mxu0 0.0
  %1574 = vmatpush1.msra.mxu0 %v1542
  %1575 = vmatprep.subr.mxu0 0.0
  %1576 = vmatpush1.msra.mxu0 %v1543
  %1577 = vmatprep.subr.mxu0 0.0
  %1578 = vmatpush1.msra.mxu0 %v1544
  %1579 = vmatprep.subr.mxu0 0.0
  %1580 = vmatpush1.msra.mxu0 %v1545
  %1581 = vmatprep.subr.mxu0 0.0
  %1582 = vmatpush1.msra.mxu0 %v1546
  %1583 = vmatprep.subr.mxu0 0.0
  %1584 = vmatpush1.msra.mxu0 0.0
  %1585 = vmatprep.subr.mxu0 0.0
  %1586 = vmatpush1.msra.mxu0 0.0
  %1587 = vmatprep.subr.mxu0 0.0
  %1588 = vmatpush1.msra.mxu0 0.0
  %1589 = vmatprep.subr.mxu0 0.0
  %1590 = vmatpush1.msra.mxu0 0.0
  %1591 = vmatprep.subr.mxu0 0.0
  %1592 = vmatpush1.msra.mxu0 0.0
  %1593 = vmatprep.subr.mxu0 0.0
  %1594 = vmatpush1.msra.mxu0 0.0
  %1595 = vmatprep.subr.mxu0 0.0
  %1596 = vmatpush1.msra.mxu0 0.0
  %1597 = vmatprep.subr.mxu0 0.0
  %1598 = vmatpush1.msra.mxu0 0.0
  %1599 = vmatprep.subr.mxu0 0.0
  %1600 = vmatpush1.msra.mxu0 0.0
  %1601 = vmatprep.subr.mxu0 0.0
  %1602 = vmatpush1.msra.mxu0 0.0
  %1603 = vmatprep.subr.mxu0 0.0
  %1604 = vmatpush1.msra.mxu0 0.0
  %1605 = vmatprep.subr.mxu0 0.0
  %1606 = vmatpush1.msra.mxu0 0.0
  %1607 = vmatprep.subr.mxu0 0.0
  %1608 = vmatpush1.msra.mxu0 0.0
  %1609 = vmatprep.subr.mxu0 0.0
  %1610 = vmatpush1.msra.mxu0 0.0
  %1611 = vmatprep.subr.mxu0 0.0
  %1612 = vmatpush1.msra.mxu0 0.0
  %1613 = vmatprep.subr.mxu0 0.0
  %1614 = vmatpush1.msra.mxu0 0.0
  %1615 = vmatprep.subr.mxu0 0.0
  %1616 = vmatpush1.msra.mxu0 0.0
  %1617 = vmatprep.subr.mxu0 0.0
  %1618 = vmatpush1.msra.mxu0 0.0
  %1619 = vmatprep.subr.mxu0 0.0
  %1620 = vmatpush1.msra.mxu0 0.0
  %1621 = vmatprep.subr.mxu0 0.0
  %1622 = vmatpush1.msra.mxu0 0.0
  %1623 = vmatprep.subr.mxu0 0.0
  %1624 = vmatpush1.msra.mxu0 0.0
  %1625 = vmatprep.subr.mxu0 0.0
  %1626 = vmatpush1.msra.mxu0 0.0
  %1627 = vmatprep.subr.mxu0 0.0
  %1628 = vmatpush1.msra.mxu0 0.0
  %1629 = vmatprep.subr.mxu0 0.0
  %1630 = vmatpush1.msra.mxu0 0.0
  %1631 = vmatprep.subr.mxu0 0.0
  %1632 = vmatpush1.msra.mxu0 0.0
  %1633 = vmatprep.subr.mxu0 0.0
  %1634 = vmatpush1.msra.mxu0 0.0
  %1635 = vmatprep.mubr.f32.mxu0 0.0
  %1636 = vmatmul.mubr.f32.gmra.mrb[0].mxu0 %v1548
  %v1637 = vpop.f32.mrb[0].mxu0
  %v1638 = vadd.f32 0.0, %v1637
  %v1639 = vpop.f32.mrb[0].mxu0
  %1640 = vmatprep.mubr.f32.mxu0 0.0
  %1641 = vmatmul.mubr.f32.gmra.mrb[0].mxu0 %v1551
  %v1642 = vpop.f32.mrb[0].mxu0
  %v1643 = vadd.f32 0.0, %v1642
  %v1644 = vpop.f32.mrb[0].mxu0
  %1645 = vmatprep.mubr.f32.mxu0 0.0
  %1646 = vmatmul.mubr.f32.gmra.mrb[0].mxu0 %v1554
  %v1647 = vpop.f32.mrb[0].mxu0
  %v1648 = vadd.f32 0.0, %v1647
  %v1649 = vpop.f32.mrb[0].mxu0
  %1650 = vmatprep.mubr.f32.mxu0 0.0
  %1651 = vmatmul.mubr.f32.gmra.mrb[0].mxu0 %v1557
  %v1652 = vpop.f32.mrb[0].mxu0
  %v1653 = vadd.f32 0.0, %v1652
  %v1654 = vpop.f32.mrb[0].mxu0
  %1655 = vmatprep.mubr.f32.mxu0 0.0
  %1656 = vmatmul.mubr.f32.gmra.mrb[0].mxu0 %v1560
  %v1657 = vpop.f32.mrb[0].mxu0
  %v1658 = vadd.f32 0.0, %v1657
  %v1659 = vpop.f32.mrb[0].mxu0
  %1660 = vmatprep.mubr.f32.mxu0 0.0
  %1661 = vmatmul.mubr.f32.gmra.mrb[0].mxu0 %v1563
  %v1662 = vpop.f32.mrb[0].mxu0
  %v1663 = vadd.f32 0.0, %v1662
  %v1664 = vpop.f32.mrb[0].mxu0
  %1665 = vmatprep.mubr.f32.mxu0 0.0
  %1666 = vmatmul.mubr.f32.gmra.mrb[0].mxu0 %v1566
  %v1667 = vpop.f32.mrb[0].mxu0
  %v1668 = vadd.f32 0.0, %v1667
  %v1669 = vpop.f32.mrb[0].mxu0
  %1670 = vmatprep.mubr.f32.mxu0 0.0
  %1671 = vmatmul.mubr.f32.gmra.mrb[0].mxu0 %v1569
  %v1672 = vpop.f32.mrb[0].mxu0
  %v1673 = vadd.f32 0.0, %v1672
  %v1674 = vpop.f32.mrb[0].mxu0
  %1675 = vdwg.mxu0
  %1683 = vrot.lane.b32.xlu0 0.0, 3
  %v1684 = vpop.permute.xlu0 %1683
  %1685 = vrot.lane.b32.xlu0 %v1638, 3
  %v1686 = vpop.permute.xlu0 %1685
  %1687 = vrot.lane.b32.xlu0 %v1643, 3
  %v1688 = vpop.permute.xlu0 %1687
  %1689 = vrot.lane.b32.xlu0 %v1648, 3
  %v1690 = vpop.permute.xlu0 %1689
  %1691 = vrot.lane.b32.xlu0 %v1653, 3
  %v1692 = vpop.permute.xlu0 %1691
  %1693 = vrot.lane.b32.xlu0 %v1658, 3
  %v1694 = vpop.permute.xlu0 %1693
  %1695 = vrot.lane.b32.xlu0 %v1663, 3
  %v1696 = vpop.permute.xlu0 %1695
  %1697 = vrot.lane.b32.xlu0 %v1668, 3
  %v1698 = vpop.permute.xlu0 %1697
  %v1707 = vadd.f32 %v1638, %v1684
  %v1708 = vadd.f32 %v1643, %v1686
  %v1709 = vadd.f32 %v1648, %v1688
  %v1710 = vadd.f32 %v1653, %v1690
  %v1711 = vadd.f32 %v1658, %v1692
  %v1712 = vadd.f32 %v1663, %v1694
  %v1713 = vadd.f32 %v1668, %v1696
  %v1714 = vadd.f32 %v1673, %v1698
  %1716 = vrot.lane.b32.xlu0 %v1643, 125
  %v1717 = vpop.permute.xlu0 %1716
  %1718 = vrot.lane.b32.xlu0 %v1648, 125
  %v1719 = vpop.permute.xlu0 %1718
  %1720 = vrot.lane.b32.xlu0 %v1653, 125
  %v1721 = vpop.permute.xlu0 %1720
  %1722 = vrot.lane.b32.xlu0 %v1658, 125
  %v1723 = vpop.permute.xlu0 %1722
  %1724 = vrot.lane.b32.xlu0 %v1663, 125
  %v1725 = vpop.permute.xlu0 %1724
  %1726 = vrot.lane.b32.xlu0 %v1668, 125
  %v1727 = vpop.permute.xlu0 %1726
  %1728 = vrot.lane.b32.xlu0 %v1673, 125
  %v1729 = vpop.permute.xlu0 %1728
  %1730 = vrot.lane.b32.xlu0 0.0, 125
  %v1731 = vpop.permute.xlu0 %1730
  %v1740 = vadd.f32 %v1707, %v1717
  %v1741 = vadd.f32 %v1708, %v1719
  %v1742 = vadd.f32 %v1709, %v1721
  %v1743 = vadd.f32 %v1710, %v1723
  %v1744 = vadd.f32 %v1711, %v1725
  %v1745 = vadd.f32 %v1712, %v1727
  %v1746 = vadd.f32 %v1713, %v1729
  %v1747 = vadd.f32 %v1714, %v1731
  %v1748 = vld [vmem:[%s7] sm:$0x1]
  %v1750 = vlaneseq
  %v1751 = vshrl.u32 %v1750, 7
  %v1752 = vsub.s32 0, %v1751
  %v1753 = vrot.slane %v1748, %v1752
  %1754 = vrot.lane.b32.xlu0 %v1753, 3
  %v1755 = vpop.permute.xlu0 %1754
  %v1757 = vadd.f32 %v1740, %v1755
  %v1758 = vadd.f32 %v1741, %v1755
  %v1759 = vadd.f32 %v1742, %v1755
  %v1760 = vadd.f32 %v1743, %v1755
  %v1761 = vadd.f32 %v1744, %v1755
  %v1762 = vadd.f32 %v1745, %v1755
  %v1763 = vadd.f32 %v1746, %v1755
  %v1764 = vadd.f32 %v1747, %v1755
  %v1765 = vxor.u32 %v1757, 2147483648
  %v1766 = vxor.u32 %v1758, 2147483648
  %v1767 = vxor.u32 %v1759, 2147483648
  %v1768 = vxor.u32 %v1760, 2147483648
  %v1769 = vxor.u32 %v1761, 2147483648
  %v1770 = vxor.u32 %v1762, 2147483648
  %v1771 = vxor.u32 %v1763, 2147483648
  %v1772 = vxor.u32 %v1764, 2147483648
  %v1773 = vmul.f32 %v1765, 1.442695
  %v1774 = vpow.pop %v1773
  %v1775 = vmul.f32 %v1766, 1.442695
  %v1776 = vpow.pop %v1775
  %v1777 = vmul.f32 %v1767, 1.442695
  %v1778 = vpow.pop %v1777
  %v1779 = vmul.f32 %v1768, 1.442695
  %v1780 = vpow.pop %v1779
  %v1781 = vmul.f32 %v1769, 1.442695
  %v1782 = vpow.pop %v1781
  %v1783 = vmul.f32 %v1770, 1.442695
  %v1784 = vpow.pop %v1783
  %v1785 = vmul.f32 %v1771, 1.442695
  %v1786 = vpow.pop %v1785
  %v1787 = vmul.f32 %v1772, 1.442695
  %v1788 = vpow.pop %v1787
  %v1789 = vadd.f32 %v1774, 1.0
  %v1790 = vadd.f32 %v1776, 1.0
  %v1791 = vadd.f32 %v1778, 1.0
  %v1792 = vadd.f32 %v1780, 1.0
  %v1793 = vadd.f32 %v1782, 1.0
  %v1794 = vadd.f32 %v1784, 1.0
  %v1795 = vadd.f32 %v1786, 1.0
  %v1796 = vadd.f32 %v1788, 1.0
  %v1797 = vrcp.pop %v1789
  %v1798 = vmul.f32 1.0, %v1797
  %v1799 = vrcp.pop %v1790
  %v1800 = vmul.f32 1.0, %v1799
  %v1801 = vrcp.pop %v1791
  %v1802 = vmul.f32 1.0, %v1801
  %v1803 = vrcp.pop %v1792
  %v1804 = vmul.f32 1.0, %v1803
  %v1805 = vrcp.pop %v1793
  %v1806 = vmul.f32 1.0, %v1805
  %v1807 = vrcp.pop %v1794
  %v1808 = vmul.f32 1.0, %v1807
  %v1809 = vrcp.pop %v1795
  %v1810 = vmul.f32 1.0, %v1809
  %v1811 = vrcp.pop %v1796
  %v1812 = vmul.f32 1.0, %v1811
  %v1813 = vtanh.pop %v1533
  %v1814 = vtanh.pop %v1534
  %v1815 = vtanh.pop %v1535
  %v1816 = vtanh.pop %v1536
  %v1817 = vtanh.pop %v1537
  %v1818 = vtanh.pop %v1538
  %v1819 = vtanh.pop %v1539
  %v1820 = vtanh.pop %v1540
  %v1821 = vld [vmem:[%s8] sm:$0xff]
  %v1822 = vld [vmem:[%s8 + $0x8] sm:$0xff]
  %v1823 = vld [vmem:[%s8 + $0x10] sm:$0xff]
  %v1824 = vld [vmem:[%s8 + $0x18] sm:$0xff]
  %v1825 = vld [vmem:[%s8 + $0x20] sm:$0xff]
  %v1826 = vld [vmem:[%s8 + $0x28] sm:$0xff]
  %v1828 = vsel %vm78, %v1813, 0
  %v1831 = vsel %vm78, %v1814, 0
  %v1834 = vsel %vm78, %v1815, 0
  %v1837 = vsel %vm78, %v1816, 0
  %v1840 = vsel %vm78, %v1817, 0
  %v1843 = vsel %vm78, %v1818, 0
  %v1846 = vsel %vm78, %v1819, 0
  %v1849 = vsel %vm78, %v1820, 0
  %1851 = vmatprep.subr.mxu0 0.0
  %1852 = vmatpush1.msra.mxu0 %v1821
  %1853 = vmatprep.subr.mxu0 0.0
  %1854 = vmatpush1.msra.mxu0 %v1822
  %1855 = vmatprep.subr.mxu0 0.0
  %1856 = vmatpush1.msra.mxu0 %v1823
  %1857 = vmatprep.subr.mxu0 0.0
  %1858 = vmatpush1.msra.mxu0 %v1824
  %1859 = vmatprep.subr.mxu0 0.0
  %1860 = vmatpush1.msra.mxu0 %v1825
  %1861 = vmatprep.subr.mxu0 0.0
  %1862 = vmatpush1.msra.mxu0 %v1826
  %1863 = vmatprep.subr.mxu0 0.0
  %1864 = vmatpush1.msra.mxu0 0.0
  %1865 = vmatprep.subr.mxu0 0.0
  %1866 = vmatpush1.msra.mxu0 0.0
  %1867 = vmatprep.subr.mxu0 0.0
  %1868 = vmatpush1.msra.mxu0 0.0
  %1869 = vmatprep.subr.mxu0 0.0
  %1870 = vmatpush1.msra.mxu0 0.0
  %1871 = vmatprep.subr.mxu0 0.0
  %1872 = vmatpush1.msra.mxu0 0.0
  %1873 = vmatprep.subr.mxu0 0.0
  %1874 = vmatpush1.msra.mxu0 0.0
  %1875 = vmatprep.subr.mxu0 0.0
  %1876 = vmatpush1.msra.mxu0 0.0
  %1877 = vmatprep.subr.mxu0 0.0
  %1878 = vmatpush1.msra.mxu0 0.0
  %1879 = vmatprep.subr.mxu0 0.0
  %1880 = vmatpush1.msra.mxu0 0.0
  %1881 = vmatprep.subr.mxu0 0.0
  %1882 = vmatpush1.msra.mxu0 0.0
  %1883 = vmatprep.subr.mxu0 0.0
  %1884 = vmatpush1.msra.mxu0 0.0
  %1885 = vmatprep.subr.mxu0 0.0
  %1886 = vmatpush1.msra.mxu0 0.0
  %1887 = vmatprep.subr.mxu0 0.0
  %1888 = vmatpush1.msra.mxu0 0.0
  %1889 = vmatprep.subr.mxu0 0.0
  %1890 = vmatpush1.msra.mxu0 0.0
  %1891 = vmatprep.subr.mxu0 0.0
  %1892 = vmatpush1.msra.mxu0 0.0
  %1893 = vmatprep.subr.mxu0 0.0
  %1894 = vmatpush1.msra.mxu0 0.0
  %1895 = vmatprep.subr.mxu0 0.0
  %1896 = vmatpush1.msra.mxu0 0.0
  %1897 = vmatprep.subr.mxu0 0.0
  %1898 = vmatpush1.msra.mxu0 0.0
  %1899 = vmatprep.subr.mxu0 0.0
  %1900 = vmatpush1.msra.mxu0 0.0
  %1901 = vmatprep.subr.mxu0 0.0
  %1902 = vmatpush1.msra.mxu0 0.0
  %1903 = vmatprep.subr.mxu0 0.0
  %1904 = vmatpush1.msra.mxu0 0.0
  %1905 = vmatprep.subr.mxu0 0.0
  %1906 = vmatpush1.msra.mxu0 0.0
  %1907 = vmatprep.subr.mxu0 0.0
  %1908 = vmatpush1.msra.mxu0 0.0
  %1909 = vmatprep.subr.mxu0 0.0
  %1910 = vmatpush1.msra.mxu0 0.0
  %1911 = vmatprep.subr.mxu0 0.0
  %1912 = vmatpush1.msra.mxu0 0.0
  %1913 = vmatprep.subr.mxu0 0.0
  %1914 = vmatpush1.msra.mxu0 0.0
  %1915 = vmatprep.mubr.f32.mxu0 0.0
  %1916 = vmatmul.mubr.f32.gmra.mrb[0].mxu0 %v1828
  %v1917 = vpop.f32.mrb[0].mxu0
  %v1918 = vadd.f32 0.0, %v1917
  %v1919 = vpop.f32.mrb[0].mxu0
  %1920 = vmatprep.mubr.f32.mxu0 0.0
  %1921 = vmatmul.mubr.f32.gmra.mrb[0].mxu0 %v1831
  %v1922 = vpop.f32.mrb[0].mxu0
  %v1923 = vadd.f32 0.0, %v1922
  %v1924 = vpop.f32.mrb[0].mxu0
  %1925 = vmatprep.mubr.f32.mxu0 0.0
  %1926 = vmatmul.mubr.f32.gmra.mrb[0].mxu0 %v1834
  %v1927 = vpop.f32.mrb[0].mxu0
  %v1928 = vadd.f32 0.0, %v1927
  %v1929 = vpop.f32.mrb[0].mxu0
  %1930 = vmatprep.mubr.f32.mxu0 0.0
  %1931 = vmatmul.mubr.f32.gmra.mrb[0].mxu0 %v1837
  %v1932 = vpop.f32.mrb[0].mxu0
  %v1933 = vadd.f32 0.0, %v1932
  %v1934 = vpop.f32.mrb[0].mxu0
  %1935 = vmatprep.mubr.f32.mxu0 0.0
  %1936 = vmatmul.mubr.f32.gmra.mrb[0].mxu0 %v1840
  %v1937 = vpop.f32.mrb[0].mxu0
  %v1938 = vadd.f32 0.0, %v1937
  %v1939 = vpop.f32.mrb[0].mxu0
  %1940 = vmatprep.mubr.f32.mxu0 0.0
  %1941 = vmatmul.mubr.f32.gmra.mrb[0].mxu0 %v1843
  %v1942 = vpop.f32.mrb[0].mxu0
  %v1943 = vadd.f32 0.0, %v1942
  %v1944 = vpop.f32.mrb[0].mxu0
  %1945 = vmatprep.mubr.f32.mxu0 0.0
  %1946 = vmatmul.mubr.f32.gmra.mrb[0].mxu0 %v1846
  %v1947 = vpop.f32.mrb[0].mxu0
  %v1948 = vadd.f32 0.0, %v1947
  %v1949 = vpop.f32.mrb[0].mxu0
  %1950 = vmatprep.mubr.f32.mxu0 0.0
  %1951 = vmatmul.mubr.f32.gmra.mrb[0].mxu0 %v1849
  %v1952 = vpop.f32.mrb[0].mxu0
  %v1953 = vadd.f32 0.0, %v1952
  %v1954 = vpop.f32.mrb[0].mxu0
  %1955 = vdwg.mxu0
  %1957 = vset.pattern.permute.xlu0 3
  %1958 = vperm.xlu0 %1957, %v1798
  %v1959 = vpop.permute.xlu0 %1958
  %1962 = vset.pattern.permute.xlu0 3
  %1963 = vperm.xlu0 %1962, %v1800
  %v1964 = vpop.permute.xlu0 %1963
  %1967 = vset.pattern.permute.xlu0 3
  %1968 = vperm.xlu0 %1967, %v1802
  %v1969 = vpop.permute.xlu0 %1968
  %1972 = vset.pattern.permute.xlu0 3
  %1973 = vperm.xlu0 %1972, %v1804
  %v1974 = vpop.permute.xlu0 %1973
  %1977 = vset.pattern.permute.xlu0 3
  %1978 = vperm.xlu0 %1977, %v1806
  %v1979 = vpop.permute.xlu0 %1978
  %1982 = vset.pattern.permute.xlu0 3
  %1983 = vperm.xlu0 %1982, %v1808
  %v1984 = vpop.permute.xlu0 %1983
  %1987 = vset.pattern.permute.xlu0 3
  %1988 = vperm.xlu0 %1987, %v1810
  %v1989 = vpop.permute.xlu0 %1988
  %1992 = vset.pattern.permute.xlu0 3
  %1993 = vperm.xlu0 %1992, %v1812
  %v1994 = vpop.permute.xlu0 %1993
  %1996 = vset.pattern.permute.xlu0 4
  %1997 = vperm.xlu0 %1996, %v1798
  %v1998 = vpop.permute.xlu0 %1997
  %2000 = vset.pattern.permute.xlu0 4
  %2001 = vperm.xlu0 %2000, %v1800
  %v2002 = vpop.permute.xlu0 %2001
  %2004 = vset.pattern.permute.xlu0 4
  %2005 = vperm.xlu0 %2004, %v1802
  %v2006 = vpop.permute.xlu0 %2005
  %2008 = vset.pattern.permute.xlu0 4
  %2009 = vperm.xlu0 %2008, %v1804
  %v2010 = vpop.permute.xlu0 %2009
  %2012 = vset.pattern.permute.xlu0 4
  %2013 = vperm.xlu0 %2012, %v1806
  %v2014 = vpop.permute.xlu0 %2013
  %2016 = vset.pattern.permute.xlu0 4
  %2017 = vperm.xlu0 %2016, %v1808
  %v2018 = vpop.permute.xlu0 %2017
  %2020 = vset.pattern.permute.xlu0 4
  %2021 = vperm.xlu0 %2020, %v1810
  %v2022 = vpop.permute.xlu0 %2021
  %2024 = vset.pattern.permute.xlu0 4
  %2025 = vperm.xlu0 %2024, %v1812
  %v2026 = vpop.permute.xlu0 %2025
  %2028 = vset.pattern.permute.xlu0 5
  %2029 = vperm.xlu0 %2028, %v1798
  %v2030 = vpop.permute.xlu0 %2029
  %2032 = vset.pattern.permute.xlu0 5
  %2033 = vperm.xlu0 %2032, %v1800
  %v2034 = vpop.permute.xlu0 %2033
  %2036 = vset.pattern.permute.xlu0 5
  %2037 = vperm.xlu0 %2036, %v1802
  %v2038 = vpop.permute.xlu0 %2037
  %2040 = vset.pattern.permute.xlu0 5
  %2041 = vperm.xlu0 %2040, %v1804
  %v2042 = vpop.permute.xlu0 %2041
  %2044 = vset.pattern.permute.xlu0 5
  %2045 = vperm.xlu0 %2044, %v1806
  %v2046 = vpop.permute.xlu0 %2045
  %2048 = vset.pattern.permute.xlu0 5
  %2049 = vperm.xlu0 %2048, %v1808
  %v2050 = vpop.permute.xlu0 %2049
  %2052 = vset.pattern.permute.xlu0 5
  %2053 = vperm.xlu0 %2052, %v1810
  %v2054 = vpop.permute.xlu0 %2053
  %2056 = vset.pattern.permute.xlu0 5
  %2057 = vperm.xlu0 %2056, %v1812
  %v2058 = vpop.permute.xlu0 %2057
  %v2060 = vsel %vm226, %v1959, %v1998
  %v2061 = vsel %vm226, %v1964, %v2002
  %v2062 = vsel %vm226, %v1969, %v2006
  %v2063 = vsel %vm226, %v1974, %v2010
  %v2064 = vsel %vm226, %v1979, %v2014
  %v2065 = vsel %vm226, %v1984, %v2018
  %v2066 = vsel %vm226, %v1989, %v2022
  %v2067 = vsel %vm226, %v1994, %v2026
  %v2068 = vsel %vm228, %v2060, %v2030
  %v2069 = vsel %vm228, %v2061, %v2034
  %v2070 = vsel %vm228, %v2062, %v2038
  %v2071 = vsel %vm228, %v2063, %v2042
  %v2072 = vsel %vm228, %v2064, %v2046
  %v2073 = vsel %vm228, %v2065, %v2050
  %v2074 = vsel %vm228, %v2066, %v2054
  %v2075 = vsel %vm228, %v2067, %v2058
  %v2076 = vmul.f32 %v1918, %v2068
  %v2077 = vmul.f32 %v1923, %v2069
  %v2078 = vmul.f32 %v1928, %v2070
  %v2079 = vmul.f32 %v1933, %v2071
  %v2080 = vmul.f32 %v1938, %v2072
  %v2081 = vmul.f32 %v1943, %v2073
  %v2082 = vmul.f32 %v1948, %v2074
  %v2083 = vmul.f32 %v1953, %v2075
  %2092 = vrot.lane.b32.xlu0 %v2076, 16
  %v2093 = vpop.permute.xlu0 %2092
  %2094 = vrot.lane.b32.xlu0 %v2077, 16
  %v2095 = vpop.permute.xlu0 %2094
  %2096 = vrot.lane.b32.xlu0 %v2078, 16
  %v2097 = vpop.permute.xlu0 %2096
  %2098 = vrot.lane.b32.xlu0 %v2079, 16
  %v2099 = vpop.permute.xlu0 %2098
  %2100 = vrot.lane.b32.xlu0 %v2080, 16
  %v2101 = vpop.permute.xlu0 %2100
  %2102 = vrot.lane.b32.xlu0 %v2081, 16
  %v2103 = vpop.permute.xlu0 %2102
  %2104 = vrot.lane.b32.xlu0 %v2082, 16
  %v2105 = vpop.permute.xlu0 %2104
  %2106 = vrot.lane.b32.xlu0 %v2083, 16
  %v2107 = vpop.permute.xlu0 %2106
  %v2116 = vadd.f32 %v172, %v2093
  %v2117 = vadd.f32 %v178, %v2095
  %v2118 = vadd.f32 %v184, %v2097
  %v2119 = vadd.f32 %v190, %v2099
  %v2120 = vadd.f32 %v196, %v2101
  %v2121 = vadd.f32 %v202, %v2103
  %v2122 = vadd.f32 %v208, %v2105
  %v2123 = vadd.f32 %v214, %v2107
  %v2124 = vtanh.pop %v2116
  %v2125 = vtanh.pop %v2117
  %v2126 = vtanh.pop %v2118
  %v2127 = vtanh.pop %v2119
  %v2128 = vtanh.pop %v2120
  %v2129 = vtanh.pop %v2121
  %v2130 = vtanh.pop %v2122
  %v2131 = vtanh.pop %v2123
  %v2132 = vmax.f32 %v2124, %v2125
  %v2133 = vmax.f32 %v2126, %v2127
  %v2134 = vmax.f32 %v2128, %v2129
  %v2135 = vmax.f32 %v2130, %v2131
  %v2136 = vmax.f32 %v2132, %v2133
  %v2137 = vmax.f32 %v2134, %v2135
  %v2138 = vmax.f32 %v2136, %v2137
  %v2139 = vld [vmem:[%s9] sm:$0xff]
  %v2140 = vld [vmem:[%s9 + $0x8] sm:$0xff]
  %v2141 = vld [vmem:[%s9 + $0x10] sm:$0xff]
  %v2142 = vld [vmem:[%s10] sm:$0x1]
  %v2144 = vlaneseq
  %v2145 = vshrl.u32 %v2144, 7
  %v2146 = vsub.s32 0, %v2145
  %v2147 = vrot.slane %v2142, %v2146
  %2150 = vrot.lane.b32.xlu0 %v2138, 112
  %v2151 = vpop.permute.xlu0 %2150
  %v2152 = vsel %vm405, %v2151, 0
  %2154 = vmatprep.subr.mxu0 0.0
  %2155 = vmatpush1.msra.mxu0 %v2139
  %2156 = vmatprep.subr.mxu0 0.0
  %2157 = vmatpush1.msra.mxu0 %v2140
  %2158 = vmatprep.subr.mxu0 0.0
  %2159 = vmatpush1.msra.mxu0 %v2141
  %2160 = vmatprep.subr.mxu0 0.0
  %2161 = vmatpush1.msra.mxu0 0.0
  %2162 = vmatprep.subr.mxu0 0.0
  %2163 = vmatpush1.msra.mxu0 0.0
  %2164 = vmatprep.subr.mxu0 0.0
  %2165 = vmatpush1.msra.mxu0 0.0
  %2166 = vmatprep.subr.mxu0 0.0
  %2167 = vmatpush1.msra.mxu0 0.0
  %2168 = vmatprep.subr.mxu0 0.0
  %2169 = vmatpush1.msra.mxu0 0.0
  %2170 = vmatprep.subr.mxu0 0.0
  %2171 = vmatpush1.msra.mxu0 0.0
  %2172 = vmatprep.subr.mxu0 0.0
  %2173 = vmatpush1.msra.mxu0 0.0
  %2174 = vmatprep.subr.mxu0 0.0
  %2175 = vmatpush1.msra.mxu0 0.0
  %2176 = vmatprep.subr.mxu0 0.0
  %2177 = vmatpush1.msra.mxu0 0.0
  %2178 = vmatprep.subr.mxu0 0.0
  %2179 = vmatpush1.msra.mxu0 0.0
  %2180 = vmatprep.subr.mxu0 0.0
  %2181 = vmatpush1.msra.mxu0 0.0
  %2182 = vmatprep.subr.mxu0 0.0
  %2183 = vmatpush1.msra.mxu0 0.0
  %2184 = vmatprep.subr.mxu0 0.0
  %2185 = vmatpush1.msra.mxu0 0.0
  %2186 = vmatprep.subr.mxu0 0.0
  %2187 = vmatpush1.msra.mxu0 0.0
  %2188 = vmatprep.subr.mxu0 0.0
  %2189 = vmatpush1.msra.mxu0 0.0
  %2190 = vmatprep.subr.mxu0 0.0
  %2191 = vmatpush1.msra.mxu0 0.0
  %2192 = vmatprep.subr.mxu0 0.0
  %2193 = vmatpush1.msra.mxu0 0.0
  %2194 = vmatprep.subr.mxu0 0.0
  %2195 = vmatpush1.msra.mxu0 0.0
  %2196 = vmatprep.subr.mxu0 0.0
  %2197 = vmatpush1.msra.mxu0 0.0
  %2198 = vmatprep.subr.mxu0 0.0
  %2199 = vmatpush1.msra.mxu0 0.0
  %2200 = vmatprep.subr.mxu0 0.0
  %2201 = vmatpush1.msra.mxu0 0.0
  %2202 = vmatprep.subr.mxu0 0.0
  %2203 = vmatpush1.msra.mxu0 0.0
  %2204 = vmatprep.subr.mxu0 0.0
  %2205 = vmatpush1.msra.mxu0 0.0
  %2206 = vmatprep.subr.mxu0 0.0
  %2207 = vmatpush1.msra.mxu0 0.0
  %2208 = vmatprep.subr.mxu0 0.0
  %2209 = vmatpush1.msra.mxu0 0.0
  %2210 = vmatprep.subr.mxu0 0.0
  %2211 = vmatpush1.msra.mxu0 0.0
  %2212 = vmatprep.subr.mxu0 0.0
  %2213 = vmatpush1.msra.mxu0 0.0
  %2214 = vmatprep.subr.mxu0 0.0
  %2215 = vmatpush1.msra.mxu0 0.0
  %2216 = vmatprep.subr.mxu0 0.0
  %2217 = vmatpush1.msra.mxu0 0.0
  %2218 = vmatprep.mubr.f32.mxu0 0.0
  %2219 = vmatmul.mubr.f32.gmra.mrb[0].mxu0 %v2152
  %v2220 = vpop.f32.mrb[0].mxu0
  %v2221 = vadd.f32 %v2147, %v2220
  %v2222 = vpop.f32.mrb[0].mxu0
  %2223 = vdwg.mxu0
  %vm2224 = vcmp.gt.f32.partialorder %v2221, 0.0
  %v2225 = vmul.f32 %v2221, 0.01
  %v2226 = vsel %vm2224, %v2221, %v2225
  %v2227 = vld [vmem:[%s11] sm:$0xff]
  %v2228 = vld [vmem:[%s11 + $0x8] sm:$0xff]
  %v2229 = vld [vmem:[%s11 + $0x10] sm:$0xff]
  %v2230 = vld [vmem:[%s11 + $0x18] sm:$0xff]
  %v2231 = vld [vmem:[#allocation2] sm:$0x1]
  %v2233 = vlaneseq
  %v2234 = vshrl.u32 %v2233, 7
  %v2235 = vsub.s32 0, %v2234
  %v2236 = vrot.slane %v2231, %v2235
  %vm2238 = vcmask 261120
  %v2240 = vsel %vm2238, %v2226, 0
  %2242 = vmatprep.subr.mxu0 0.0
  %2243 = vmatpush1.msra.mxu0 %v2227
  %2244 = vmatprep.subr.mxu0 0.0
  %2245 = vmatpush1.msra.mxu0 %v2228
  %2246 = vmatprep.subr.mxu0 0.0
  %2247 = vmatpush1.msra.mxu0 %v2229
  %2248 = vmatprep.subr.mxu0 0.0
  %2249 = vmatpush1.msra.mxu0 %v2230
  %2250 = vmatprep.subr.mxu0 0.0
  %2251 = vmatpush1.msra.mxu0 0.0
  %2252 = vmatprep.subr.mxu0 0.0
  %2253 = vmatpush1.msra.mxu0 0.0
  %2254 = vmatprep.subr.mxu0 0.0
  %2255 = vmatpush1.msra.mxu0 0.0
  %2256 = vmatprep.subr.mxu0 0.0
  %2257 = vmatpush1.msra.mxu0 0.0
  %2258 = vmatprep.subr.mxu0 0.0
  %2259 = vmatpush1.msra.mxu0 0.0
  %2260 = vmatprep.subr.mxu0 0.0
  %2261 = vmatpush1.msra.mxu0 0.0
  %2262 = vmatprep.subr.mxu0 0.0
  %2263 = vmatpush1.msra.mxu0 0.0
  %2264 = vmatprep.subr.mxu0 0.0
  %2265 = vmatpush1.msra.mxu0 0.0
  %2266 = vmatprep.subr.mxu0 0.0
  %2267 = vmatpush1.msra.mxu0 0.0
  %2268 = vmatprep.subr.mxu0 0.0
  %2269 = vmatpush1.msra.mxu0 0.0
  %2270 = vmatprep.subr.mxu0 0.0
  %2271 = vmatpush1.msra.mxu0 0.0
  %2272 = vmatprep.subr.mxu0 0.0
  %2273 = vmatpush1.msra.mxu0 0.0
  %2274 = vmatprep.subr.mxu0 0.0
  %2275 = vmatpush1.msra.mxu0 0.0
  %2276 = vmatprep.subr.mxu0 0.0
  %2277 = vmatpush1.msra.mxu0 0.0
  %2278 = vmatprep.subr.mxu0 0.0
  %2279 = vmatpush1.msra.mxu0 0.0
  %2280 = vmatprep.subr.mxu0 0.0
  %2281 = vmatpush1.msra.mxu0 0.0
  %2282 = vmatprep.subr.mxu0 0.0
  %2283 = vmatpush1.msra.mxu0 0.0
  %2284 = vmatprep.subr.mxu0 0.0
  %2285 = vmatpush1.msra.mxu0 0.0
  %2286 = vmatprep.subr.mxu0 0.0
  %2287 = vmatpush1.msra.mxu0 0.0
  %2288 = vmatprep.subr.mxu0 0.0
  %2289 = vmatpush1.msra.mxu0 0.0
  %2290 = vmatprep.subr.mxu0 0.0
  %2291 = vmatpush1.msra.mxu0 0.0
  %2292 = vmatprep.subr.mxu0 0.0
  %2293 = vmatpush1.msra.mxu0 0.0
  %2294 = vmatprep.subr.mxu0 0.0
  %2295 = vmatpush1.msra.mxu0 0.0
  %2296 = vmatprep.subr.mxu0 0.0
  %2297 = vmatpush1.msra.mxu0 0.0
  %2298 = vmatprep.subr.mxu0 0.0
  %2299 = vmatpush1.msra.mxu0 0.0
  %2300 = vmatprep.subr.mxu0 0.0
  %2301 = vmatpush1.msra.mxu0 0.0
  %2302 = vmatprep.subr.mxu0 0.0
  %2303 = vmatpush1.msra.mxu0 0.0
  %2304 = vmatprep.subr.mxu0 0.0
  %2305 = vmatpush1.msra.mxu0 0.0
  %2306 = vmatprep.mubr.f32.mxu0 0.0
  %2307 = vmatmul.mubr.f32.gmra.mrb[0].mxu0 %v2240
  %v2308 = vpop.f32.mrb[0].mxu0
  %v2309 = vadd.f32 %v2236, %v2308
  %v2310 = vpop.f32.mrb[0].mxu0
  %2311 = vdwg.mxu0
  %vm2312 = vcmask 7168
  %2313 = vst.msk [vmem:[%s13] sm:$0xff] %vm2312, %v2309
  // Predicated region
  $region54: #{gate_f_forward.1} parent=0 // pred_check
    _
  $region55: #{gate_f_forward.1} parent=0 // pred_check_branch
    %2315 = sbr.rel (0) target = $region57
  $region56: #{gate_f_forward.1} parent=0 // pred_region
    _
  $region57: #{gate_f_forward.1} parent=0 // pred_fallthru
    _
  // Predicated region
  $region58: #{gate_f_forward.1} parent=0 // pred_check
    _
  $region59: #{gate_f_forward.1} parent=0 // pred_check_branch
    %2317 = sbr.rel (0) target = $region61
  $region60: #{gate_f_forward.1} parent=0 // pred_region
    _
  $region61: #{gate_f_forward.1} parent=0 // pred_fallthru
    _

</llo_original>
